<compile_context>
chip_gen: v7x
topology: tpu7x:2x2x1
jax: 0.10.0
libtpu: 0.0.40
codegen_flags: <defaults>
</compile_context>

<pallas_src>
import math
from functools import partial

import jax
import jax.numpy as jnp
from jax.experimental import pallas as pl
from jax.experimental.pallas import tpu as pltpu

LN_EPS = 1e-5


# ----------------------------- in-kernel helpers ---------------------------- #

def _mm(a, b, cd):
    """MXU matmul with optional reduced-precision operands, f32 accumulation."""
    return jnp.dot(a.astype(cd), b.astype(cd), preferred_element_type=jnp.float32)


def _layernorm(z, g, b, eps):
    mean = jnp.mean(z, axis=-1, keepdims=True)
    c = z - mean
    var = jnp.mean(c * c, axis=-1, keepdims=True)
    return c * jax.lax.rsqrt(var + eps) * g + b


def _split_heads(p, n_head, head_dim):
    """Emulate torch `.view(n_head, L, head_dim)` of a row-major (L, D) block.

    Head h, view-row (r*n_head + c) is original row (h*(L//n_head) + r),
    lane chunk [c*head_dim, (c+1)*head_dim).  Built with static slices and
    sublane concatenation only (no minor-dim reshape inside Mosaic).
    """
    L, D = p.shape
    rph = L // n_head            # original rows per head
    cpr = D // head_dim          # chunks per original row (== n_head)
    heads = []
    for h in range(n_head):
        pieces = []
        for r in range(rph):
            row = h * rph + r
            for c in range(cpr):
                pieces.append(p[row:row + 1, c * head_dim:(c + 1) * head_dim])
        heads.append(jnp.concatenate(pieces, axis=0))        # (L, head_dim)
    return jnp.stack(heads, axis=0)                          # (n_head, L, head_dim)


def _attend(qh, kh, vh, mask01, scale):
    """Reference attention on head-view tensors: scale, mask-to-ZERO, softmax, weight v."""
    s = jnp.einsum("hqd,hkd->hqk", qh * scale, kh,
                   preferred_element_type=jnp.float32)        # (H, Lq, Lk)
    if mask01 is not None:
        # reference: scaled_attn_score[attn_mask == -inf] = 0  (set to ZERO, then softmax)
        s = jnp.where(mask01[None] != 0.0, 0.0, s)
    s = s - jnp.max(s, axis=-1, keepdims=True)
    e = jnp.exp(s)
    denom = jnp.sum(e, axis=-1, keepdims=True)
    r = pl.reciprocal(denom, approx=True)                     # EUP slot (free alongside VPU/MXU)
    r = r * (2.0 - denom * r)                                 # one Newton step -> ~f32 accuracy
    p = e * r
    return jnp.einsum("hqk,hkd->hqd", p, vh,
                      preferred_element_type=jnp.float32)     # (H, Lq, head_dim)


def _attn_out_proj(av, wo_t, n_head, head_dim, cd):
    """merge_heads(av) @ wo_t without materializing the (L, D) merge.

    Emulates the torch `.view(b, l, d_model)` merge (raw row-major reinterpretation)
    folded directly into out_fc:  out = sum_c A_c @ Wo_t[c*hd:(c+1)*hd, :]
    where A_c[l] = av[l // rph, (l % rph)*n_head + c].
    """
    _, L, hd = av.shape
    rph = L // n_head
    out = None
    for c in range(n_head):
        rows = [av[l // rph, (l % rph) * n_head + c:(l % rph) * n_head + c + 1, :]
                for l in range(L)]
        a_c = jnp.concatenate(rows, axis=0)                   # (L, head_dim)
        part = _mm(a_c, wo_t[c * hd:(c + 1) * hd, :], cd)     # (L, D)
        out = part if out is None else out + part
    return out


# ------------------------------- fused kernel ------------------------------- #

def _decoder_layer_kernel(
        x_ref, k_ref, v_ref, mask_ref,
        sa_wq_ref, sa_bq_ref, sa_wo_ref, sa_bo_ref, ln1_g_ref, ln1_b_ref,
        ca_wq_ref, ca_bq_ref, ca_wo_ref, ca_bo_ref, ln2_g_ref, ln2_b_ref,
        ff1_w_ref, ff1_b_ref, ff2_w_ref, ff2_b_ref, ln3_g_ref, ln3_b_ref,
        o_ref,
        *, n_head, head_dim, scale, eps, compute_dtype):
    cd = compute_dtype
    xb = x_ref[0]                                             # (L, D)

    # ---------------- self-attention block (q = k = v = x, same wq) ----------------
    proj = _mm(xb, sa_wq_ref[...], cd) + sa_bq_ref[...]       # ONE projection for q/k/v
    ph = _split_heads(proj, n_head, head_dim)
    av = _attend(ph, ph, ph, mask_ref[...], scale)
    sa_out = _attn_out_proj(av, sa_wo_ref[...], n_head, head_dim, cd) + sa_bo_ref[...]
    x1 = _layernorm(xb + sa_out, ln1_g_ref[...], ln1_b_ref[...], eps)

    # ---------------- cross-attention block (same wq applied to q, k, v) -----------
    kb = k_ref[0]                                             # (L2, D)
    vb = v_ref[0]
    qp = _mm(x1, ca_wq_ref[...], cd) + ca_bq_ref[...]
    kp = _mm(kb, ca_wq_ref[...], cd) + ca_bq_ref[...]
    vp = _mm(vb, ca_wq_ref[...], cd) + ca_bq_ref[...]
    av2 = _attend(_split_heads(qp, n_head, head_dim),
                  _split_heads(kp, n_head, head_dim),
                  _split_heads(vp, n_head, head_dim),
                  None, scale)                                # reference passes no mask here
    ca_out = _attn_out_proj(av2, ca_wo_ref[...], n_head, head_dim, cd) + ca_bo_ref[...]
    x2 = _layernorm(x1 + ca_out, ln2_g_ref[...], ln2_b_ref[...], eps)

    # ---------------- feed-forward block ----------------
    # TODO(synk): at production d_model/d_ff, tile the d_ff reduction with an extra
    # "arbitrary" grid axis + f32 VMEM accumulator instead of holding w1/w2 fully
    # resident (v7x has only 64 MiB physical VMEM), and use compute_dtype=bf16.
    h = jnp.maximum(_mm(x2, ff1_w_ref[...], cd) + ff1_b_ref[...], 0.0)
    y = _mm(h, ff2_w_ref[...], cd) + ff2_b_ref[...]
    o_ref[0] = _layernorm(x2 + y, ln3_g_ref[...], ln3_b_ref[...], eps).astype(o_ref.dtype)


# ------------------------------ layer wrapper ------------------------------- #

def asl_decoder_layer(params, x, k_enc, v_enc, n_head, attn_mask=None,
                      compute_dtype=jnp.float32):
    b, l, d = x.shape
    l2 = k_enc.shape[1]
    hd = d // n_head
    assert d == hd * n_head, "d_model must be divisible by n_head"
    # The raw torch .view head split maps whole rows to a head only when seq % n_head == 0.
    assert l % n_head == 0 and l2 % n_head == 0, "seq length must be divisible by n_head"
    # TODO(synk): support seq % n_head != 0 (a view-head then straddles partial rows).

    if attn_mask is None:
        mask01 = jnp.zeros((l, l), jnp.float32)
    else:
        mask01 = (attn_mask == -jnp.inf).astype(jnp.float32)

    sa, ca = params["self_attn"], params["en_dec_attn"]
    (g1, be1), (g2, be2), (g3, be3) = params["norm1"], params["norm2"], params["norm3"]
    w1_t, fb1 = params["ff1"]
    w2_t, fb2 = params["ff2"]
    d_ff = w1_t.shape[1]

    operands = (x, k_enc, v_enc, mask01,
                sa["wq"][0], sa["wq"][1], sa["out_fc"][0], sa["out_fc"][1], g1, be1,
                ca["wq"][0], ca["wq"][1], ca["out_fc"][0], ca["out_fc"][1], g2, be2,
                w1_t, fb1, w2_t, fb2, g3, be3)

    def inv(shape):                       # grid-invariant operand (weights / biases / mask)
        return pl.BlockSpec(shape, lambda i: (0,) * len(shape))

    in_specs = [
        pl.BlockSpec((1, l, d), lambda i: (i, 0, 0)),      # x
        pl.BlockSpec((1, l2, d), lambda i: (i, 0, 0)),     # k_enc
        pl.BlockSpec((1, l2, d), lambda i: (i, 0, 0)),     # v_enc
        inv((l, l)),                                       # self-attn mask (1.0 == masked)
        inv((d, d)), inv((1, d)), inv((d, d)), inv((1, d)), inv((1, d)), inv((1, d)),
        inv((d, d)), inv((1, d)), inv((d, d)), inv((1, d)), inv((1, d)), inv((1, d)),
        inv((d, d_ff)), inv((1, d_ff)), inv((d_ff, d)), inv((1, d)), inv((1, d)), inv((1, d)),
    ]

    # Explicit scoped-VMEM budget: double-buffered operands + headroom (review item #7).
    operand_bytes = sum(int(a.size) * a.dtype.itemsize for a in operands)
    vmem_limit = int(max(16 * 2**20, 2 * operand_bytes + 2 * 2**20))

    kernel = partial(_decoder_layer_kernel, n_head=n_head, head_dim=hd,
                     scale=1.0 / math.sqrt(hd), eps=LN_EPS, compute_dtype=compute_dtype)

    return pl.pallas_call(
        kernel,
        out_shape=jax.ShapeDtypeStruct((b, l, d), jnp.float32),
        grid=(b,),
        in_specs=in_specs,
        out_specs=pl.BlockSpec((1, l, d), lambda i: (i, 0, 0)),
        compiler_params=pltpu.CompilerParams(
            dimension_semantics=("parallel",),             # one batch per TensorCore on v7x
            vmem_limit_bytes=vmem_limit),
    )(*operands)


# ------------------------------ pure-JAX reference -------------------------- #

def _ref_lin(x, w_t, b):
    return x @ w_t + b[0]


def _ref_mha(p, q, k, v, n_head, attn_mask=None):
    b, l1, d = q.shape
    _, l2, _ = k.shape
    hd = d // n_head
    wq_t, bq = p["wq"]
    wo_t, bo = p["out_fc"]
    qp = _ref_lin(q.reshape(-1, d), wq_t, bq).reshape(b * n_head, l1, hd)
    kp = _ref_lin(k.reshape(-1, d), wq_t, bq).reshape(b * n_head, l2, hd)
    vp = _ref_lin(v.reshape(-1, d), wq_t, bq).reshape(b * n_head, l2, hd)
    s = jnp.einsum("bij,bkj->bik", qp, kp) / math.sqrt(hd)
    if attn_mask is not None:
        s = jnp.where((attn_mask == -jnp.inf)[None], 0.0, s)
    pr = jax.nn.softmax(s, axis=-1)
    av = jnp.einsum("bik,bkj->bij", pr, vp).reshape(b, l1, d)
    return _ref_lin(av.reshape(-1, d), wo_t, bo).reshape(b, l1, d)


def _ref_ln(x, gamma, beta):
    mean = x.mean(-1, keepdims=True)
    var = ((x - mean) ** 2).mean(-1, keepdims=True)
    return (x - mean) / jnp.sqrt(var + LN_EPS) * gamma[0] + beta[0]


def _ref_layer(params, x, k, v, n_head, attn_mask=None):
    x = _ref_ln(x + _ref_mha(params["self_attn"], x, x, x, n_head, attn_mask), *params["norm1"])
    x = _ref_ln(x + _ref_mha(params["en_dec_attn"], x, k, v, n_head, None), *params["norm2"])
    w1_t, b1 = params["ff1"]
    w2_t, b2 = params["ff2"]
    h = jnp.maximum(_ref_lin(x.reshape(-1, x.shape[-1]), w1_t, b1), 0.0)
    f = _ref_lin(h, w2_t, b2).reshape(x.shape)
    x = _ref_ln(x + f, *params["norm3"])
    return x


# ------------------------------ param init ---------------------------------- #

def _init_linear(key, d_in, d_out):
    k1, k2 = jax.random.split(key)
    bound = 1.0 / math.sqrt(d_in)
    w_t = jax.random.uniform(k1, (d_in, d_out), jnp.float32, -bound, bound)  # stored (Din, Dout)
    b = jax.random.uniform(k2, (1, d_out), jnp.float32, -bound, bound)
    return (w_t, b)


def _init_mha(key, d_model):
    ks = jax.random.split(key, 4)
    return {
        "wq": _init_linear(ks[0], d_model, d_model),
        "wk": _init_linear(ks[1], d_model, d_model),   # present in __init__, unused in forward
        "wv": _init_linear(ks[2], d_model, d_model),   # present in __init__, unused in forward
        "out_fc": _init_linear(ks[3], d_model, d_model),
    }


def init_params(key, d_model, d_ff):
    ks = jax.random.split(key, 4)
    ln = lambda: (jnp.ones((1, d_model), jnp.float32), jnp.zeros((1, d_model), jnp.float32))
    return {
        "self_attn": _init_mha(ks[0], d_model),
        "en_dec_attn": _init_mha(ks[1], d_model),
        "norm1": ln(),
        "norm2": ln(),
        "norm3": ln(),
        "ff1": _init_linear(ks[2], d_model, d_ff),
        "ff2": _init_linear(ks[3], d_ff, d_model),
    }


# ----------------------------------- main ------------------------------------ #

if __name__ == "__main__":
    B, L, D_MODEL, N_HEAD, D_FF = 2, 8, 32, 4, 64

    root = jax.random.PRNGKey(0)
    kp, kx, kk, kv = jax.random.split(root, 4)
    params = init_params(kp, D_MODEL, D_FF)

    x = jax.random.normal(kx, (B, L, D_MODEL), jnp.float32)
    k_enc = jax.random.normal(kk, (B, L, D_MODEL), jnp.float32)
    v_enc = jax.random.normal(kv, (B, L, D_MODEL), jnp.float32)

    # causal attn mask with -inf above the diagonal (exercised by self-attention)
    attn_mask = jnp.where(jnp.triu(jnp.ones((L, L), jnp.float32), k=1) > 0,
                          -jnp.inf, 0.0)

    out = asl_decoder_layer(params, x, k_enc, v_enc, N_HEAD, attn_mask)
    out = jax.block_until_ready(out)

    ref = _ref_layer(params, x, k_enc, v_enc, N_HEAD, attn_mask)
    assert out.shape == (B, L, D_MODEL)
    assert jnp.allclose(out, ref, atol=1e-4, rtol=1e-4), "Pallas output mismatch vs JAX reference"

    print("KERNEL_OK")
</pallas_src>

<mosaic_0001>
module attributes {stable_mosaic.version = 11 : i64} {
  func.func @_decoder_layer_kernel(%arg0: i32, %arg1: memref<1x8x32xf32, #tpu.memory_space<vmem>>, %arg2: memref<1x8x32xf32, #tpu.memory_space<vmem>>, %arg3: memref<1x8x32xf32, #tpu.memory_space<vmem>>, %arg4: memref<8x8xf32, #tpu.memory_space<vmem>>, %arg5: memref<32x32xf32, #tpu.memory_space<vmem>>, %arg6: memref<1x32xf32, #tpu.memory_space<vmem>>, %arg7: memref<32x32xf32, #tpu.memory_space<vmem>>, %arg8: memref<1x32xf32, #tpu.memory_space<vmem>>, %arg9: memref<1x32xf32, #tpu.memory_space<vmem>>, %arg10: memref<1x32xf32, #tpu.memory_space<vmem>>, %arg11: memref<32x32xf32, #tpu.memory_space<vmem>>, %arg12: memref<1x32xf32, #tpu.memory_space<vmem>>, %arg13: memref<32x32xf32, #tpu.memory_space<vmem>>, %arg14: memref<1x32xf32, #tpu.memory_space<vmem>>, %arg15: memref<1x32xf32, #tpu.memory_space<vmem>>, %arg16: memref<1x32xf32, #tpu.memory_space<vmem>>, %arg17: memref<32x64xf32, #tpu.memory_space<vmem>>, %arg18: memref<1x64xf32, #tpu.memory_space<vmem>>, %arg19: memref<64x32xf32, #tpu.memory_space<vmem>>, %arg20: memref<1x32xf32, #tpu.memory_space<vmem>>, %arg21: memref<1x32xf32, #tpu.memory_space<vmem>>, %arg22: memref<1x32xf32, #tpu.memory_space<vmem>>, %arg23: memref<1x8x32xf32, #tpu.memory_space<vmem>>) attributes {dimension_semantics = [#tpu.dimension_semantics<parallel>], iteration_bounds = array<i64: 2>, scalar_prefetch = 0 : i64, scratch_operands = 0 : i64, tpu.core_type = #tpu.core_type<tc>, window_params = [{transform_indices = @transform_0, window_bounds = array<i64: 1, 8, 32>}, {transform_indices = @transform_1, window_bounds = array<i64: 1, 8, 32>}, {transform_indices = @transform_2, window_bounds = array<i64: 1, 8, 32>}, {pipeline_mode = #tpu.pipeline_mode<synchronous>, transform_indices = @transform_3, window_bounds = array<i64: 8, 8>}, {pipeline_mode = #tpu.pipeline_mode<synchronous>, transform_indices = @transform_4, window_bounds = array<i64: 32, 32>}, {pipeline_mode = #tpu.pipeline_mode<synchronous>, transform_indices = @transform_5, window_bounds = array<i64: 1, 32>}, {pipeline_mode = #tpu.pipeline_mode<synchronous>, transform_indices = @transform_6, window_bounds = array<i64: 32, 32>}, {pipeline_mode = #tpu.pipeline_mode<synchronous>, transform_indices = @transform_7, window_bounds = array<i64: 1, 32>}, {pipeline_mode = #tpu.pipeline_mode<synchronous>, transform_indices = @transform_8, window_bounds = array<i64: 1, 32>}, {pipeline_mode = #tpu.pipeline_mode<synchronous>, transform_indices = @transform_9, window_bounds = array<i64: 1, 32>}, {pipeline_mode = #tpu.pipeline_mode<synchronous>, transform_indices = @transform_10, window_bounds = array<i64: 32, 32>}, {pipeline_mode = #tpu.pipeline_mode<synchronous>, transform_indices = @transform_11, window_bounds = array<i64: 1, 32>}, {pipeline_mode = #tpu.pipeline_mode<synchronous>, transform_indices = @transform_12, window_bounds = array<i64: 32, 32>}, {pipeline_mode = #tpu.pipeline_mode<synchronous>, transform_indices = @transform_13, window_bounds = array<i64: 1, 32>}, {pipeline_mode = #tpu.pipeline_mode<synchronous>, transform_indices = @transform_14, window_bounds = array<i64: 1, 32>}, {pipeline_mode = #tpu.pipeline_mode<synchronous>, transform_indices = @transform_15, window_bounds = array<i64: 1, 32>}, {pipeline_mode = #tpu.pipeline_mode<synchronous>, transform_indices = @transform_16, window_bounds = array<i64: 32, 64>}, {pipeline_mode = #tpu.pipeline_mode<synchronous>, transform_indices = @transform_17, window_bounds = array<i64: 1, 64>}, {pipeline_mode = #tpu.pipeline_mode<synchronous>, transform_indices = @transform_18, window_bounds = array<i64: 64, 32>}, {pipeline_mode = #tpu.pipeline_mode<synchronous>, transform_indices = @transform_19, window_bounds = array<i64: 1, 32>}, {pipeline_mode = #tpu.pipeline_mode<synchronous>, transform_indices = @transform_20, window_bounds = array<i64: 1, 32>}, {pipeline_mode = #tpu.pipeline_mode<synchronous>, transform_indices = @transform_21, window_bounds = array<i64: 1, 32>}, {transform_indices = @transform_22, window_bounds = array<i64: 1, 8, 32>}]} {
    %c0 = arith.constant 0 : index
    %c0_0 = arith.constant 0 : index
    %c0_1 = arith.constant 0 : index
    %0 = vector.load %arg1[%c0, %c0_0, %c0_1] : memref<1x8x32xf32, #tpu.memory_space<vmem>>, vector<1x8x32xf32>
    %1 = vector.shape_cast %0 : vector<1x8x32xf32> to vector<8x32xf32>
    %c0_2 = arith.constant 0 : index
    %c0_3 = arith.constant 0 : index
    %2 = vector.load %arg5[%c0_2, %c0_3] : memref<32x32xf32, #tpu.memory_space<vmem>>, vector<32x32xf32>
    %cst = arith.constant dense<0.000000e+00> : vector<8x32xf32>
    %3 = tpu.matmul %1, %2, %cst {dimension_numbers = #tpu.dot_dimension_numbers<[1], [0], [0], [1], [0, 0, 1, 1], [], []>} : vector<8x32xf32>, vector<32x32xf32>, vector<8x32xf32> -> vector<8x32xf32>
    %c0_4 = arith.constant 0 : index
    %c0_5 = arith.constant 0 : index
    %4 = vector.load %arg6[%c0_4, %c0_5] : memref<1x32xf32, #tpu.memory_space<vmem>>, vector<1x32xf32>
    %5 = vector.broadcast %4 : vector<1x32xf32> to vector<8x32xf32>
    %6 = arith.addf %3, %5 : vector<8x32xf32>
    %7 = vector.extract_strided_slice %6 {offsets = [0, 0], sizes = [1, 8], strides = [1, 1]} : vector<8x32xf32> to vector<1x8xf32>
    %8 = vector.extract_strided_slice %6 {offsets = [0, 8], sizes = [1, 8], strides = [1, 1]} : vector<8x32xf32> to vector<1x8xf32>
    %9 = vector.extract_strided_slice %6 {offsets = [0, 16], sizes = [1, 8], strides = [1, 1]} : vector<8x32xf32> to vector<1x8xf32>
    %10 = vector.extract_strided_slice %6 {offsets = [0, 24], sizes = [1, 8], strides = [1, 1]} : vector<8x32xf32> to vector<1x8xf32>
    %11 = vector.extract_strided_slice %6 {offsets = [1, 0], sizes = [1, 8], strides = [1, 1]} : vector<8x32xf32> to vector<1x8xf32>
    %12 = vector.extract_strided_slice %6 {offsets = [1, 8], sizes = [1, 8], strides = [1, 1]} : vector<8x32xf32> to vector<1x8xf32>
    %13 = vector.extract_strided_slice %6 {offsets = [1, 16], sizes = [1, 8], strides = [1, 1]} : vector<8x32xf32> to vector<1x8xf32>
    %14 = vector.extract_strided_slice %6 {offsets = [1, 24], sizes = [1, 8], strides = [1, 1]} : vector<8x32xf32> to vector<1x8xf32>
    %15 = tpu.concatenate %7, %8, %9, %10, %11, %12, %13, %14 in 0 : vector<1x8xf32>, vector<1x8xf32>, vector<1x8xf32>, vector<1x8xf32>, vector<1x8xf32>, vector<1x8xf32>, vector<1x8xf32>, vector<1x8xf32> -> vector<8x8xf32>
    %16 = vector.extract_strided_slice %6 {offsets = [2, 0], sizes = [1, 8], strides = [1, 1]} : vector<8x32xf32> to vector<1x8xf32>
    %17 = vector.extract_strided_slice %6 {offsets = [2, 8], sizes = [1, 8], strides = [1, 1]} : vector<8x32xf32> to vector<1x8xf32>
    %18 = vector.extract_strided_slice %6 {offsets = [2, 16], sizes = [1, 8], strides = [1, 1]} : vector<8x32xf32> to vector<1x8xf32>
    %19 = vector.extract_strided_slice %6 {offsets = [2, 24], sizes = [1, 8], strides = [1, 1]} : vector<8x32xf32> to vector<1x8xf32>
    %20 = vector.extract_strided_slice %6 {offsets = [3, 0], sizes = [1, 8], strides = [1, 1]} : vector<8x32xf32> to vector<1x8xf32>
    %21 = vector.extract_strided_slice %6 {offsets = [3, 8], sizes = [1, 8], strides = [1, 1]} : vector<8x32xf32> to vector<1x8xf32>
    %22 = vector.extract_strided_slice %6 {offsets = [3, 16], sizes = [1, 8], strides = [1, 1]} : vector<8x32xf32> to vector<1x8xf32>
    %23 = vector.extract_strided_slice %6 {offsets = [3, 24], sizes = [1, 8], strides = [1, 1]} : vector<8x32xf32> to vector<1x8xf32>
    %24 = tpu.concatenate %16, %17, %18, %19, %20, %21, %22, %23 in 0 : vector<1x8xf32>, vector<1x8xf32>, vector<1x8xf32>, vector<1x8xf32>, vector<1x8xf32>, vector<1x8xf32>, vector<1x8xf32>, vector<1x8xf32> -> vector<8x8xf32>
    %25 = vector.extract_strided_slice %6 {offsets = [4, 0], sizes = [1, 8], strides = [1, 1]} : vector<8x32xf32> to vector<1x8xf32>
    %26 = vector.extract_strided_slice %6 {offsets = [4, 8], sizes = [1, 8], strides = [1, 1]} : vector<8x32xf32> to vector<1x8xf32>
    %27 = vector.extract_strided_slice %6 {offsets = [4, 16], sizes = [1, 8], strides = [1, 1]} : vector<8x32xf32> to vector<1x8xf32>
    %28 = vector.extract_strided_slice %6 {offsets = [4, 24], sizes = [1, 8], strides = [1, 1]} : vector<8x32xf32> to vector<1x8xf32>
    %29 = vector.extract_strided_slice %6 {offsets = [5, 0], sizes = [1, 8], strides = [1, 1]} : vector<8x32xf32> to vector<1x8xf32>
    %30 = vector.extract_strided_slice %6 {offsets = [5, 8], sizes = [1, 8], strides = [1, 1]} : vector<8x32xf32> to vector<1x8xf32>
    %31 = vector.extract_strided_slice %6 {offsets = [5, 16], sizes = [1, 8], strides = [1, 1]} : vector<8x32xf32> to vector<1x8xf32>
    %32 = vector.extract_strided_slice %6 {offsets = [5, 24], sizes = [1, 8], strides = [1, 1]} : vector<8x32xf32> to vector<1x8xf32>
    %33 = tpu.concatenate %25, %26, %27, %28, %29, %30, %31, %32 in 0 : vector<1x8xf32>, vector<1x8xf32>, vector<1x8xf32>, vector<1x8xf32>, vector<1x8xf32>, vector<1x8xf32>, vector<1x8xf32>, vector<1x8xf32> -> vector<8x8xf32>
    %34 = vector.extract_strided_slice %6 {offsets = [6, 0], sizes = [1, 8], strides = [1, 1]} : vector<8x32xf32> to vector<1x8xf32>
    %35 = vector.extract_strided_slice %6 {offsets = [6, 8], sizes = [1, 8], strides = [1, 1]} : vector<8x32xf32> to vector<1x8xf32>
    %36 = vector.extract_strided_slice %6 {offsets = [6, 16], sizes = [1, 8], strides = [1, 1]} : vector<8x32xf32> to vector<1x8xf32>
    %37 = vector.extract_strided_slice %6 {offsets = [6, 24], sizes = [1, 8], strides = [1, 1]} : vector<8x32xf32> to vector<1x8xf32>
    %38 = vector.extract_strided_slice %6 {offsets = [7, 0], sizes = [1, 8], strides = [1, 1]} : vector<8x32xf32> to vector<1x8xf32>
    %39 = vector.extract_strided_slice %6 {offsets = [7, 8], sizes = [1, 8], strides = [1, 1]} : vector<8x32xf32> to vector<1x8xf32>
    %40 = vector.extract_strided_slice %6 {offsets = [7, 16], sizes = [1, 8], strides = [1, 1]} : vector<8x32xf32> to vector<1x8xf32>
    %41 = vector.extract_strided_slice %6 {offsets = [7, 24], sizes = [1, 8], strides = [1, 1]} : vector<8x32xf32> to vector<1x8xf32>
    %42 = tpu.concatenate %34, %35, %36, %37, %38, %39, %40, %41 in 0 : vector<1x8xf32>, vector<1x8xf32>, vector<1x8xf32>, vector<1x8xf32>, vector<1x8xf32>, vector<1x8xf32>, vector<1x8xf32>, vector<1x8xf32> -> vector<8x8xf32>
    %43 = vector.shape_cast %15 : vector<8x8xf32> to vector<1x8x8xf32>
    %44 = vector.shape_cast %24 : vector<8x8xf32> to vector<1x8x8xf32>
    %45 = vector.shape_cast %33 : vector<8x8xf32> to vector<1x8x8xf32>
    %46 = vector.shape_cast %42 : vector<8x8xf32> to vector<1x8x8xf32>
    %47 = tpu.concatenate %43, %44, %45, %46 in 0 : vector<1x8x8xf32>, vector<1x8x8xf32>, vector<1x8x8xf32>, vector<1x8x8xf32> -> vector<4x8x8xf32>
    %c0_6 = arith.constant 0 : index
    %c0_7 = arith.constant 0 : index
    %48 = vector.load %arg4[%c0_6, %c0_7] : memref<8x8xf32, #tpu.memory_space<vmem>>, vector<8x8xf32>
    %cst_8 = arith.constant 0.353553385 : f32
    %49 = vector.broadcast %cst_8 : f32 to vector<4x8x8xf32>
    %50 = arith.mulf %47, %49 : vector<4x8x8xf32>
    "tpu.trace_start"() <{level = 10 : i32, message = "hqd,hkd->hqk"}> : () -> ()
    %cst_9 = arith.constant dense<0.000000e+00> : vector<4x8x8xf32>
    %51 = tpu.matmul %50, %47, %cst_9 {dimension_numbers = #tpu.dot_dimension_numbers<[2], [2], [1], [1], [0, 0, 0, 1, 1, 1], [0], [0]>} : vector<4x8x8xf32>, vector<4x8x8xf32>, vector<4x8x8xf32> -> vector<4x8x8xf32>
    "tpu.trace_stop"() : () -> ()
    %52 = vector.shape_cast %48 : vector<8x8xf32> to vector<1x8x8xf32>
    %cst_10 = arith.constant 0.000000e+00 : f32
    %53 = vector.broadcast %cst_10 : f32 to vector<1x8x8xf32>
    %54 = arith.cmpf one, %52, %53 : vector<1x8x8xf32>
    %cst_11 = arith.constant 0.000000e+00 : f32
    %55 = vector.shape_cast %54 : vector<1x8x8xi1> to vector<1x8x8xi1>
    %56 = vector.broadcast %55 : vector<1x8x8xi1> to vector<4x8x8xi1>
    %57 = vector.broadcast %cst_11 : f32 to vector<4x8x8xf32>
    %58 = arith.select %56, %57, %51 : vector<4x8x8xi1>, vector<4x8x8xf32>
    %cst_12 = arith.constant dense<0xFF800000> : vector<4x8xf32>
    %59 = vector.multi_reduction <maximumf>, %58, %cst_12 [2] : vector<4x8x8xf32> to vector<4x8xf32>
    %60 = vector.shape_cast %59 : vector<4x8xf32> to vector<4x8x1xf32>
    %61 = vector.broadcast %60 : vector<4x8x1xf32> to vector<4x8x8xf32>
    %62 = arith.subf %58, %61 : vector<4x8x8xf32>
    %63 = math.exp %62 : vector<4x8x8xf32>
    %cst_13 = arith.constant dense<0.000000e+00> : vector<4x8xf32>
    %64 = vector.multi_reduction <add>, %63, %cst_13 [2] : vector<4x8x8xf32> to vector<4x8xf32>
    %65 = vector.shape_cast %64 : vector<4x8xf32> to vector<4x8x1xf32>
    %66 = tpu.reciprocal %65 {approx = true} : vector<4x8x1xf32> -> vector<4x8x1xf32>
    %67 = arith.mulf %65, %66 : vector<4x8x1xf32>
    %cst_14 = arith.constant 2.000000e+00 : f32
    %68 = vector.broadcast %cst_14 : f32 to vector<4x8x1xf32>
    %69 = arith.subf %68, %67 : vector<4x8x1xf32>
    %70 = arith.mulf %66, %69 : vector<4x8x1xf32>
    %71 = vector.broadcast %70 : vector<4x8x1xf32> to vector<4x8x8xf32>
    %72 = arith.mulf %63, %71 : vector<4x8x8xf32>
    "tpu.trace_start"() <{level = 10 : i32, message = "hqk,hkd->hqd"}> : () -> ()
    %cst_15 = arith.constant dense<0.000000e+00> : vector<4x8x8xf32>
    %73 = tpu.matmul %72, %47, %cst_15 {dimension_numbers = #tpu.dot_dimension_numbers<[2], [1], [1], [2], [0, 0, 0, 1, 1, 2], [0], [0]>} : vector<4x8x8xf32>, vector<4x8x8xf32>, vector<4x8x8xf32> -> vector<4x8x8xf32>
    "tpu.trace_stop"() : () -> ()
    %c0_16 = arith.constant 0 : index
    %c0_17 = arith.constant 0 : index
    %74 = vector.load %arg7[%c0_16, %c0_17] : memref<32x32xf32, #tpu.memory_space<vmem>>, vector<32x32xf32>
    %75 = vector.extract_strided_slice %73 {offsets = [0, 0, 0], sizes = [1, 1, 8], strides = [1, 1, 1]} : vector<4x8x8xf32> to vector<1x1x8xf32>
    %76 = vector.shape_cast %75 : vector<1x1x8xf32> to vector<1x8xf32>
    %77 = vector.extract_strided_slice %73 {offsets = [0, 4, 0], sizes = [1, 1, 8], strides = [1, 1, 1]} : vector<4x8x8xf32> to vector<1x1x8xf32>
    %78 = vector.shape_cast %77 : vector<1x1x8xf32> to vector<1x8xf32>
    %79 = vector.extract_strided_slice %73 {offsets = [1, 0, 0], sizes = [1, 1, 8], strides = [1, 1, 1]} : vector<4x8x8xf32> to vector<1x1x8xf32>
    %80 = vector.shape_cast %79 : vector<1x1x8xf32> to vector<1x8xf32>
    %81 = vector.extract_strided_slice %73 {offsets = [1, 4, 0], sizes = [1, 1, 8], strides = [1, 1, 1]} : vector<4x8x8xf32> to vector<1x1x8xf32>
    %82 = vector.shape_cast %81 : vector<1x1x8xf32> to vector<1x8xf32>
    %83 = vector.extract_strided_slice %73 {offsets = [2, 0, 0], sizes = [1, 1, 8], strides = [1, 1, 1]} : vector<4x8x8xf32> to vector<1x1x8xf32>
    %84 = vector.shape_cast %83 : vector<1x1x8xf32> to vector<1x8xf32>
    %85 = vector.extract_strided_slice %73 {offsets = [2, 4, 0], sizes = [1, 1, 8], strides = [1, 1, 1]} : vector<4x8x8xf32> to vector<1x1x8xf32>
    %86 = vector.shape_cast %85 : vector<1x1x8xf32> to vector<1x8xf32>
    %87 = vector.extract_strided_slice %73 {offsets = [3, 0, 0], sizes = [1, 1, 8], strides = [1, 1, 1]} : vector<4x8x8xf32> to vector<1x1x8xf32>
    %88 = vector.shape_cast %87 : vector<1x1x8xf32> to vector<1x8xf32>
    %89 = vector.extract_strided_slice %73 {offsets = [3, 4, 0], sizes = [1, 1, 8], strides = [1, 1, 1]} : vector<4x8x8xf32> to vector<1x1x8xf32>
    %90 = vector.shape_cast %89 : vector<1x1x8xf32> to vector<1x8xf32>
    %91 = tpu.concatenate %76, %78, %80, %82, %84, %86, %88, %90 in 0 : vector<1x8xf32>, vector<1x8xf32>, vector<1x8xf32>, vector<1x8xf32>, vector<1x8xf32>, vector<1x8xf32>, vector<1x8xf32>, vector<1x8xf32> -> vector<8x8xf32>
    %92 = vector.extract_strided_slice %74 {offsets = [0, 0], sizes = [8, 32], strides = [1, 1]} : vector<32x32xf32> to vector<8x32xf32>
    %cst_18 = arith.constant dense<0.000000e+00> : vector<8x32xf32>
    %93 = tpu.matmul %91, %92, %cst_18 {dimension_numbers = #tpu.dot_dimension_numbers<[1], [0], [0], [1], [0, 0, 1, 1], [], []>} : vector<8x8xf32>, vector<8x32xf32>, vector<8x32xf32> -> vector<8x32xf32>
    %94 = vector.extract_strided_slice %73 {offsets = [0, 1, 0], sizes = [1, 1, 8], strides = [1, 1, 1]} : vector<4x8x8xf32> to vector<1x1x8xf32>
    %95 = vector.shape_cast %94 : vector<1x1x8xf32> to vector<1x8xf32>
    %96 = vector.extract_strided_slice %73 {offsets = [0, 5, 0], sizes = [1, 1, 8], strides = [1, 1, 1]} : vector<4x8x8xf32> to vector<1x1x8xf32>
    %97 = vector.shape_cast %96 : vector<1x1x8xf32> to vector<1x8xf32>
    %98 = vector.extract_strided_slice %73 {offsets = [1, 1, 0], sizes = [1, 1, 8], strides = [1, 1, 1]} : vector<4x8x8xf32> to vector<1x1x8xf32>
    %99 = vector.shape_cast %98 : vector<1x1x8xf32> to vector<1x8xf32>
    %100 = vector.extract_strided_slice %73 {offsets = [1, 5, 0], sizes = [1, 1, 8], strides = [1, 1, 1]} : vector<4x8x8xf32> to vector<1x1x8xf32>
    %101 = vector.shape_cast %100 : vector<1x1x8xf32> to vector<1x8xf32>
    %102 = vector.extract_strided_slice %73 {offsets = [2, 1, 0], sizes = [1, 1, 8], strides = [1, 1, 1]} : vector<4x8x8xf32> to vector<1x1x8xf32>
    %103 = vector.shape_cast %102 : vector<1x1x8xf32> to vector<1x8xf32>
    %104 = vector.extract_strided_slice %73 {offsets = [2, 5, 0], sizes = [1, 1, 8], strides = [1, 1, 1]} : vector<4x8x8xf32> to vector<1x1x8xf32>
    %105 = vector.shape_cast %104 : vector<1x1x8xf32> to vector<1x8xf32>
    %106 = vector.extract_strided_slice %73 {offsets = [3, 1, 0], sizes = [1, 1, 8], strides = [1, 1, 1]} : vector<4x8x8xf32> to vector<1x1x8xf32>
    %107 = vector.shape_cast %106 : vector<1x1x8xf32> to vector<1x8xf32>
    %108 = vector.extract_strided_slice %73 {offsets = [3, 5, 0], sizes = [1, 1, 8], strides = [1, 1, 1]} : vector<4x8x8xf32> to vector<1x1x8xf32>
    %109 = vector.shape_cast %108 : vector<1x1x8xf32> to vector<1x8xf32>
    %110 = tpu.concatenate %95, %97, %99, %101, %103, %105, %107, %109 in 0 : vector<1x8xf32>, vector<1x8xf32>, vector<1x8xf32>, vector<1x8xf32>, vector<1x8xf32>, vector<1x8xf32>, vector<1x8xf32>, vector<1x8xf32> -> vector<8x8xf32>
    %111 = vector.extract_strided_slice %74 {offsets = [8, 0], sizes = [8, 32], strides = [1, 1]} : vector<32x32xf32> to vector<8x32xf32>
    %cst_19 = arith.constant dense<0.000000e+00> : vector<8x32xf32>
    %112 = tpu.matmul %110, %111, %cst_19 {dimension_numbers = #tpu.dot_dimension_numbers<[1], [0], [0], [1], [0, 0, 1, 1], [], []>} : vector<8x8xf32>, vector<8x32xf32>, vector<8x32xf32> -> vector<8x32xf32>
    %113 = arith.addf %93, %112 : vector<8x32xf32>
    %114 = vector.extract_strided_slice %73 {offsets = [0, 2, 0], sizes = [1, 1, 8], strides = [1, 1, 1]} : vector<4x8x8xf32> to vector<1x1x8xf32>
    %115 = vector.shape_cast %114 : vector<1x1x8xf32> to vector<1x8xf32>
    %116 = vector.extract_strided_slice %73 {offsets = [0, 6, 0], sizes = [1, 1, 8], strides = [1, 1, 1]} : vector<4x8x8xf32> to vector<1x1x8xf32>
    %117 = vector.shape_cast %116 : vector<1x1x8xf32> to vector<1x8xf32>
    %118 = vector.extract_strided_slice %73 {offsets = [1, 2, 0], sizes = [1, 1, 8], strides = [1, 1, 1]} : vector<4x8x8xf32> to vector<1x1x8xf32>
    %119 = vector.shape_cast %118 : vector<1x1x8xf32> to vector<1x8xf32>
    %120 = vector.extract_strided_slice %73 {offsets = [1, 6, 0], sizes = [1, 1, 8], strides = [1, 1, 1]} : vector<4x8x8xf32> to vector<1x1x8xf32>
    %121 = vector.shape_cast %120 : vector<1x1x8xf32> to vector<1x8xf32>
    %122 = vector.extract_strided_slice %73 {offsets = [2, 2, 0], sizes = [1, 1, 8], strides = [1, 1, 1]} : vector<4x8x8xf32> to vector<1x1x8xf32>
    %123 = vector.shape_cast %122 : vector<1x1x8xf32> to vector<1x8xf32>
    %124 = vector.extract_strided_slice %73 {offsets = [2, 6, 0], sizes = [1, 1, 8], strides = [1, 1, 1]} : vector<4x8x8xf32> to vector<1x1x8xf32>
    %125 = vector.shape_cast %124 : vector<1x1x8xf32> to vector<1x8xf32>
    %126 = vector.extract_strided_slice %73 {offsets = [3, 2, 0], sizes = [1, 1, 8], strides = [1, 1, 1]} : vector<4x8x8xf32> to vector<1x1x8xf32>
    %127 = vector.shape_cast %126 : vector<1x1x8xf32> to vector<1x8xf32>
    %128 = vector.extract_strided_slice %73 {offsets = [3, 6, 0], sizes = [1, 1, 8], strides = [1, 1, 1]} : vector<4x8x8xf32> to vector<1x1x8xf32>
    %129 = vector.shape_cast %128 : vector<1x1x8xf32> to vector<1x8xf32>
    %130 = tpu.concatenate %115, %117, %119, %121, %123, %125, %127, %129 in 0 : vector<1x8xf32>, vector<1x8xf32>, vector<1x8xf32>, vector<1x8xf32>, vector<1x8xf32>, vector<1x8xf32>, vector<1x8xf32>, vector<1x8xf32> -> vector<8x8xf32>
    %131 = vector.extract_strided_slice %74 {offsets = [16, 0], sizes = [8, 32], strides = [1, 1]} : vector<32x32xf32> to vector<8x32xf32>
    %cst_20 = arith.constant dense<0.000000e+00> : vector<8x32xf32>
    %132 = tpu.matmul %130, %131, %cst_20 {dimension_numbers = #tpu.dot_dimension_numbers<[1], [0], [0], [1], [0, 0, 1, 1], [], []>} : vector<8x8xf32>, vector<8x32xf32>, vector<8x32xf32> -> vector<8x32xf32>
    %133 = arith.addf %113, %132 : vector<8x32xf32>
    %134 = vector.extract_strided_slice %73 {offsets = [0, 3, 0], sizes = [1, 1, 8], strides = [1, 1, 1]} : vector<4x8x8xf32> to vector<1x1x8xf32>
    %135 = vector.shape_cast %134 : vector<1x1x8xf32> to vector<1x8xf32>
    %136 = vector.extract_strided_slice %73 {offsets = [0, 7, 0], sizes = [1, 1, 8], strides = [1, 1, 1]} : vector<4x8x8xf32> to vector<1x1x8xf32>
    %137 = vector.shape_cast %136 : vector<1x1x8xf32> to vector<1x8xf32>
    %138 = vector.extract_strided_slice %73 {offsets = [1, 3, 0], sizes = [1, 1, 8], strides = [1, 1, 1]} : vector<4x8x8xf32> to vector<1x1x8xf32>
    %139 = vector.shape_cast %138 : vector<1x1x8xf32> to vector<1x8xf32>
    %140 = vector.extract_strided_slice %73 {offsets = [1, 7, 0], sizes = [1, 1, 8], strides = [1, 1, 1]} : vector<4x8x8xf32> to vector<1x1x8xf32>
    %141 = vector.shape_cast %140 : vector<1x1x8xf32> to vector<1x8xf32>
    %142 = vector.extract_strided_slice %73 {offsets = [2, 3, 0], sizes = [1, 1, 8], strides = [1, 1, 1]} : vector<4x8x8xf32> to vector<1x1x8xf32>
    %143 = vector.shape_cast %142 : vector<1x1x8xf32> to vector<1x8xf32>
    %144 = vector.extract_strided_slice %73 {offsets = [2, 7, 0], sizes = [1, 1, 8], strides = [1, 1, 1]} : vector<4x8x8xf32> to vector<1x1x8xf32>
    %145 = vector.shape_cast %144 : vector<1x1x8xf32> to vector<1x8xf32>
    %146 = vector.extract_strided_slice %73 {offsets = [3, 3, 0], sizes = [1, 1, 8], strides = [1, 1, 1]} : vector<4x8x8xf32> to vector<1x1x8xf32>
    %147 = vector.shape_cast %146 : vector<1x1x8xf32> to vector<1x8xf32>
    %148 = vector.extract_strided_slice %73 {offsets = [3, 7, 0], sizes = [1, 1, 8], strides = [1, 1, 1]} : vector<4x8x8xf32> to vector<1x1x8xf32>
    %149 = vector.shape_cast %148 : vector<1x1x8xf32> to vector<1x8xf32>
    %150 = tpu.concatenate %135, %137, %139, %141, %143, %145, %147, %149 in 0 : vector<1x8xf32>, vector<1x8xf32>, vector<1x8xf32>, vector<1x8xf32>, vector<1x8xf32>, vector<1x8xf32>, vector<1x8xf32>, vector<1x8xf32> -> vector<8x8xf32>
    %151 = vector.extract_strided_slice %74 {offsets = [24, 0], sizes = [8, 32], strides = [1, 1]} : vector<32x32xf32> to vector<8x32xf32>
    %cst_21 = arith.constant dense<0.000000e+00> : vector<8x32xf32>
    %152 = tpu.matmul %150, %151, %cst_21 {dimension_numbers = #tpu.dot_dimension_numbers<[1], [0], [0], [1], [0, 0, 1, 1], [], []>} : vector<8x8xf32>, vector<8x32xf32>, vector<8x32xf32> -> vector<8x32xf32>
    %153 = arith.addf %133, %152 : vector<8x32xf32>
    %c0_22 = arith.constant 0 : index
    %c0_23 = arith.constant 0 : index
    %154 = vector.load %arg8[%c0_22, %c0_23] : memref<1x32xf32, #tpu.memory_space<vmem>>, vector<1x32xf32>
    %155 = vector.broadcast %154 : vector<1x32xf32> to vector<8x32xf32>
    %156 = arith.addf %153, %155 : vector<8x32xf32>
    %157 = arith.addf %1, %156 : vector<8x32xf32>
    %c0_24 = arith.constant 0 : index
    %c0_25 = arith.constant 0 : index
    %158 = vector.load %arg9[%c0_24, %c0_25] : memref<1x32xf32, #tpu.memory_space<vmem>>, vector<1x32xf32>
    %c0_26 = arith.constant 0 : index
    %c0_27 = arith.constant 0 : index
    %159 = vector.load %arg10[%c0_26, %c0_27] : memref<1x32xf32, #tpu.memory_space<vmem>>, vector<1x32xf32>
    %cst_28 = arith.constant dense<0.000000e+00> : vector<8xf32>
    %160 = vector.multi_reduction <add>, %157, %cst_28 [1] : vector<8x32xf32> to vector<8xf32>
    %161 = vector.shape_cast %160 : vector<8xf32> to vector<8x1xf32>
    %cst_29 = arith.constant 3.200000e+01 : f32
    %162 = vector.broadcast %cst_29 : f32 to vector<8x1xf32>
    %163 = arith.divf %161, %162 : vector<8x1xf32>
    %164 = vector.broadcast %163 : vector<8x1xf32> to vector<8x32xf32>
    %165 = arith.subf %157, %164 : vector<8x32xf32>
    %166 = arith.mulf %165, %165 : vector<8x32xf32>
    %cst_30 = arith.constant dense<0.000000e+00> : vector<8xf32>
    %167 = vector.multi_reduction <add>, %166, %cst_30 [1] : vector<8x32xf32> to vector<8xf32>
    %168 = vector.shape_cast %167 : vector<8xf32> to vector<8x1xf32>
    %cst_31 = arith.constant 3.200000e+01 : f32
    %169 = vector.broadcast %cst_31 : f32 to vector<8x1xf32>
    %170 = arith.divf %168, %169 : vector<8x1xf32>
    %cst_32 = arith.constant 9.99999974E-6 : f32
    %171 = vector.broadcast %cst_32 : f32 to vector<8x1xf32>
    %172 = arith.addf %170, %171 : vector<8x1xf32>
    %173 = math.rsqrt %172 : vector<8x1xf32>
    %174 = vector.broadcast %173 : vector<8x1xf32> to vector<8x32xf32>
    %175 = arith.mulf %165, %174 : vector<8x32xf32>
    %176 = vector.broadcast %158 : vector<1x32xf32> to vector<8x32xf32>
    %177 = arith.mulf %175, %176 : vector<8x32xf32>
    %178 = vector.broadcast %159 : vector<1x32xf32> to vector<8x32xf32>
    %179 = arith.addf %177, %178 : vector<8x32xf32>
    %c0_33 = arith.constant 0 : index
    %c0_34 = arith.constant 0 : index
    %c0_35 = arith.constant 0 : index
    %180 = vector.load %arg2[%c0_33, %c0_34, %c0_35] : memref<1x8x32xf32, #tpu.memory_space<vmem>>, vector<1x8x32xf32>
    %181 = vector.shape_cast %180 : vector<1x8x32xf32> to vector<8x32xf32>
    %c0_36 = arith.constant 0 : index
    %c0_37 = arith.constant 0 : index
    %c0_38 = arith.constant 0 : index
    %182 = vector.load %arg3[%c0_36, %c0_37, %c0_38] : memref<1x8x32xf32, #tpu.memory_space<vmem>>, vector<1x8x32xf32>
    %183 = vector.shape_cast %182 : vector<1x8x32xf32> to vector<8x32xf32>
    %c0_39 = arith.constant 0 : index
    %c0_40 = arith.constant 0 : index
    %184 = vector.load %arg11[%c0_39, %c0_40] : memref<32x32xf32, #tpu.memory_space<vmem>>, vector<32x32xf32>
    %cst_41 = arith.constant dense<0.000000e+00> : vector<8x32xf32>
    %185 = tpu.matmul %179, %184, %cst_41 {dimension_numbers = #tpu.dot_dimension_numbers<[1], [0], [0], [1], [0, 0, 1, 1], [], []>} : vector<8x32xf32>, vector<32x32xf32>, vector<8x32xf32> -> vector<8x32xf32>
    %c0_42 = arith.constant 0 : index
    %c0_43 = arith.constant 0 : index
    %186 = vector.load %arg12[%c0_42, %c0_43] : memref<1x32xf32, #tpu.memory_space<vmem>>, vector<1x32xf32>
    %187 = vector.broadcast %186 : vector<1x32xf32> to vector<8x32xf32>
    %188 = arith.addf %185, %187 : vector<8x32xf32>
    %c0_44 = arith.constant 0 : index
    %c0_45 = arith.constant 0 : index
    %189 = vector.load %arg11[%c0_44, %c0_45] : memref<32x32xf32, #tpu.memory_space<vmem>>, vector<32x32xf32>
    %cst_46 = arith.constant dense<0.000000e+00> : vector<8x32xf32>
    %190 = tpu.matmul %181, %189, %cst_46 {dimension_numbers = #tpu.dot_dimension_numbers<[1], [0], [0], [1], [0, 0, 1, 1], [], []>} : vector<8x32xf32>, vector<32x32xf32>, vector<8x32xf32> -> vector<8x32xf32>
    %c0_47 = arith.constant 0 : index
    %c0_48 = arith.constant 0 : index
    %191 = vector.load %arg12[%c0_47, %c0_48] : memref<1x32xf32, #tpu.memory_space<vmem>>, vector<1x32xf32>
    %192 = vector.broadcast %191 : vector<1x32xf32> to vector<8x32xf32>
    %193 = arith.addf %190, %192 : vector<8x32xf32>
    %c0_49 = arith.constant 0 : index
    %c0_50 = arith.constant 0 : index
    %194 = vector.load %arg11[%c0_49, %c0_50] : memref<32x32xf32, #tpu.memory_space<vmem>>, vector<32x32xf32>
    %cst_51 = arith.constant dense<0.000000e+00> : vector<8x32xf32>
    %195 = tpu.matmul %183, %194, %cst_51 {dimension_numbers = #tpu.dot_dimension_numbers<[1], [0], [0], [1], [0, 0, 1, 1], [], []>} : vector<8x32xf32>, vector<32x32xf32>, vector<8x32xf32> -> vector<8x32xf32>
    %c0_52 = arith.constant 0 : index
    %c0_53 = arith.constant 0 : index
    %196 = vector.load %arg12[%c0_52, %c0_53] : memref<1x32xf32, #tpu.memory_space<vmem>>, vector<1x32xf32>
    %197 = vector.broadcast %196 : vector<1x32xf32> to vector<8x32xf32>
    %198 = arith.addf %195, %197 : vector<8x32xf32>
    %199 = vector.extract_strided_slice %188 {offsets = [0, 0], sizes = [1, 8], strides = [1, 1]} : vector<8x32xf32> to vector<1x8xf32>
    %200 = vector.extract_strided_slice %188 {offsets = [0, 8], sizes = [1, 8], strides = [1, 1]} : vector<8x32xf32> to vector<1x8xf32>
    %201 = vector.extract_strided_slice %188 {offsets = [0, 16], sizes = [1, 8], strides = [1, 1]} : vector<8x32xf32> to vector<1x8xf32>
    %202 = vector.extract_strided_slice %188 {offsets = [0, 24], sizes = [1, 8], strides = [1, 1]} : vector<8x32xf32> to vector<1x8xf32>
    %203 = vector.extract_strided_slice %188 {offsets = [1, 0], sizes = [1, 8], strides = [1, 1]} : vector<8x32xf32> to vector<1x8xf32>
    %204 = vector.extract_strided_slice %188 {offsets = [1, 8], sizes = [1, 8], strides = [1, 1]} : vector<8x32xf32> to vector<1x8xf32>
    %205 = vector.extract_strided_slice %188 {offsets = [1, 16], sizes = [1, 8], strides = [1, 1]} : vector<8x32xf32> to vector<1x8xf32>
    %206 = vector.extract_strided_slice %188 {offsets = [1, 24], sizes = [1, 8], strides = [1, 1]} : vector<8x32xf32> to vector<1x8xf32>
    %207 = tpu.concatenate %199, %200, %201, %202, %203, %204, %205, %206 in 0 : vector<1x8xf32>, vector<1x8xf32>, vector<1x8xf32>, vector<1x8xf32>, vector<1x8xf32>, vector<1x8xf32>, vector<1x8xf32>, vector<1x8xf32> -> vector<8x8xf32>
    %208 = vector.extract_strided_slice %188 {offsets = [2, 0], sizes = [1, 8], strides = [1, 1]} : vector<8x32xf32> to vector<1x8xf32>
    %209 = vector.extract_strided_slice %188 {offsets = [2, 8], sizes = [1, 8], strides = [1, 1]} : vector<8x32xf32> to vector<1x8xf32>
    %210 = vector.extract_strided_slice %188 {offsets = [2, 16], sizes = [1, 8], strides = [1, 1]} : vector<8x32xf32> to vector<1x8xf32>
    %211 = vector.extract_strided_slice %188 {offsets = [2, 24], sizes = [1, 8], strides = [1, 1]} : vector<8x32xf32> to vector<1x8xf32>
    %212 = vector.extract_strided_slice %188 {offsets = [3, 0], sizes = [1, 8], strides = [1, 1]} : vector<8x32xf32> to vector<1x8xf32>
    %213 = vector.extract_strided_slice %188 {offsets = [3, 8], sizes = [1, 8], strides = [1, 1]} : vector<8x32xf32> to vector<1x8xf32>
    %214 = vector.extract_strided_slice %188 {offsets = [3, 16], sizes = [1, 8], strides = [1, 1]} : vector<8x32xf32> to vector<1x8xf32>
    %215 = vector.extract_strided_slice %188 {offsets = [3, 24], sizes = [1, 8], strides = [1, 1]} : vector<8x32xf32> to vector<1x8xf32>
    %216 = tpu.concatenate %208, %209, %210, %211, %212, %213, %214, %215 in 0 : vector<1x8xf32>, vector<1x8xf32>, vector<1x8xf32>, vector<1x8xf32>, vector<1x8xf32>, vector<1x8xf32>, vector<1x8xf32>, vector<1x8xf32> -> vector<8x8xf32>
    %217 = vector.extract_strided_slice %188 {offsets = [4, 0], sizes = [1, 8], strides = [1, 1]} : vector<8x32xf32> to vector<1x8xf32>
    %218 = vector.extract_strided_slice %188 {offsets = [4, 8], sizes = [1, 8], strides = [1, 1]} : vector<8x32xf32> to vector<1x8xf32>
    %219 = vector.extract_strided_slice %188 {offsets = [4, 16], sizes = [1, 8], strides = [1, 1]} : vector<8x32xf32> to vector<1x8xf32>
    %220 = vector.extract_strided_slice %188 {offsets = [4, 24], sizes = [1, 8], strides = [1, 1]} : vector<8x32xf32> to vector<1x8xf32>
    %221 = vector.extract_strided_slice %188 {offsets = [5, 0], sizes = [1, 8], strides = [1, 1]} : vector<8x32xf32> to vector<1x8xf32>
    %222 = vector.extract_strided_slice %188 {offsets = [5, 8], sizes = [1, 8], strides = [1, 1]} : vector<8x32xf32> to vector<1x8xf32>
    %223 = vector.extract_strided_slice %188 {offsets = [5, 16], sizes = [1, 8], strides = [1, 1]} : vector<8x32xf32> to vector<1x8xf32>
    %224 = vector.extract_strided_slice %188 {offsets = [5, 24], sizes = [1, 8], strides = [1, 1]} : vector<8x32xf32> to vector<1x8xf32>
    %225 = tpu.concatenate %217, %218, %219, %220, %221, %222, %223, %224 in 0 : vector<1x8xf32>, vector<1x8xf32>, vector<1x8xf32>, vector<1x8xf32>, vector<1x8xf32>, vector<1x8xf32>, vector<1x8xf32>, vector<1x8xf32> -> vector<8x8xf32>
    %226 = vector.extract_strided_slice %188 {offsets = [6, 0], sizes = [1, 8], strides = [1, 1]} : vector<8x32xf32> to vector<1x8xf32>
    %227 = vector.extract_strided_slice %188 {offsets = [6, 8], sizes = [1, 8], strides = [1, 1]} : vector<8x32xf32> to vector<1x8xf32>
    %228 = vector.extract_strided_slice %188 {offsets = [6, 16], sizes = [1, 8], strides = [1, 1]} : vector<8x32xf32> to vector<1x8xf32>
    %229 = vector.extract_strided_slice %188 {offsets = [6, 24], sizes = [1, 8], strides = [1, 1]} : vector<8x32xf32> to vector<1x8xf32>
    %230 = vector.extract_strided_slice %188 {offsets = [7, 0], sizes = [1, 8], strides = [1, 1]} : vector<8x32xf32> to vector<1x8xf32>
    %231 = vector.extract_strided_slice %188 {offsets = [7, 8], sizes = [1, 8], strides = [1, 1]} : vector<8x32xf32> to vector<1x8xf32>
    %232 = vector.extract_strided_slice %188 {offsets = [7, 16], sizes = [1, 8], strides = [1, 1]} : vector<8x32xf32> to vector<1x8xf32>
    %233 = vector.extract_strided_slice %188 {offsets = [7, 24], sizes = [1, 8], strides = [1, 1]} : vector<8x32xf32> to vector<1x8xf32>
    %234 = tpu.concatenate %226, %227, %228, %229, %230, %231, %232, %233 in 0 : vector<1x8xf32>, vector<1x8xf32>, vector<1x8xf32>, vector<1x8xf32>, vector<1x8xf32>, vector<1x8xf32>, vector<1x8xf32>, vector<1x8xf32> -> vector<8x8xf32>
    %235 = vector.shape_cast %207 : vector<8x8xf32> to vector<1x8x8xf32>
    %236 = vector.shape_cast %216 : vector<8x8xf32> to vector<1x8x8xf32>
    %237 = vector.shape_cast %225 : vector<8x8xf32> to vector<1x8x8xf32>
    %238 = vector.shape_cast %234 : vector<8x8xf32> to vector<1x8x8xf32>
    %239 = tpu.concatenate %235, %236, %237, %238 in 0 : vector<1x8x8xf32>, vector<1x8x8xf32>, vector<1x8x8xf32>, vector<1x8x8xf32> -> vector<4x8x8xf32>
    %240 = vector.extract_strided_slice %193 {offsets = [0, 0], sizes = [1, 8], strides = [1, 1]} : vector<8x32xf32> to vector<1x8xf32>
    %241 = vector.extract_strided_slice %193 {offsets = [0, 8], sizes = [1, 8], strides = [1, 1]} : vector<8x32xf32> to vector<1x8xf32>
    %242 = vector.extract_strided_slice %193 {offsets = [0, 16], sizes = [1, 8], strides = [1, 1]} : vector<8x32xf32> to vector<1x8xf32>
    %243 = vector.extract_strided_slice %193 {offsets = [0, 24], sizes = [1, 8], strides = [1, 1]} : vector<8x32xf32> to vector<1x8xf32>
    %244 = vector.extract_strided_slice %193 {offsets = [1, 0], sizes = [1, 8], strides = [1, 1]} : vector<8x32xf32> to vector<1x8xf32>
    %245 = vector.extract_strided_slice %193 {offsets = [1, 8], sizes = [1, 8], strides = [1, 1]} : vector<8x32xf32> to vector<1x8xf32>
    %246 = vector.extract_strided_slice %193 {offsets = [1, 16], sizes = [1, 8], strides = [1, 1]} : vector<8x32xf32> to vector<1x8xf32>
    %247 = vector.extract_strided_slice %193 {offsets = [1, 24], sizes = [1, 8], strides = [1, 1]} : vector<8x32xf32> to vector<1x8xf32>
    %248 = tpu.concatenate %240, %241, %242, %243, %244, %245, %246, %247 in 0 : vector<1x8xf32>, vector<1x8xf32>, vector<1x8xf32>, vector<1x8xf32>, vector<1x8xf32>, vector<1x8xf32>, vector<1x8xf32>, vector<1x8xf32> -> vector<8x8xf32>
    %249 = vector.extract_strided_slice %193 {offsets = [2, 0], sizes = [1, 8], strides = [1, 1]} : vector<8x32xf32> to vector<1x8xf32>
    %250 = vector.extract_strided_slice %193 {offsets = [2, 8], sizes = [1, 8], strides = [1, 1]} : vector<8x32xf32> to vector<1x8xf32>
    %251 = vector.extract_strided_slice %193 {offsets = [2, 16], sizes = [1, 8], strides = [1, 1]} : vector<8x32xf32> to vector<1x8xf32>
    %252 = vector.extract_strided_slice %193 {offsets = [2, 24], sizes = [1, 8], strides = [1, 1]} : vector<8x32xf32> to vector<1x8xf32>
    %253 = vector.extract_strided_slice %193 {offsets = [3, 0], sizes = [1, 8], strides = [1, 1]} : vector<8x32xf32> to vector<1x8xf32>
    %254 = vector.extract_strided_slice %193 {offsets = [3, 8], sizes = [1, 8], strides = [1, 1]} : vector<8x32xf32> to vector<1x8xf32>
    %255 = vector.extract_strided_slice %193 {offsets = [3, 16], sizes = [1, 8], strides = [1, 1]} : vector<8x32xf32> to vector<1x8xf32>
    %256 = vector.extract_strided_slice %193 {offsets = [3, 24], sizes = [1, 8], strides = [1, 1]} : vector<8x32xf32> to vector<1x8xf32>
    %257 = tpu.concatenate %249, %250, %251, %252, %253, %254, %255, %256 in 0 : vector<1x8xf32>, vector<1x8xf32>, vector<1x8xf32>, vector<1x8xf32>, vector<1x8xf32>, vector<1x8xf32>, vector<1x8xf32>, vector<1x8xf32> -> vector<8x8xf32>
    %258 = vector.extract_strided_slice %193 {offsets = [4, 0], sizes = [1, 8], strides = [1, 1]} : vector<8x32xf32> to vector<1x8xf32>
    %259 = vector.extract_strided_slice %193 {offsets = [4, 8], sizes = [1, 8], strides = [1, 1]} : vector<8x32xf32> to vector<1x8xf32>
    %260 = vector.extract_strided_slice %193 {offsets = [4, 16], sizes = [1, 8], strides = [1, 1]} : vector<8x32xf32> to vector<1x8xf32>
    %261 = vector.extract_strided_slice %193 {offsets = [4, 24], sizes = [1, 8], strides = [1, 1]} : vector<8x32xf32> to vector<1x8xf32>
    %262 = vector.extract_strided_slice %193 {offsets = [5, 0], sizes = [1, 8], strides = [1, 1]} : vector<8x32xf32> to vector<1x8xf32>
    %263 = vector.extract_strided_slice %193 {offsets = [5, 8], sizes = [1, 8], strides = [1, 1]} : vector<8x32xf32> to vector<1x8xf32>
    %264 = vector.extract_strided_slice %193 {offsets = [5, 16], sizes = [1, 8], strides = [1, 1]} : vector<8x32xf32> to vector<1x8xf32>
    %265 = vector.extract_strided_slice %193 {offsets = [5, 24], sizes = [1, 8], strides = [1, 1]} : vector<8x32xf32> to vector<1x8xf32>
    %266 = tpu.concatenate %258, %259, %260, %261, %262, %263, %264, %265 in 0 : vector<1x8xf32>, vector<1x8xf32>, vector<1x8xf32>, vector<1x8xf32>, vector<1x8xf32>, vector<1x8xf32>, vector<1x8xf32>, vector<1x8xf32> -> vector<8x8xf32>
    %267 = vector.extract_strided_slice %193 {offsets = [6, 0], sizes = [1, 8], strides = [1, 1]} : vector<8x32xf32> to vector<1x8xf32>
    %268 = vector.extract_strided_slice %193 {offsets = [6, 8], sizes = [1, 8], strides = [1, 1]} : vector<8x32xf32> to vector<1x8xf32>
    %269 = vector.extract_strided_slice %193 {offsets = [6, 16], sizes = [1, 8], strides = [1, 1]} : vector<8x32xf32> to vector<1x8xf32>
    %270 = vector.extract_strided_slice %193 {offsets = [6, 24], sizes = [1, 8], strides = [1, 1]} : vector<8x32xf32> to vector<1x8xf32>
    %271 = vector.extract_strided_slice %193 {offsets = [7, 0], sizes = [1, 8], strides = [1, 1]} : vector<8x32xf32> to vector<1x8xf32>
    %272 = vector.extract_strided_slice %193 {offsets = [7, 8], sizes = [1, 8], strides = [1, 1]} : vector<8x32xf32> to vector<1x8xf32>
    %273 = vector.extract_strided_slice %193 {offsets = [7, 16], sizes = [1, 8], strides = [1, 1]} : vector<8x32xf32> to vector<1x8xf32>
    %274 = vector.extract_strided_slice %193 {offsets = [7, 24], sizes = [1, 8], strides = [1, 1]} : vector<8x32xf32> to vector<1x8xf32>
    %275 = tpu.concatenate %267, %268, %269, %270, %271, %272, %273, %274 in 0 : vector<1x8xf32>, vector<1x8xf32>, vector<1x8xf32>, vector<1x8xf32>, vector<1x8xf32>, vector<1x8xf32>, vector<1x8xf32>, vector<1x8xf32> -> vector<8x8xf32>
    %276 = vector.shape_cast %248 : vector<8x8xf32> to vector<1x8x8xf32>
    %277 = vector.shape_cast %257 : vector<8x8xf32> to vector<1x8x8xf32>
    %278 = vector.shape_cast %266 : vector<8x8xf32> to vector<1x8x8xf32>
    %279 = vector.shape_cast %275 : vector<8x8xf32> to vector<1x8x8xf32>
    %280 = tpu.concatenate %276, %277, %278, %279 in 0 : vector<1x8x8xf32>, vector<1x8x8xf32>, vector<1x8x8xf32>, vector<1x8x8xf32> -> vector<4x8x8xf32>
    %281 = vector.extract_strided_slice %198 {offsets = [0, 0], sizes = [1, 8], strides = [1, 1]} : vector<8x32xf32> to vector<1x8xf32>
    %282 = vector.extract_strided_slice %198 {offsets = [0, 8], sizes = [1, 8], strides = [1, 1]} : vector<8x32xf32> to vector<1x8xf32>
    %283 = vector.extract_strided_slice %198 {offsets = [0, 16], sizes = [1, 8], strides = [1, 1]} : vector<8x32xf32> to vector<1x8xf32>
    %284 = vector.extract_strided_slice %198 {offsets = [0, 24], sizes = [1, 8], strides = [1, 1]} : vector<8x32xf32> to vector<1x8xf32>
    %285 = vector.extract_strided_slice %198 {offsets = [1, 0], sizes = [1, 8], strides = [1, 1]} : vector<8x32xf32> to vector<1x8xf32>
    %286 = vector.extract_strided_slice %198 {offsets = [1, 8], sizes = [1, 8], strides = [1, 1]} : vector<8x32xf32> to vector<1x8xf32>
    %287 = vector.extract_strided_slice %198 {offsets = [1, 16], sizes = [1, 8], strides = [1, 1]} : vector<8x32xf32> to vector<1x8xf32>
    %288 = vector.extract_strided_slice %198 {offsets = [1, 24], sizes = [1, 8], strides = [1, 1]} : vector<8x32xf32> to vector<1x8xf32>
    %289 = tpu.concatenate %281, %282, %283, %284, %285, %286, %287, %288 in 0 : vector<1x8xf32>, vector<1x8xf32>, vector<1x8xf32>, vector<1x8xf32>, vector<1x8xf32>, vector<1x8xf32>, vector<1x8xf32>, vector<1x8xf32> -> vector<8x8xf32>
    %290 = vector.extract_strided_slice %198 {offsets = [2, 0], sizes = [1, 8], strides = [1, 1]} : vector<8x32xf32> to vector<1x8xf32>
    %291 = vector.extract_strided_slice %198 {offsets = [2, 8], sizes = [1, 8], strides = [1, 1]} : vector<8x32xf32> to vector<1x8xf32>
    %292 = vector.extract_strided_slice %198 {offsets = [2, 16], sizes = [1, 8], strides = [1, 1]} : vector<8x32xf32> to vector<1x8xf32>
    %293 = vector.extract_strided_slice %198 {offsets = [2, 24], sizes = [1, 8], strides = [1, 1]} : vector<8x32xf32> to vector<1x8xf32>
    %294 = vector.extract_strided_slice %198 {offsets = [3, 0], sizes = [1, 8], strides = [1, 1]} : vector<8x32xf32> to vector<1x8xf32>
    %295 = vector.extract_strided_slice %198 {offsets = [3, 8], sizes = [1, 8], strides = [1, 1]} : vector<8x32xf32> to vector<1x8xf32>
    %296 = vector.extract_strided_slice %198 {offsets = [3, 16], sizes = [1, 8], strides = [1, 1]} : vector<8x32xf32> to vector<1x8xf32>
    %297 = vector.extract_strided_slice %198 {offsets = [3, 24], sizes = [1, 8], strides = [1, 1]} : vector<8x32xf32> to vector<1x8xf32>
    %298 = tpu.concatenate %290, %291, %292, %293, %294, %295, %296, %297 in 0 : vector<1x8xf32>, vector<1x8xf32>, vector<1x8xf32>, vector<1x8xf32>, vector<1x8xf32>, vector<1x8xf32>, vector<1x8xf32>, vector<1x8xf32> -> vector<8x8xf32>
    %299 = vector.extract_strided_slice %198 {offsets = [4, 0], sizes = [1, 8], strides = [1, 1]} : vector<8x32xf32> to vector<1x8xf32>
    %300 = vector.extract_strided_slice %198 {offsets = [4, 8], sizes = [1, 8], strides = [1, 1]} : vector<8x32xf32> to vector<1x8xf32>
    %301 = vector.extract_strided_slice %198 {offsets = [4, 16], sizes = [1, 8], strides = [1, 1]} : vector<8x32xf32> to vector<1x8xf32>
    %302 = vector.extract_strided_slice %198 {offsets = [4, 24], sizes = [1, 8], strides = [1, 1]} : vector<8x32xf32> to vector<1x8xf32>
    %303 = vector.extract_strided_slice %198 {offsets = [5, 0], sizes = [1, 8], strides = [1, 1]} : vector<8x32xf32> to vector<1x8xf32>
    %304 = vector.extract_strided_slice %198 {offsets = [5, 8], sizes = [1, 8], strides = [1, 1]} : vector<8x32xf32> to vector<1x8xf32>
    %305 = vector.extract_strided_slice %198 {offsets = [5, 16], sizes = [1, 8], strides = [1, 1]} : vector<8x32xf32> to vector<1x8xf32>
    %306 = vector.extract_strided_slice %198 {offsets = [5, 24], sizes = [1, 8], strides = [1, 1]} : vector<8x32xf32> to vector<1x8xf32>
    %307 = tpu.concatenate %299, %300, %301, %302, %303, %304, %305, %306 in 0 : vector<1x8xf32>, vector<1x8xf32>, vector<1x8xf32>, vector<1x8xf32>, vector<1x8xf32>, vector<1x8xf32>, vector<1x8xf32>, vector<1x8xf32> -> vector<8x8xf32>
    %308 = vector.extract_strided_slice %198 {offsets = [6, 0], sizes = [1, 8], strides = [1, 1]} : vector<8x32xf32> to vector<1x8xf32>
    %309 = vector.extract_strided_slice %198 {offsets = [6, 8], sizes = [1, 8], strides = [1, 1]} : vector<8x32xf32> to vector<1x8xf32>
    %310 = vector.extract_strided_slice %198 {offsets = [6, 16], sizes = [1, 8], strides = [1, 1]} : vector<8x32xf32> to vector<1x8xf32>
    %311 = vector.extract_strided_slice %198 {offsets = [6, 24], sizes = [1, 8], strides = [1, 1]} : vector<8x32xf32> to vector<1x8xf32>
    %312 = vector.extract_strided_slice %198 {offsets = [7, 0], sizes = [1, 8], strides = [1, 1]} : vector<8x32xf32> to vector<1x8xf32>
    %313 = vector.extract_strided_slice %198 {offsets = [7, 8], sizes = [1, 8], strides = [1, 1]} : vector<8x32xf32> to vector<1x8xf32>
    %314 = vector.extract_strided_slice %198 {offsets = [7, 16], sizes = [1, 8], strides = [1, 1]} : vector<8x32xf32> to vector<1x8xf32>
    %315 = vector.extract_strided_slice %198 {offsets = [7, 24], sizes = [1, 8], strides = [1, 1]} : vector<8x32xf32> to vector<1x8xf32>
    %316 = tpu.concatenate %308, %309, %310, %311, %312, %313, %314, %315 in 0 : vector<1x8xf32>, vector<1x8xf32>, vector<1x8xf32>, vector<1x8xf32>, vector<1x8xf32>, vector<1x8xf32>, vector<1x8xf32>, vector<1x8xf32> -> vector<8x8xf32>
    %317 = vector.shape_cast %289 : vector<8x8xf32> to vector<1x8x8xf32>
    %318 = vector.shape_cast %298 : vector<8x8xf32> to vector<1x8x8xf32>
    %319 = vector.shape_cast %307 : vector<8x8xf32> to vector<1x8x8xf32>
    %320 = vector.shape_cast %316 : vector<8x8xf32> to vector<1x8x8xf32>
    %321 = tpu.concatenate %317, %318, %319, %320 in 0 : vector<1x8x8xf32>, vector<1x8x8xf32>, vector<1x8x8xf32>, vector<1x8x8xf32> -> vector<4x8x8xf32>
    %cst_54 = arith.constant 0.353553385 : f32
    %322 = vector.broadcast %cst_54 : f32 to vector<4x8x8xf32>
    %323 = arith.mulf %239, %322 : vector<4x8x8xf32>
    "tpu.trace_start"() <{level = 10 : i32, message = "hqd,hkd->hqk"}> : () -> ()
    %cst_55 = arith.constant dense<0.000000e+00> : vector<4x8x8xf32>
    %324 = tpu.matmul %323, %280, %cst_55 {dimension_numbers = #tpu.dot_dimension_numbers<[2], [2], [1], [1], [0, 0, 0, 1, 1, 1], [0], [0]>} : vector<4x8x8xf32>, vector<4x8x8xf32>, vector<4x8x8xf32> -> vector<4x8x8xf32>
    "tpu.trace_stop"() : () -> ()
    %cst_56 = arith.constant dense<0xFF800000> : vector<4x8xf32>
    %325 = vector.multi_reduction <maximumf>, %324, %cst_56 [2] : vector<4x8x8xf32> to vector<4x8xf32>
    %326 = vector.shape_cast %325 : vector<4x8xf32> to vector<4x8x1xf32>
    %327 = vector.broadcast %326 : vector<4x8x1xf32> to vector<4x8x8xf32>
    %328 = arith.subf %324, %327 : vector<4x8x8xf32>
    %329 = math.exp %328 : vector<4x8x8xf32>
    %cst_57 = arith.constant dense<0.000000e+00> : vector<4x8xf32>
    %330 = vector.multi_reduction <add>, %329, %cst_57 [2] : vector<4x8x8xf32> to vector<4x8xf32>
    %331 = vector.shape_cast %330 : vector<4x8xf32> to vector<4x8x1xf32>
    %332 = tpu.reciprocal %331 {approx = true} : vector<4x8x1xf32> -> vector<4x8x1xf32>
    %333 = arith.mulf %331, %332 : vector<4x8x1xf32>
    %cst_58 = arith.constant 2.000000e+00 : f32
    %334 = vector.broadcast %cst_58 : f32 to vector<4x8x1xf32>
    %335 = arith.subf %334, %333 : vector<4x8x1xf32>
    %336 = arith.mulf %332, %335 : vector<4x8x1xf32>
    %337 = vector.broadcast %336 : vector<4x8x1xf32> to vector<4x8x8xf32>
    %338 = arith.mulf %329, %337 : vector<4x8x8xf32>
    "tpu.trace_start"() <{level = 10 : i32, message = "hqk,hkd->hqd"}> : () -> ()
    %cst_59 = arith.constant dense<0.000000e+00> : vector<4x8x8xf32>
    %339 = tpu.matmul %338, %321, %cst_59 {dimension_numbers = #tpu.dot_dimension_numbers<[2], [1], [1], [2], [0, 0, 0, 1, 1, 2], [0], [0]>} : vector<4x8x8xf32>, vector<4x8x8xf32>, vector<4x8x8xf32> -> vector<4x8x8xf32>
    "tpu.trace_stop"() : () -> ()
    %c0_60 = arith.constant 0 : index
    %c0_61 = arith.constant 0 : index
    %340 = vector.load %arg13[%c0_60, %c0_61] : memref<32x32xf32, #tpu.memory_space<vmem>>, vector<32x32xf32>
    %341 = vector.extract_strided_slice %339 {offsets = [0, 0, 0], sizes = [1, 1, 8], strides = [1, 1, 1]} : vector<4x8x8xf32> to vector<1x1x8xf32>
    %342 = vector.shape_cast %341 : vector<1x1x8xf32> to vector<1x8xf32>
    %343 = vector.extract_strided_slice %339 {offsets = [0, 4, 0], sizes = [1, 1, 8], strides = [1, 1, 1]} : vector<4x8x8xf32> to vector<1x1x8xf32>
    %344 = vector.shape_cast %343 : vector<1x1x8xf32> to vector<1x8xf32>
    %345 = vector.extract_strided_slice %339 {offsets = [1, 0, 0], sizes = [1, 1, 8], strides = [1, 1, 1]} : vector<4x8x8xf32> to vector<1x1x8xf32>
    %346 = vector.shape_cast %345 : vector<1x1x8xf32> to vector<1x8xf32>
    %347 = vector.extract_strided_slice %339 {offsets = [1, 4, 0], sizes = [1, 1, 8], strides = [1, 1, 1]} : vector<4x8x8xf32> to vector<1x1x8xf32>
    %348 = vector.shape_cast %347 : vector<1x1x8xf32> to vector<1x8xf32>
    %349 = vector.extract_strided_slice %339 {offsets = [2, 0, 0], sizes = [1, 1, 8], strides = [1, 1, 1]} : vector<4x8x8xf32> to vector<1x1x8xf32>
    %350 = vector.shape_cast %349 : vector<1x1x8xf32> to vector<1x8xf32>
    %351 = vector.extract_strided_slice %339 {offsets = [2, 4, 0], sizes = [1, 1, 8], strides = [1, 1, 1]} : vector<4x8x8xf32> to vector<1x1x8xf32>
    %352 = vector.shape_cast %351 : vector<1x1x8xf32> to vector<1x8xf32>
    %353 = vector.extract_strided_slice %339 {offsets = [3, 0, 0], sizes = [1, 1, 8], strides = [1, 1, 1]} : vector<4x8x8xf32> to vector<1x1x8xf32>
    %354 = vector.shape_cast %353 : vector<1x1x8xf32> to vector<1x8xf32>
    %355 = vector.extract_strided_slice %339 {offsets = [3, 4, 0], sizes = [1, 1, 8], strides = [1, 1, 1]} : vector<4x8x8xf32> to vector<1x1x8xf32>
    %356 = vector.shape_cast %355 : vector<1x1x8xf32> to vector<1x8xf32>
    %357 = tpu.concatenate %342, %344, %346, %348, %350, %352, %354, %356 in 0 : vector<1x8xf32>, vector<1x8xf32>, vector<1x8xf32>, vector<1x8xf32>, vector<1x8xf32>, vector<1x8xf32>, vector<1x8xf32>, vector<1x8xf32> -> vector<8x8xf32>
    %358 = vector.extract_strided_slice %340 {offsets = [0, 0], sizes = [8, 32], strides = [1, 1]} : vector<32x32xf32> to vector<8x32xf32>
    %cst_62 = arith.constant dense<0.000000e+00> : vector<8x32xf32>
    %359 = tpu.matmul %357, %358, %cst_62 {dimension_numbers = #tpu.dot_dimension_numbers<[1], [0], [0], [1], [0, 0, 1, 1], [], []>} : vector<8x8xf32>, vector<8x32xf32>, vector<8x32xf32> -> vector<8x32xf32>
    %360 = vector.extract_strided_slice %339 {offsets = [0, 1, 0], sizes = [1, 1, 8], strides = [1, 1, 1]} : vector<4x8x8xf32> to vector<1x1x8xf32>
    %361 = vector.shape_cast %360 : vector<1x1x8xf32> to vector<1x8xf32>
    %362 = vector.extract_strided_slice %339 {offsets = [0, 5, 0], sizes = [1, 1, 8], strides = [1, 1, 1]} : vector<4x8x8xf32> to vector<1x1x8xf32>
    %363 = vector.shape_cast %362 : vector<1x1x8xf32> to vector<1x8xf32>
    %364 = vector.extract_strided_slice %339 {offsets = [1, 1, 0], sizes = [1, 1, 8], strides = [1, 1, 1]} : vector<4x8x8xf32> to vector<1x1x8xf32>
    %365 = vector.shape_cast %364 : vector<1x1x8xf32> to vector<1x8xf32>
    %366 = vector.extract_strided_slice %339 {offsets = [1, 5, 0], sizes = [1, 1, 8], strides = [1, 1, 1]} : vector<4x8x8xf32> to vector<1x1x8xf32>
    %367 = vector.shape_cast %366 : vector<1x1x8xf32> to vector<1x8xf32>
    %368 = vector.extract_strided_slice %339 {offsets = [2, 1, 0], sizes = [1, 1, 8], strides = [1, 1, 1]} : vector<4x8x8xf32> to vector<1x1x8xf32>
    %369 = vector.shape_cast %368 : vector<1x1x8xf32> to vector<1x8xf32>
    %370 = vector.extract_strided_slice %339 {offsets = [2, 5, 0], sizes = [1, 1, 8], strides = [1, 1, 1]} : vector<4x8x8xf32> to vector<1x1x8xf32>
    %371 = vector.shape_cast %370 : vector<1x1x8xf32> to vector<1x8xf32>
    %372 = vector.extract_strided_slice %339 {offsets = [3, 1, 0], sizes = [1, 1, 8], strides = [1, 1, 1]} : vector<4x8x8xf32> to vector<1x1x8xf32>
    %373 = vector.shape_cast %372 : vector<1x1x8xf32> to vector<1x8xf32>
    %374 = vector.extract_strided_slice %339 {offsets = [3, 5, 0], sizes = [1, 1, 8], strides = [1, 1, 1]} : vector<4x8x8xf32> to vector<1x1x8xf32>
    %375 = vector.shape_cast %374 : vector<1x1x8xf32> to vector<1x8xf32>
    %376 = tpu.concatenate %361, %363, %365, %367, %369, %371, %373, %375 in 0 : vector<1x8xf32>, vector<1x8xf32>, vector<1x8xf32>, vector<1x8xf32>, vector<1x8xf32>, vector<1x8xf32>, vector<1x8xf32>, vector<1x8xf32> -> vector<8x8xf32>
    %377 = vector.extract_strided_slice %340 {offsets = [8, 0], sizes = [8, 32], strides = [1, 1]} : vector<32x32xf32> to vector<8x32xf32>
    %cst_63 = arith.constant dense<0.000000e+00> : vector<8x32xf32>
    %378 = tpu.matmul %376, %377, %cst_63 {dimension_numbers = #tpu.dot_dimension_numbers<[1], [0], [0], [1], [0, 0, 1, 1], [], []>} : vector<8x8xf32>, vector<8x32xf32>, vector<8x32xf32> -> vector<8x32xf32>
    %379 = arith.addf %359, %378 : vector<8x32xf32>
    %380 = vector.extract_strided_slice %339 {offsets = [0, 2, 0], sizes = [1, 1, 8], strides = [1, 1, 1]} : vector<4x8x8xf32> to vector<1x1x8xf32>
    %381 = vector.shape_cast %380 : vector<1x1x8xf32> to vector<1x8xf32>
    %382 = vector.extract_strided_slice %339 {offsets = [0, 6, 0], sizes = [1, 1, 8], strides = [1, 1, 1]} : vector<4x8x8xf32> to vector<1x1x8xf32>
    %383 = vector.shape_cast %382 : vector<1x1x8xf32> to vector<1x8xf32>
    %384 = vector.extract_strided_slice %339 {offsets = [1, 2, 0], sizes = [1, 1, 8], strides = [1, 1, 1]} : vector<4x8x8xf32> to vector<1x1x8xf32>
    %385 = vector.shape_cast %384 : vector<1x1x8xf32> to vector<1x8xf32>
    %386 = vector.extract_strided_slice %339 {offsets = [1, 6, 0], sizes = [1, 1, 8], strides = [1, 1, 1]} : vector<4x8x8xf32> to vector<1x1x8xf32>
    %387 = vector.shape_cast %386 : vector<1x1x8xf32> to vector<1x8xf32>
    %388 = vector.extract_strided_slice %339 {offsets = [2, 2, 0], sizes = [1, 1, 8], strides = [1, 1, 1]} : vector<4x8x8xf32> to vector<1x1x8xf32>
    %389 = vector.shape_cast %388 : vector<1x1x8xf32> to vector<1x8xf32>
    %390 = vector.extract_strided_slice %339 {offsets = [2, 6, 0], sizes = [1, 1, 8], strides = [1, 1, 1]} : vector<4x8x8xf32> to vector<1x1x8xf32>
    %391 = vector.shape_cast %390 : vector<1x1x8xf32> to vector<1x8xf32>
    %392 = vector.extract_strided_slice %339 {offsets = [3, 2, 0], sizes = [1, 1, 8], strides = [1, 1, 1]} : vector<4x8x8xf32> to vector<1x1x8xf32>
    %393 = vector.shape_cast %392 : vector<1x1x8xf32> to vector<1x8xf32>
    %394 = vector.extract_strided_slice %339 {offsets = [3, 6, 0], sizes = [1, 1, 8], strides = [1, 1, 1]} : vector<4x8x8xf32> to vector<1x1x8xf32>
    %395 = vector.shape_cast %394 : vector<1x1x8xf32> to vector<1x8xf32>
    %396 = tpu.concatenate %381, %383, %385, %387, %389, %391, %393, %395 in 0 : vector<1x8xf32>, vector<1x8xf32>, vector<1x8xf32>, vector<1x8xf32>, vector<1x8xf32>, vector<1x8xf32>, vector<1x8xf32>, vector<1x8xf32> -> vector<8x8xf32>
    %397 = vector.extract_strided_slice %340 {offsets = [16, 0], sizes = [8, 32], strides = [1, 1]} : vector<32x32xf32> to vector<8x32xf32>
    %cst_64 = arith.constant dense<0.000000e+00> : vector<8x32xf32>
    %398 = tpu.matmul %396, %397, %cst_64 {dimension_numbers = #tpu.dot_dimension_numbers<[1], [0], [0], [1], [0, 0, 1, 1], [], []>} : vector<8x8xf32>, vector<8x32xf32>, vector<8x32xf32> -> vector<8x32xf32>
    %399 = arith.addf %379, %398 : vector<8x32xf32>
    %400 = vector.extract_strided_slice %339 {offsets = [0, 3, 0], sizes = [1, 1, 8], strides = [1, 1, 1]} : vector<4x8x8xf32> to vector<1x1x8xf32>
    %401 = vector.shape_cast %400 : vector<1x1x8xf32> to vector<1x8xf32>
    %402 = vector.extract_strided_slice %339 {offsets = [0, 7, 0], sizes = [1, 1, 8], strides = [1, 1, 1]} : vector<4x8x8xf32> to vector<1x1x8xf32>
    %403 = vector.shape_cast %402 : vector<1x1x8xf32> to vector<1x8xf32>
    %404 = vector.extract_strided_slice %339 {offsets = [1, 3, 0], sizes = [1, 1, 8], strides = [1, 1, 1]} : vector<4x8x8xf32> to vector<1x1x8xf32>
    %405 = vector.shape_cast %404 : vector<1x1x8xf32> to vector<1x8xf32>
    %406 = vector.extract_strided_slice %339 {offsets = [1, 7, 0], sizes = [1, 1, 8], strides = [1, 1, 1]} : vector<4x8x8xf32> to vector<1x1x8xf32>
    %407 = vector.shape_cast %406 : vector<1x1x8xf32> to vector<1x8xf32>
    %408 = vector.extract_strided_slice %339 {offsets = [2, 3, 0], sizes = [1, 1, 8], strides = [1, 1, 1]} : vector<4x8x8xf32> to vector<1x1x8xf32>
    %409 = vector.shape_cast %408 : vector<1x1x8xf32> to vector<1x8xf32>
    %410 = vector.extract_strided_slice %339 {offsets = [2, 7, 0], sizes = [1, 1, 8], strides = [1, 1, 1]} : vector<4x8x8xf32> to vector<1x1x8xf32>
    %411 = vector.shape_cast %410 : vector<1x1x8xf32> to vector<1x8xf32>
    %412 = vector.extract_strided_slice %339 {offsets = [3, 3, 0], sizes = [1, 1, 8], strides = [1, 1, 1]} : vector<4x8x8xf32> to vector<1x1x8xf32>
    %413 = vector.shape_cast %412 : vector<1x1x8xf32> to vector<1x8xf32>
    %414 = vector.extract_strided_slice %339 {offsets = [3, 7, 0], sizes = [1, 1, 8], strides = [1, 1, 1]} : vector<4x8x8xf32> to vector<1x1x8xf32>
    %415 = vector.shape_cast %414 : vector<1x1x8xf32> to vector<1x8xf32>
    %416 = tpu.concatenate %401, %403, %405, %407, %409, %411, %413, %415 in 0 : vector<1x8xf32>, vector<1x8xf32>, vector<1x8xf32>, vector<1x8xf32>, vector<1x8xf32>, vector<1x8xf32>, vector<1x8xf32>, vector<1x8xf32> -> vector<8x8xf32>
    %417 = vector.extract_strided_slice %340 {offsets = [24, 0], sizes = [8, 32], strides = [1, 1]} : vector<32x32xf32> to vector<8x32xf32>
    %cst_65 = arith.constant dense<0.000000e+00> : vector<8x32xf32>
    %418 = tpu.matmul %416, %417, %cst_65 {dimension_numbers = #tpu.dot_dimension_numbers<[1], [0], [0], [1], [0, 0, 1, 1], [], []>} : vector<8x8xf32>, vector<8x32xf32>, vector<8x32xf32> -> vector<8x32xf32>
    %419 = arith.addf %399, %418 : vector<8x32xf32>
    %c0_66 = arith.constant 0 : index
    %c0_67 = arith.constant 0 : index
    %420 = vector.load %arg14[%c0_66, %c0_67] : memref<1x32xf32, #tpu.memory_space<vmem>>, vector<1x32xf32>
    %421 = vector.broadcast %420 : vector<1x32xf32> to vector<8x32xf32>
    %422 = arith.addf %419, %421 : vector<8x32xf32>
    %423 = arith.addf %179, %422 : vector<8x32xf32>
    %c0_68 = arith.constant 0 : index
    %c0_69 = arith.constant 0 : index
    %424 = vector.load %arg15[%c0_68, %c0_69] : memref<1x32xf32, #tpu.memory_space<vmem>>, vector<1x32xf32>
    %c0_70 = arith.constant 0 : index
    %c0_71 = arith.constant 0 : index
    %425 = vector.load %arg16[%c0_70, %c0_71] : memref<1x32xf32, #tpu.memory_space<vmem>>, vector<1x32xf32>
    %cst_72 = arith.constant dense<0.000000e+00> : vector<8xf32>
    %426 = vector.multi_reduction <add>, %423, %cst_72 [1] : vector<8x32xf32> to vector<8xf32>
    %427 = vector.shape_cast %426 : vector<8xf32> to vector<8x1xf32>
    %cst_73 = arith.constant 3.200000e+01 : f32
    %428 = vector.broadcast %cst_73 : f32 to vector<8x1xf32>
    %429 = arith.divf %427, %428 : vector<8x1xf32>
    %430 = vector.broadcast %429 : vector<8x1xf32> to vector<8x32xf32>
    %431 = arith.subf %423, %430 : vector<8x32xf32>
    %432 = arith.mulf %431, %431 : vector<8x32xf32>
    %cst_74 = arith.constant dense<0.000000e+00> : vector<8xf32>
    %433 = vector.multi_reduction <add>, %432, %cst_74 [1] : vector<8x32xf32> to vector<8xf32>
    %434 = vector.shape_cast %433 : vector<8xf32> to vector<8x1xf32>
    %cst_75 = arith.constant 3.200000e+01 : f32
    %435 = vector.broadcast %cst_75 : f32 to vector<8x1xf32>
    %436 = arith.divf %434, %435 : vector<8x1xf32>
    %cst_76 = arith.constant 9.99999974E-6 : f32
    %437 = vector.broadcast %cst_76 : f32 to vector<8x1xf32>
    %438 = arith.addf %436, %437 : vector<8x1xf32>
    %439 = math.rsqrt %438 : vector<8x1xf32>
    %440 = vector.broadcast %439 : vector<8x1xf32> to vector<8x32xf32>
    %441 = arith.mulf %431, %440 : vector<8x32xf32>
    %442 = vector.broadcast %424 : vector<1x32xf32> to vector<8x32xf32>
    %443 = arith.mulf %441, %442 : vector<8x32xf32>
    %444 = vector.broadcast %425 : vector<1x32xf32> to vector<8x32xf32>
    %445 = arith.addf %443, %444 : vector<8x32xf32>
    %c0_77 = arith.constant 0 : index
    %c0_78 = arith.constant 0 : index
    %446 = vector.load %arg17[%c0_77, %c0_78] : memref<32x64xf32, #tpu.memory_space<vmem>>, vector<32x64xf32>
    %cst_79 = arith.constant dense<0.000000e+00> : vector<8x64xf32>
    %447 = tpu.matmul %445, %446, %cst_79 {dimension_numbers = #tpu.dot_dimension_numbers<[1], [0], [0], [1], [0, 0, 1, 1], [], []>} : vector<8x32xf32>, vector<32x64xf32>, vector<8x64xf32> -> vector<8x64xf32>
    %c0_80 = arith.constant 0 : index
    %c0_81 = arith.constant 0 : index
    %448 = vector.load %arg18[%c0_80, %c0_81] : memref<1x64xf32, #tpu.memory_space<vmem>>, vector<1x64xf32>
    %449 = vector.broadcast %448 : vector<1x64xf32> to vector<8x64xf32>
    %450 = arith.addf %447, %449 : vector<8x64xf32>
    %cst_82 = arith.constant 0.000000e+00 : f32
    %451 = vector.broadcast %cst_82 : f32 to vector<8x64xf32>
    %452 = arith.maximumf %450, %451 : vector<8x64xf32>
    %c0_83 = arith.constant 0 : index
    %c0_84 = arith.constant 0 : index
    %453 = vector.load %arg19[%c0_83, %c0_84] : memref<64x32xf32, #tpu.memory_space<vmem>>, vector<64x32xf32>
    %cst_85 = arith.constant dense<0.000000e+00> : vector<8x32xf32>
    %454 = tpu.matmul %452, %453, %cst_85 {dimension_numbers = #tpu.dot_dimension_numbers<[1], [0], [0], [1], [0, 0, 1, 1], [], []>} : vector<8x64xf32>, vector<64x32xf32>, vector<8x32xf32> -> vector<8x32xf32>
    %c0_86 = arith.constant 0 : index
    %c0_87 = arith.constant 0 : index
    %455 = vector.load %arg20[%c0_86, %c0_87] : memref<1x32xf32, #tpu.memory_space<vmem>>, vector<1x32xf32>
    %456 = vector.broadcast %455 : vector<1x32xf32> to vector<8x32xf32>
    %457 = arith.addf %454, %456 : vector<8x32xf32>
    %458 = arith.addf %445, %457 : vector<8x32xf32>
    %c0_88 = arith.constant 0 : index
    %c0_89 = arith.constant 0 : index
    %459 = vector.load %arg21[%c0_88, %c0_89] : memref<1x32xf32, #tpu.memory_space<vmem>>, vector<1x32xf32>
    %c0_90 = arith.constant 0 : index
    %c0_91 = arith.constant 0 : index
    %460 = vector.load %arg22[%c0_90, %c0_91] : memref<1x32xf32, #tpu.memory_space<vmem>>, vector<1x32xf32>
    %cst_92 = arith.constant dense<0.000000e+00> : vector<8xf32>
    %461 = vector.multi_reduction <add>, %458, %cst_92 [1] : vector<8x32xf32> to vector<8xf32>
    %462 = vector.shape_cast %461 : vector<8xf32> to vector<8x1xf32>
    %cst_93 = arith.constant 3.200000e+01 : f32
    %463 = vector.broadcast %cst_93 : f32 to vector<8x1xf32>
    %464 = arith.divf %462, %463 : vector<8x1xf32>
    %465 = vector.broadcast %464 : vector<8x1xf32> to vector<8x32xf32>
    %466 = arith.subf %458, %465 : vector<8x32xf32>
    %467 = arith.mulf %466, %466 : vector<8x32xf32>
    %cst_94 = arith.constant dense<0.000000e+00> : vector<8xf32>
    %468 = vector.multi_reduction <add>, %467, %cst_94 [1] : vector<8x32xf32> to vector<8xf32>
    %469 = vector.shape_cast %468 : vector<8xf32> to vector<8x1xf32>
    %cst_95 = arith.constant 3.200000e+01 : f32
    %470 = vector.broadcast %cst_95 : f32 to vector<8x1xf32>
    %471 = arith.divf %469, %470 : vector<8x1xf32>
    %cst_96 = arith.constant 9.99999974E-6 : f32
    %472 = vector.broadcast %cst_96 : f32 to vector<8x1xf32>
    %473 = arith.addf %471, %472 : vector<8x1xf32>
    %474 = math.rsqrt %473 : vector<8x1xf32>
    %475 = vector.broadcast %474 : vector<8x1xf32> to vector<8x32xf32>
    %476 = arith.mulf %466, %475 : vector<8x32xf32>
    %477 = vector.broadcast %459 : vector<1x32xf32> to vector<8x32xf32>
    %478 = arith.mulf %476, %477 : vector<8x32xf32>
    %479 = vector.broadcast %460 : vector<1x32xf32> to vector<8x32xf32>
    %480 = arith.addf %478, %479 : vector<8x32xf32>
    %c0_97 = arith.constant 0 : index
    %c0_98 = arith.constant 0 : index
    %c0_99 = arith.constant 0 : index
    %481 = vector.load %arg23[%c0_97, %c0_98, %c0_99] : memref<1x8x32xf32, #tpu.memory_space<vmem>>, vector<1x8x32xf32>
    %482 = vector.shape_cast %481 : vector<1x8x32xf32> to vector<8x32xf32>
    %483 = vector.shape_cast %480 : vector<8x32xf32> to vector<1x8x32xf32>
    tpu.vector_store %arg23[%c0_97, %c0_98, %c0_99], %483 {strides = array<i32>} : memref<1x8x32xf32, #tpu.memory_space<vmem>>, vector<1x8x32xf32>,
    return
  }
  func.func @transform_0(%arg0: i32) -> (i32, i32, i32) {
    %c0_i32 = arith.constant 0 : i32
    %c0_i32_0 = arith.constant 0 : i32
    %c0_i32_1 = arith.constant 0 : i32
    return %arg0, %c0_i32, %c0_i32_0 : i32, i32, i32
  }
  func.func @transform_1(%arg0: i32) -> (i32, i32, i32) {
    %c0_i32 = arith.constant 0 : i32
    %c0_i32_0 = arith.constant 0 : i32
    %c0_i32_1 = arith.constant 0 : i32
    return %arg0, %c0_i32, %c0_i32_0 : i32, i32, i32
  }
  func.func @transform_2(%arg0: i32) -> (i32, i32, i32) {
    %c0_i32 = arith.constant 0 : i32
    %c0_i32_0 = arith.constant 0 : i32
    %c0_i32_1 = arith.constant 0 : i32
    return %arg0, %c0_i32, %c0_i32_0 : i32, i32, i32
  }
  func.func @transform_3(%arg0: i32) -> (i32, i32) {
    %c0_i32 = arith.constant 0 : i32
    %c0_i32_0 = arith.constant 0 : i32
    %c0_i32_1 = arith.constant 0 : i32
    return %c0_i32, %c0_i32_0 : i32, i32
  }
  func.func @transform_4(%arg0: i32) -> (i32, i32) {
    %c0_i32 = arith.constant 0 : i32
    %c0_i32_0 = arith.constant 0 : i32
    %c0_i32_1 = arith.constant 0 : i32
    return %c0_i32, %c0_i32_0 : i32, i32
  }
  func.func @transform_5(%arg0: i32) -> (i32, i32) {
    %c0_i32 = arith.constant 0 : i32
    %c0_i32_0 = arith.constant 0 : i32
    %c0_i32_1 = arith.constant 0 : i32
    return %c0_i32, %c0_i32_0 : i32, i32
  }
  func.func @transform_6(%arg0: i32) -> (i32, i32) {
    %c0_i32 = arith.constant 0 : i32
    %c0_i32_0 = arith.constant 0 : i32
    %c0_i32_1 = arith.constant 0 : i32
    return %c0_i32, %c0_i32_0 : i32, i32
  }
  func.func @transform_7(%arg0: i32) -> (i32, i32) {
    %c0_i32 = arith.constant 0 : i32
    %c0_i32_0 = arith.constant 0 : i32
    %c0_i32_1 = arith.constant 0 : i32
    return %c0_i32, %c0_i32_0 : i32, i32
  }
  func.func @transform_8(%arg0: i32) -> (i32, i32) {
    %c0_i32 = arith.constant 0 : i32
    %c0_i32_0 = arith.constant 0 : i32
    %c0_i32_1 = arith.constant 0 : i32
    return %c0_i32, %c0_i32_0 : i32, i32
  }
  func.func @transform_9(%arg0: i32) -> (i32, i32) {
    %c0_i32 = arith.constant 0 : i32
    %c0_i32_0 = arith.constant 0 : i32
    %c0_i32_1 = arith.constant 0 : i32
    return %c0_i32, %c0_i32_0 : i32, i32
  }
  func.func @transform_10(%arg0: i32) -> (i32, i32) {
    %c0_i32 = arith.constant 0 : i32
    %c0_i32_0 = arith.constant 0 : i32
    %c0_i32_1 = arith.constant 0 : i32
    return %c0_i32, %c0_i32_0 : i32, i32
  }
  func.func @transform_11(%arg0: i32) -> (i32, i32) {
    %c0_i32 = arith.constant 0 : i32
    %c0_i32_0 = arith.constant 0 : i32
    %c0_i32_1 = arith.constant 0 : i32
    return %c0_i32, %c0_i32_0 : i32, i32
  }
  func.func @transform_12(%arg0: i32) -> (i32, i32) {
    %c0_i32 = arith.constant 0 : i32
    %c0_i32_0 = arith.constant 0 : i32
    %c0_i32_1 = arith.constant 0 : i32
    return %c0_i32, %c0_i32_0 : i32, i32
  }
  func.func @transform_13(%arg0: i32) -> (i32, i32) {
    %c0_i32 = arith.constant 0 : i32
    %c0_i32_0 = arith.constant 0 : i32
    %c0_i32_1 = arith.constant 0 : i32
    return %c0_i32, %c0_i32_0 : i32, i32
  }
  func.func @transform_14(%arg0: i32) -> (i32, i32) {
    %c0_i32 = arith.constant 0 : i32
    %c0_i32_0 = arith.constant 0 : i32
    %c0_i32_1 = arith.constant 0 : i32
    return %c0_i32, %c0_i32_0 : i32, i32
  }
  func.func @transform_15(%arg0: i32) -> (i32, i32) {
    %c0_i32 = arith.constant 0 : i32
    %c0_i32_0 = arith.constant 0 : i32
    %c0_i32_1 = arith.constant 0 : i32
    return %c0_i32, %c0_i32_0 : i32, i32
  }
  func.func @transform_16(%arg0: i32) -> (i32, i32) {
    %c0_i32 = arith.constant 0 : i32
    %c0_i32_0 = arith.constant 0 : i32
    %c0_i32_1 = arith.constant 0 : i32
    return %c0_i32, %c0_i32_0 : i32, i32
  }
  func.func @transform_17(%arg0: i32) -> (i32, i32) {
    %c0_i32 = arith.constant 0 : i32
    %c0_i32_0 = arith.constant 0 : i32
    %c0_i32_1 = arith.constant 0 : i32
    return %c0_i32, %c0_i32_0 : i32, i32
  }
  func.func @transform_18(%arg0: i32) -> (i32, i32) {
    %c0_i32 = arith.constant 0 : i32
    %c0_i32_0 = arith.constant 0 : i32
    %c0_i32_1 = arith.constant 0 : i32
    return %c0_i32, %c0_i32_0 : i32, i32
  }
  func.func @transform_19(%arg0: i32) -> (i32, i32) {
    %c0_i32 = arith.constant 0 : i32
    %c0_i32_0 = arith.constant 0 : i32
    %c0_i32_1 = arith.constant 0 : i32
    return %c0_i32, %c0_i32_0 : i32, i32
  }
  func.func @transform_20(%arg0: i32) -> (i32, i32) {
    %c0_i32 = arith.constant 0 : i32
    %c0_i32_0 = arith.constant 0 : i32
    %c0_i32_1 = arith.constant 0 : i32
    return %c0_i32, %c0_i32_0 : i32, i32
  }
  func.func @transform_21(%arg0: i32) -> (i32, i32) {
    %c0_i32 = arith.constant 0 : i32
    %c0_i32_0 = arith.constant 0 : i32
    %c0_i32_1 = arith.constant 0 : i32
    return %c0_i32, %c0_i32_0 : i32, i32
  }
  func.func @transform_22(%arg0: i32) -> (i32, i32, i32) {
    %c0_i32 = arith.constant 0 : i32
    %c0_i32_0 = arith.constant 0 : i32
    %c0_i32_1 = arith.constant 0 : i32
    return %arg0, %c0_i32, %c0_i32_0 : i32, i32, i32
  }
}

</mosaic_0001>

<llo_original>
// kernel: tpu_custom_call.1
$region0: #{tpu_custom_call.1}
  #allocation0 [shape = 'u32[]', space=smem, size = 0x4, offset = 0x4, fixed_abs, tag = 'smem constant byte address 0x4 - core index']
  #allocation1 [shape = 'u32[144,128]{1,0:T(1,128)}', space=vmem, size = 0x12000, scoped, tag = 'internal scratch']
  %s0 = inlined_call_operand.hbm [shape: f32[2,8,32], index: 0, kind: input, shape index: {}]
  %s1 = inlined_call_operand.hbm [shape: f32[2,8,32], index: 1, kind: input, shape index: {}]
  %s2 = inlined_call_operand.hbm [shape: f32[2,8,32], index: 2, kind: input, shape index: {}]
  %s3 = inlined_call_operand.hbm [shape: f32[8,8], index: 3, kind: input, shape index: {}]
  %s4 = inlined_call_operand.vmem [shape: f32[32,32], index: 4, kind: input, shape index: {}]
  %s5 = inlined_call_operand.hbm [shape: f32[1,32], index: 5, kind: input, shape index: {}]
  %s6 = inlined_call_operand.vmem [shape: f32[32,32], index: 6, kind: input, shape index: {}]
  %s7 = inlined_call_operand.hbm [shape: f32[1,32], index: 7, kind: input, shape index: {}]
  %s8 = inlined_call_operand.hbm [shape: f32[1,32], index: 8, kind: input, shape index: {}]
  %s9 = inlined_call_operand.hbm [shape: f32[1,32], index: 9, kind: input, shape index: {}]
  %s10 = inlined_call_operand.vmem [shape: f32[32,32], index: 10, kind: input, shape index: {}]
  %s11 = inlined_call_operand.hbm [shape: f32[1,32], index: 11, kind: input, shape index: {}]
  %s12 = inlined_call_operand.vmem [shape: f32[32,32], index: 12, kind: input, shape index: {}]
  %s13 = inlined_call_operand.hbm [shape: f32[1,32], index: 13, kind: input, shape index: {}]
  %s14 = inlined_call_operand.hbm [shape: f32[1,32], index: 14, kind: input, shape index: {}]
  %s15 = inlined_call_operand.hbm [shape: f32[1,32], index: 15, kind: input, shape index: {}]
  %s16 = inlined_call_operand.hbm [shape: f32[32,64], index: 16, kind: input, shape index: {}]
  %s17 = inlined_call_operand.hbm [shape: f32[1,64], index: 17, kind: input, shape index: {}]
  %s18 = inlined_call_operand.vmem [shape: f32[64,32], index: 18, kind: input, shape index: {}]
  %s19 = inlined_call_operand.vmem [shape: f32[1,32], index: 19, kind: input, shape index: {}]
  %s20 = inlined_call_operand.vmem [shape: f32[1,32], index: 20, kind: input, shape index: {}]
  %s21 = inlined_call_operand.vmem [shape: f32[1,32], index: 21, kind: input, shape index: {}]
  %s22 = inlined_call_operand.hbm [shape: f32[2,8,32], index: 22, kind: output, shape index: {}]
  %s23 = sld [smem:[#allocation0]]
  $region177: #{tpu_custom_call.1} parent=0
    _
  %s25 = ssub.s32 1, %s23
  %s26 = scalar_select 0, %s25, %s23
  $region1: #{tpu_custom_call.1} parent=0
    #allocation2 [shape = 'u8[8192]{0}', space=vmem, size = 0x2000, scoped, tag = 'input window, operand 0']
    #allocation3 [shape = 's32[2]{0}', space=sflag, size = 0x8, scoped, tag = 'scoped memory for tpu_custom_call.1']
    #allocation4 [shape = 's32[2]{0}', space=sflag, size = 0x8, scoped, tag = 'scoped memory for tpu_custom_call.1']
    #allocation5 [shape = 'u8[8192]{0}', space=vmem, size = 0x2000, scoped, tag = 'input window, operand 1']
    #allocation6 [shape = 's32[2]{0}', space=sflag, size = 0x8, scoped, tag = 'scoped memory for tpu_custom_call.1']
    #allocation7 [shape = 'u8[8192]{0}', space=vmem, size = 0x2000, scoped, tag = 'input window, operand 2']
    #allocation8 [shape = 'u8[4096]{0}', space=vmem, size = 0x1000, scoped, tag = 'input window, operand 3, single buffered']
    #allocation9 [shape = 's32[1]{0}', space=sflag, size = 0x4, scoped, tag = 'scoped memory for tpu_custom_call.1']
    #allocation10 [shape = 'u8[512]{0}', space=vmem, size = 0x400, scoped, tag = 'input window, operand 5, single buffered']
    #allocation11 [shape = 'u8[512]{0}', space=vmem, size = 0x400, scoped, tag = 'input window, operand 7, single buffered']
    #allocation12 [shape = 's32[1]{0}', space=sflag, size = 0x4, scoped, tag = 'scoped memory for tpu_custom_call.1']
    #allocation13 [shape = 'u8[512]{0}', space=vmem, size = 0x400, scoped, tag = 'input window, operand 8, single buffered']
    #allocation14 [shape = 'u8[512]{0}', space=vmem, size = 0x400, scoped, tag = 'input window, operand 9, single buffered']
    #allocation15 [shape = 's32[1]{0}', space=sflag, size = 0x4, scoped, tag = 'scoped memory for tpu_custom_call.1']
    #allocation16 [shape = 'u8[512]{0}', space=vmem, size = 0x400, scoped, tag = 'input window, operand 11, single buffered']
    #allocation17 [shape = 'u8[512]{0}', space=vmem, size = 0x400, scoped, tag = 'input window, operand 13, single buffered']
    #allocation18 [shape = 's32[1]{0}', space=sflag, size = 0x4, scoped, tag = 'scoped memory for tpu_custom_call.1']
    #allocation19 [shape = 'u8[512]{0}', space=vmem, size = 0x400, scoped, tag = 'input window, operand 14, single buffered']
    #allocation20 [shape = 'u8[512]{0}', space=vmem, size = 0x400, scoped, tag = 'input window, operand 15, single buffered']
    #allocation21 [shape = 's32[1]{0}', space=sflag, size = 0x4, scoped, tag = 'scoped memory for tpu_custom_call.1']
    #allocation22 [shape = 'u8[16384]{0}', space=vmem, size = 0x4000, scoped, tag = 'input window, operand 16, single buffered']
    #allocation23 [shape = 'u8[512]{0}', space=vmem, size = 0x400, scoped, tag = 'input window, operand 17, single buffered']
    #allocation24 [shape = 's32[1]{0}', space=sflag, size = 0x4, scoped, tag = 'scoped memory for tpu_custom_call.1']
    #allocation25 [shape = 'u8[8192]{0}', space=vmem, size = 0x2000, scoped, tag = 'output window, operand 0']
    %27 = vsyncpa [#allocation3], 0
    %s28 = scalar_lea.sflag [#allocation3], 1
    %29 = vsyncpa %s28, 0
    %30 = vsyncpa [#allocation6], 0
    %s31 = scalar_lea.sflag [#allocation6], 1
    %32 = vsyncpa %s31, 0
    %33 = vsyncpa [#allocation9], 0
    %34 = vsyncpa [#allocation12], 0
    %35 = vsyncpa [#allocation15], 0
    %36 = vsyncpa [#allocation18], 0
    %37 = vsyncpa [#allocation21], 0
    %38 = vsyncpa [#allocation24], 0
    %39 = vsyncpa [#allocation4], 0
    %s40 = scalar_lea.sflag [#allocation4], 1
    %41 = vsyncpa %s40, 0
    loop: start=0, step=1, limit=4
    $region2: #{tpu_custom_call.1} parent=1 // loop_pre_header
      _
    $region3: #{tpu_custom_call.1} parent=1 // loop_header
      %s43 = sphi 0, %s47
      %p44 = scmp.ge.s32.totalorder %s43, 4
      %s53 = sphi 0, %s55
      %s56 = sphi 0, %s53
      %s57 = sphi 0, %s56
      %s73 = sphi 0, %s57
      %s79 = sphi 0, %s81
      %s82 = sphi 0, %s79
      %s83 = sphi 0, %s82
      %s99 = sphi 0, %s83
      %s105 = sphi 0, %s107
      %s108 = sphi 0, %s105
      %s109 = sphi 0, %s108
      %s125 = sphi 0, %s109
      %s129 = sphi 0, %s129
      %s131 = sphi 0, %s129
      %s132 = sphi 0, %s131
      %s146 = sphi 0, %s132
      %s150 = sphi 0, %s150
      %s152 = sphi 0, %s150
      %s153 = sphi 0, %s152
      %s167 = sphi 0, %s153
      %s171 = sphi 0, %s171
      %s173 = sphi 0, %s171
      %s174 = sphi 0, %s173
      %s188 = sphi 0, %s174
      %s192 = sphi 0, %s192
      %s194 = sphi 0, %s192
      %s195 = sphi 0, %s194
      %s209 = sphi 0, %s195
      %s213 = sphi 0, %s213
      %s215 = sphi 0, %s213
      %s216 = sphi 0, %s215
      %s230 = sphi 0, %s216
      %s234 = sphi 0, %s234
      %s236 = sphi 0, %s234
      %s237 = sphi 0, %s236
      %s251 = sphi 0, %s237
      %s255 = sphi 0, %s255
      %s257 = sphi 0, %s255
      %s258 = sphi 0, %s257
      %s272 = sphi 0, %s258
      %s276 = sphi 0, %s276
      %s278 = sphi 0, %s276
      %s279 = sphi 0, %s278
      %s293 = sphi 0, %s279
      %s297 = sphi 0, %s297
      %s299 = sphi 0, %s297
      %s300 = sphi 0, %s299
      %s314 = sphi 0, %s300
      %s318 = sphi 0, %s318
      %s320 = sphi 0, %s318
      %s321 = sphi 0, %s320
      %s335 = sphi 0, %s321
      %s339 = sphi 0, %s339
      %s341 = sphi 0, %s339
      %s342 = sphi 0, %s341
      %s356 = sphi 0, %s342
      %s360 = sphi 0, %s360
      %s362 = sphi 0, %s360
      %s363 = sphi 0, %s362
      %s377 = sphi 0, %s363
      %s381 = sphi 0, %s381
      %s383 = sphi 0, %s381
      %s384 = sphi 0, %s383
      %s398 = sphi 0, %s384
      %s402 = sphi 0, %s402
      %s404 = sphi 0, %s402
      %s405 = sphi 0, %s404
      %s419 = sphi 0, %s405
      %s423 = sphi 0, %s423
      %s425 = sphi 0, %s423
      %s426 = sphi 0, %s425
      %s440 = sphi 0, %s426
      %s444 = sphi 0, %s444
      %s446 = sphi 0, %s444
      %s447 = sphi 0, %s446
      %s461 = sphi 0, %s447
      %s465 = sphi 0, %s465
      %s467 = sphi 0, %s465
      %s468 = sphi 0, %s467
      %s482 = sphi 0, %s468
      %s486 = sphi 0, %s486
      %s488 = sphi 0, %s486
      %s489 = sphi 0, %s488
      %s503 = sphi 0, %s489
      %s507 = sphi 0, %s507
      %s509 = sphi 0, %s507
      %s510 = sphi 0, %s509
      %s524 = sphi 0, %s510
      %s530 = sphi 0, %s532
      %s533 = sphi 0, %s530
      %s534 = sphi 0, %s533
      %s550 = sphi 0, %s534
    $region4: #{tpu_custom_call.1} parent=1 // loop_header_branch
      %46 = sbr.rel (%p44) target = $region8
    $region5: #{tpu_custom_call.1} parent=1 // loop_body
      %s48 = ssub.s32 %s43, 1
      %s49 = ssub.s32 %s43, 2
      %s50 = sadd.s32 %s43, 1
      %s51 = ssub.s32 %s43, %s50
      %p52 = scmp.eq.s32.totalorder %s51, 0
      %s54 = sadd.s32 %s53, 1
      %s55 = scalar_select %p52, %s53, %s54
      %p58 = pneg %p52
      %p59 = scmp.eq.s32.totalorder %s43, 1
      %p60 = por %p58, %p59
      %p61 = scmp.ne.s32.totalorder %s53, %s56
      %p62 = scmp.eq.s32.totalorder %s43, 0
      %p63 = por %p61, %p62
      %p64 = scmp.ne.s32.totalorder %s53, %s56
      %p65 = scmp.eq.s32.totalorder %s48, 1
      %p66 = por %p64, %p65
      %p67 = scmp.ne.s32.totalorder %s56, %s57
      %p68 = scmp.eq.s32.totalorder %s48, 0
      %p69 = por %p67, %p68
      %p70 = scmp.ne.s32.totalorder %s56, %s57
      %p71 = scmp.eq.s32.totalorder %s49, 1
      %p72 = por %p70, %p71
      %p74 = scmp.ne.s32.totalorder %s57, %s73
      %p75 = scmp.eq.s32.totalorder %s49, 0
      %p76 = por %p74, %p75
      %s77 = ssub.s32 %s43, %s50
      %p78 = scmp.eq.s32.totalorder %s77, 0
      %s80 = sadd.s32 %s79, 1
      %s81 = scalar_select %p78, %s79, %s80
      %p84 = pneg %p78
      %p85 = scmp.eq.s32.totalorder %s43, 1
      %p86 = por %p84, %p85
      %p87 = scmp.ne.s32.totalorder %s79, %s82
      %p88 = scmp.eq.s32.totalorder %s43, 0
      %p89 = por %p87, %p88
      %p90 = scmp.ne.s32.totalorder %s79, %s82
      %p91 = scmp.eq.s32.totalorder %s48, 1
      %p92 = por %p90, %p91
      %p93 = scmp.ne.s32.totalorder %s82, %s83
      %p94 = scmp.eq.s32.totalorder %s48, 0
      %p95 = por %p93, %p94
      %p96 = scmp.ne.s32.totalorder %s82, %s83
      %p97 = scmp.eq.s32.totalorder %s49, 1
      %p98 = por %p96, %p97
      %p100 = scmp.ne.s32.totalorder %s83, %s99
      %p101 = scmp.eq.s32.totalorder %s49, 0
      %p102 = por %p100, %p101
      %s103 = ssub.s32 %s43, %s50
      %p104 = scmp.eq.s32.totalorder %s103, 0
      %s106 = sadd.s32 %s105, 1
      %s107 = scalar_select %p104, %s105, %s106
      %p110 = pneg %p104
      %p111 = scmp.eq.s32.totalorder %s43, 1
      %p112 = por %p110, %p111
      %p113 = scmp.ne.s32.totalorder %s105, %s108
      %p114 = scmp.eq.s32.totalorder %s43, 0
      %p115 = por %p113, %p114
      %p116 = scmp.ne.s32.totalorder %s105, %s108
      %p117 = scmp.eq.s32.totalorder %s48, 1
      %p118 = por %p116, %p117
      %p119 = scmp.ne.s32.totalorder %s108, %s109
      %p120 = scmp.eq.s32.totalorder %s48, 0
      %p121 = por %p119, %p120
      %p122 = scmp.ne.s32.totalorder %s108, %s109
      %p123 = scmp.eq.s32.totalorder %s49, 1
      %p124 = por %p122, %p123
      %p126 = scmp.ne.s32.totalorder %s109, %s125
      %p127 = scmp.eq.s32.totalorder %s49, 0
      %p128 = por %p126, %p127
      %s130 = sadd.s32 %s129, 1
      %p133 = scmp.eq.s32.totalorder %s43, 1
      %p134 = scmp.ne.s32.totalorder %s129, %s131
      %p135 = scmp.eq.s32.totalorder %s43, 0
      %p136 = por %p134, %p135
      %p137 = scmp.ne.s32.totalorder %s129, %s131
      %p138 = scmp.eq.s32.totalorder %s48, 1
      %p139 = por %p137, %p138
      %p140 = scmp.ne.s32.totalorder %s131, %s132
      %p141 = scmp.eq.s32.totalorder %s48, 0
      %p142 = por %p140, %p141
      %p143 = scmp.ne.s32.totalorder %s131, %s132
      %p144 = scmp.eq.s32.totalorder %s49, 1
      %p145 = por %p143, %p144
      %p147 = scmp.ne.s32.totalorder %s132, %s146
      %p148 = scmp.eq.s32.totalorder %s49, 0
      %p149 = por %p147, %p148
      %s151 = sadd.s32 %s150, 1
      %p154 = scmp.eq.s32.totalorder %s43, 1
      %p155 = scmp.ne.s32.totalorder %s150, %s152
      %p156 = scmp.eq.s32.totalorder %s43, 0
      %p157 = por %p155, %p156
      %p158 = scmp.ne.s32.totalorder %s150, %s152
      %p159 = scmp.eq.s32.totalorder %s48, 1
      %p160 = por %p158, %p159
      %p161 = scmp.ne.s32.totalorder %s152, %s153
      %p162 = scmp.eq.s32.totalorder %s48, 0
      %p163 = por %p161, %p162
      %p164 = scmp.ne.s32.totalorder %s152, %s153
      %p165 = scmp.eq.s32.totalorder %s49, 1
      %p166 = por %p164, %p165
      %p168 = scmp.ne.s32.totalorder %s153, %s167
      %p169 = scmp.eq.s32.totalorder %s49, 0
      %p170 = por %p168, %p169
      %s172 = sadd.s32 %s171, 1
      %p175 = scmp.eq.s32.totalorder %s43, 1
      %p176 = scmp.ne.s32.totalorder %s171, %s173
      %p177 = scmp.eq.s32.totalorder %s43, 0
      %p178 = por %p176, %p177
      %p179 = scmp.ne.s32.totalorder %s171, %s173
      %p180 = scmp.eq.s32.totalorder %s48, 1
      %p181 = por %p179, %p180
      %p182 = scmp.ne.s32.totalorder %s173, %s174
      %p183 = scmp.eq.s32.totalorder %s48, 0
      %p184 = por %p182, %p183
      %p185 = scmp.ne.s32.totalorder %s173, %s174
      %p186 = scmp.eq.s32.totalorder %s49, 1
      %p187 = por %p185, %p186
      %p189 = scmp.ne.s32.totalorder %s174, %s188
      %p190 = scmp.eq.s32.totalorder %s49, 0
      %p191 = por %p189, %p190
      %s193 = sadd.s32 %s192, 1
      %p196 = scmp.eq.s32.totalorder %s43, 1
      %p197 = scmp.ne.s32.totalorder %s192, %s194
      %p198 = scmp.eq.s32.totalorder %s43, 0
      %p199 = por %p197, %p198
      %p200 = scmp.ne.s32.totalorder %s192, %s194
      %p201 = scmp.eq.s32.totalorder %s48, 1
      %p202 = por %p200, %p201
      %p203 = scmp.ne.s32.totalorder %s194, %s195
      %p204 = scmp.eq.s32.totalorder %s48, 0
      %p205 = por %p203, %p204
      %p206 = scmp.ne.s32.totalorder %s194, %s195
      %p207 = scmp.eq.s32.totalorder %s49, 1
      %p208 = por %p206, %p207
      %p210 = scmp.ne.s32.totalorder %s195, %s209
      %p211 = scmp.eq.s32.totalorder %s49, 0
      %p212 = por %p210, %p211
      %s214 = sadd.s32 %s213, 1
      %p217 = scmp.eq.s32.totalorder %s43, 1
      %p218 = scmp.ne.s32.totalorder %s213, %s215
      %p219 = scmp.eq.s32.totalorder %s43, 0
      %p220 = por %p218, %p219
      %p221 = scmp.ne.s32.totalorder %s213, %s215
      %p222 = scmp.eq.s32.totalorder %s48, 1
      %p223 = por %p221, %p222
      %p224 = scmp.ne.s32.totalorder %s215, %s216
      %p225 = scmp.eq.s32.totalorder %s48, 0
      %p226 = por %p224, %p225
      %p227 = scmp.ne.s32.totalorder %s215, %s216
      %p228 = scmp.eq.s32.totalorder %s49, 1
      %p229 = por %p227, %p228
      %p231 = scmp.ne.s32.totalorder %s216, %s230
      %p232 = scmp.eq.s32.totalorder %s49, 0
      %p233 = por %p231, %p232
      %s235 = sadd.s32 %s234, 1
      %p238 = scmp.eq.s32.totalorder %s43, 1
      %p239 = scmp.ne.s32.totalorder %s234, %s236
      %p240 = scmp.eq.s32.totalorder %s43, 0
      %p241 = por %p239, %p240
      %p242 = scmp.ne.s32.totalorder %s234, %s236
      %p243 = scmp.eq.s32.totalorder %s48, 1
      %p244 = por %p242, %p243
      %p245 = scmp.ne.s32.totalorder %s236, %s237
      %p246 = scmp.eq.s32.totalorder %s48, 0
      %p247 = por %p245, %p246
      %p248 = scmp.ne.s32.totalorder %s236, %s237
      %p249 = scmp.eq.s32.totalorder %s49, 1
      %p250 = por %p248, %p249
      %p252 = scmp.ne.s32.totalorder %s237, %s251
      %p253 = scmp.eq.s32.totalorder %s49, 0
      %p254 = por %p252, %p253
      %s256 = sadd.s32 %s255, 1
      %p259 = scmp.eq.s32.totalorder %s43, 1
      %p260 = scmp.ne.s32.totalorder %s255, %s257
      %p261 = scmp.eq.s32.totalorder %s43, 0
      %p262 = por %p260, %p261
      %p263 = scmp.ne.s32.totalorder %s255, %s257
      %p264 = scmp.eq.s32.totalorder %s48, 1
      %p265 = por %p263, %p264
      %p266 = scmp.ne.s32.totalorder %s257, %s258
      %p267 = scmp.eq.s32.totalorder %s48, 0
      %p268 = por %p266, %p267
      %p269 = scmp.ne.s32.totalorder %s257, %s258
      %p270 = scmp.eq.s32.totalorder %s49, 1
      %p271 = por %p269, %p270
      %p273 = scmp.ne.s32.totalorder %s258, %s272
      %p274 = scmp.eq.s32.totalorder %s49, 0
      %p275 = por %p273, %p274
      %s277 = sadd.s32 %s276, 1
      %p280 = scmp.eq.s32.totalorder %s43, 1
      %p281 = scmp.ne.s32.totalorder %s276, %s278
      %p282 = scmp.eq.s32.totalorder %s43, 0
      %p283 = por %p281, %p282
      %p284 = scmp.ne.s32.totalorder %s276, %s278
      %p285 = scmp.eq.s32.totalorder %s48, 1
      %p286 = por %p284, %p285
      %p287 = scmp.ne.s32.totalorder %s278, %s279
      %p288 = scmp.eq.s32.totalorder %s48, 0
      %p289 = por %p287, %p288
      %p290 = scmp.ne.s32.totalorder %s278, %s279
      %p291 = scmp.eq.s32.totalorder %s49, 1
      %p292 = por %p290, %p291
      %p294 = scmp.ne.s32.totalorder %s279, %s293
      %p295 = scmp.eq.s32.totalorder %s49, 0
      %p296 = por %p294, %p295
      %s298 = sadd.s32 %s297, 1
      %p301 = scmp.eq.s32.totalorder %s43, 1
      %p302 = scmp.ne.s32.totalorder %s297, %s299
      %p303 = scmp.eq.s32.totalorder %s43, 0
      %p304 = por %p302, %p303
      %p305 = scmp.ne.s32.totalorder %s297, %s299
      %p306 = scmp.eq.s32.totalorder %s48, 1
      %p307 = por %p305, %p306
      %p308 = scmp.ne.s32.totalorder %s299, %s300
      %p309 = scmp.eq.s32.totalorder %s48, 0
      %p310 = por %p308, %p309
      %p311 = scmp.ne.s32.totalorder %s299, %s300
      %p312 = scmp.eq.s32.totalorder %s49, 1
      %p313 = por %p311, %p312
      %p315 = scmp.ne.s32.totalorder %s300, %s314
      %p316 = scmp.eq.s32.totalorder %s49, 0
      %p317 = por %p315, %p316
      %s319 = sadd.s32 %s318, 1
      %p322 = scmp.eq.s32.totalorder %s43, 1
      %p323 = scmp.ne.s32.totalorder %s318, %s320
      %p324 = scmp.eq.s32.totalorder %s43, 0
      %p325 = por %p323, %p324
      %p326 = scmp.ne.s32.totalorder %s318, %s320
      %p327 = scmp.eq.s32.totalorder %s48, 1
      %p328 = por %p326, %p327
      %p329 = scmp.ne.s32.totalorder %s320, %s321
      %p330 = scmp.eq.s32.totalorder %s48, 0
      %p331 = por %p329, %p330
      %p332 = scmp.ne.s32.totalorder %s320, %s321
      %p333 = scmp.eq.s32.totalorder %s49, 1
      %p334 = por %p332, %p333
      %p336 = scmp.ne.s32.totalorder %s321, %s335
      %p337 = scmp.eq.s32.totalorder %s49, 0
      %p338 = por %p336, %p337
      %s340 = sadd.s32 %s339, 1
      %p343 = scmp.eq.s32.totalorder %s43, 1
      %p344 = scmp.ne.s32.totalorder %s339, %s341
      %p345 = scmp.eq.s32.totalorder %s43, 0
      %p346 = por %p344, %p345
      %p347 = scmp.ne.s32.totalorder %s339, %s341
      %p348 = scmp.eq.s32.totalorder %s48, 1
      %p349 = por %p347, %p348
      %p350 = scmp.ne.s32.totalorder %s341, %s342
      %p351 = scmp.eq.s32.totalorder %s48, 0
      %p352 = por %p350, %p351
      %p353 = scmp.ne.s32.totalorder %s341, %s342
      %p354 = scmp.eq.s32.totalorder %s49, 1
      %p355 = por %p353, %p354
      %p357 = scmp.ne.s32.totalorder %s342, %s356
      %p358 = scmp.eq.s32.totalorder %s49, 0
      %p359 = por %p357, %p358
      %s361 = sadd.s32 %s360, 1
      %p364 = scmp.eq.s32.totalorder %s43, 1
      %p365 = scmp.ne.s32.totalorder %s360, %s362
      %p366 = scmp.eq.s32.totalorder %s43, 0
      %p367 = por %p365, %p366
      %p368 = scmp.ne.s32.totalorder %s360, %s362
      %p369 = scmp.eq.s32.totalorder %s48, 1
      %p370 = por %p368, %p369
      %p371 = scmp.ne.s32.totalorder %s362, %s363
      %p372 = scmp.eq.s32.totalorder %s48, 0
      %p373 = por %p371, %p372
      %p374 = scmp.ne.s32.totalorder %s362, %s363
      %p375 = scmp.eq.s32.totalorder %s49, 1
      %p376 = por %p374, %p375
      %p378 = scmp.ne.s32.totalorder %s363, %s377
      %p379 = scmp.eq.s32.totalorder %s49, 0
      %p380 = por %p378, %p379
      %s382 = sadd.s32 %s381, 1
      %p385 = scmp.eq.s32.totalorder %s43, 1
      %p386 = scmp.ne.s32.totalorder %s381, %s383
      %p387 = scmp.eq.s32.totalorder %s43, 0
      %p388 = por %p386, %p387
      %p389 = scmp.ne.s32.totalorder %s381, %s383
      %p390 = scmp.eq.s32.totalorder %s48, 1
      %p391 = por %p389, %p390
      %p392 = scmp.ne.s32.totalorder %s383, %s384
      %p393 = scmp.eq.s32.totalorder %s48, 0
      %p394 = por %p392, %p393
      %p395 = scmp.ne.s32.totalorder %s383, %s384
      %p396 = scmp.eq.s32.totalorder %s49, 1
      %p397 = por %p395, %p396
      %p399 = scmp.ne.s32.totalorder %s384, %s398
      %p400 = scmp.eq.s32.totalorder %s49, 0
      %p401 = por %p399, %p400
      %s403 = sadd.s32 %s402, 1
      %p406 = scmp.eq.s32.totalorder %s43, 1
      %p407 = scmp.ne.s32.totalorder %s402, %s404
      %p408 = scmp.eq.s32.totalorder %s43, 0
      %p409 = por %p407, %p408
      %p410 = scmp.ne.s32.totalorder %s402, %s404
      %p411 = scmp.eq.s32.totalorder %s48, 1
      %p412 = por %p410, %p411
      %p413 = scmp.ne.s32.totalorder %s404, %s405
      %p414 = scmp.eq.s32.totalorder %s48, 0
      %p415 = por %p413, %p414
      %p416 = scmp.ne.s32.totalorder %s404, %s405
      %p417 = scmp.eq.s32.totalorder %s49, 1
      %p418 = por %p416, %p417
      %p420 = scmp.ne.s32.totalorder %s405, %s419
      %p421 = scmp.eq.s32.totalorder %s49, 0
      %p422 = por %p420, %p421
      %s424 = sadd.s32 %s423, 1
      %p427 = scmp.eq.s32.totalorder %s43, 1
      %p428 = scmp.ne.s32.totalorder %s423, %s425
      %p429 = scmp.eq.s32.totalorder %s43, 0
      %p430 = por %p428, %p429
      %p431 = scmp.ne.s32.totalorder %s423, %s425
      %p432 = scmp.eq.s32.totalorder %s48, 1
      %p433 = por %p431, %p432
      %p434 = scmp.ne.s32.totalorder %s425, %s426
      %p435 = scmp.eq.s32.totalorder %s48, 0
      %p436 = por %p434, %p435
      %p437 = scmp.ne.s32.totalorder %s425, %s426
      %p438 = scmp.eq.s32.totalorder %s49, 1
      %p439 = por %p437, %p438
      %p441 = scmp.ne.s32.totalorder %s426, %s440
      %p442 = scmp.eq.s32.totalorder %s49, 0
      %p443 = por %p441, %p442
      %s445 = sadd.s32 %s444, 1
      %p448 = scmp.eq.s32.totalorder %s43, 1
      %p449 = scmp.ne.s32.totalorder %s444, %s446
      %p450 = scmp.eq.s32.totalorder %s43, 0
      %p451 = por %p449, %p450
      %p452 = scmp.ne.s32.totalorder %s444, %s446
      %p453 = scmp.eq.s32.totalorder %s48, 1
      %p454 = por %p452, %p453
      %p455 = scmp.ne.s32.totalorder %s446, %s447
      %p456 = scmp.eq.s32.totalorder %s48, 0
      %p457 = por %p455, %p456
      %p458 = scmp.ne.s32.totalorder %s446, %s447
      %p459 = scmp.eq.s32.totalorder %s49, 1
      %p460 = por %p458, %p459
      %p462 = scmp.ne.s32.totalorder %s447, %s461
      %p463 = scmp.eq.s32.totalorder %s49, 0
      %p464 = por %p462, %p463
      %s466 = sadd.s32 %s465, 1
      %p469 = scmp.eq.s32.totalorder %s43, 1
      %p470 = scmp.ne.s32.totalorder %s465, %s467
      %p471 = scmp.eq.s32.totalorder %s43, 0
      %p472 = por %p470, %p471
      %p473 = scmp.ne.s32.totalorder %s465, %s467
      %p474 = scmp.eq.s32.totalorder %s48, 1
      %p475 = por %p473, %p474
      %p476 = scmp.ne.s32.totalorder %s467, %s468
      %p477 = scmp.eq.s32.totalorder %s48, 0
      %p478 = por %p476, %p477
      %p479 = scmp.ne.s32.totalorder %s467, %s468
      %p480 = scmp.eq.s32.totalorder %s49, 1
      %p481 = por %p479, %p480
      %p483 = scmp.ne.s32.totalorder %s468, %s482
      %p484 = scmp.eq.s32.totalorder %s49, 0
      %p485 = por %p483, %p484
      %s487 = sadd.s32 %s486, 1
      %p490 = scmp.eq.s32.totalorder %s43, 1
      %p491 = scmp.ne.s32.totalorder %s486, %s488
      %p492 = scmp.eq.s32.totalorder %s43, 0
      %p493 = por %p491, %p492
      %p494 = scmp.ne.s32.totalorder %s486, %s488
      %p495 = scmp.eq.s32.totalorder %s48, 1
      %p496 = por %p494, %p495
      %p497 = scmp.ne.s32.totalorder %s488, %s489
      %p498 = scmp.eq.s32.totalorder %s48, 0
      %p499 = por %p497, %p498
      %p500 = scmp.ne.s32.totalorder %s488, %s489
      %p501 = scmp.eq.s32.totalorder %s49, 1
      %p502 = por %p500, %p501
      %p504 = scmp.ne.s32.totalorder %s489, %s503
      %p505 = scmp.eq.s32.totalorder %s49, 0
      %p506 = por %p504, %p505
      %s508 = sadd.s32 %s507, 1
      %p511 = scmp.eq.s32.totalorder %s43, 1
      %p512 = scmp.ne.s32.totalorder %s507, %s509
      %p513 = scmp.eq.s32.totalorder %s43, 0
      %p514 = por %p512, %p513
      %p515 = scmp.ne.s32.totalorder %s507, %s509
      %p516 = scmp.eq.s32.totalorder %s48, 1
      %p517 = por %p515, %p516
      %p518 = scmp.ne.s32.totalorder %s509, %s510
      %p519 = scmp.eq.s32.totalorder %s48, 0
      %p520 = por %p518, %p519
      %p521 = scmp.ne.s32.totalorder %s509, %s510
      %p522 = scmp.eq.s32.totalorder %s49, 1
      %p523 = por %p521, %p522
      %p525 = scmp.ne.s32.totalorder %s510, %s524
      %p526 = scmp.eq.s32.totalorder %s49, 0
      %p527 = por %p525, %p526
      %s528 = ssub.s32 %s43, %s50
      %p529 = scmp.eq.s32.totalorder %s528, 0
      %s531 = sadd.s32 %s530, 1
      %s532 = scalar_select %p529, %s530, %s531
      %p535 = pneg %p529
      %p536 = scmp.eq.s32.totalorder %s43, 1
      %p537 = por %p535, %p536
      %p538 = scmp.ne.s32.totalorder %s530, %s533
      %p539 = scmp.eq.s32.totalorder %s43, 0
      %p540 = por %p538, %p539
      %p541 = scmp.ne.s32.totalorder %s530, %s533
      %p542 = scmp.eq.s32.totalorder %s48, 1
      %p543 = por %p541, %p542
      %p544 = scmp.ne.s32.totalorder %s533, %s534
      %p545 = scmp.eq.s32.totalorder %s48, 0
      %p546 = por %p544, %p545
      %p547 = scmp.ne.s32.totalorder %s533, %s534
      %p548 = scmp.eq.s32.totalorder %s49, 1
      %p549 = por %p547, %p548
      %p551 = scmp.ne.s32.totalorder %s534, %s550
      %p552 = scmp.eq.s32.totalorder %s49, 0
      %p553 = por %p551, %p552
      %p554 = scmp.le.s32.totalorder 1, %s43
      %p555 = scmp.lt.s32.totalorder %s43, 3
      %p556 = pnand %p554, %p555
      %p557 = pneg %p556
      // Predicated region
      $region9: #{tpu_custom_call.1} parent=5 // pred_check
        _
      $region10: #{tpu_custom_call.1} parent=5 // pred_check_branch
        %559 = sbr.rel (%p556) target = $region12
      $region11: #{tpu_custom_call.1} parent=5 // pred_region
        %s560 = ssub.s32 %s43, 1
        // Predicated region
        $region13: #{tpu_custom_call.1} parent=11 // pred_check
          %p561 = pneg %p142
        $region14: #{tpu_custom_call.1} parent=11 // pred_check_branch
          %563 = sbr.rel (%p561) target = $region16
        $region15: #{tpu_custom_call.1} parent=11 // pred_region
          %s565 = ssub.s32 128, 128
          %566 = vsyncadd [#allocation9], %s565
          %s568 = sshll.u32 [#allocation8], 4
          %s569 = int_to_ptr.vmem [resolvable:$true] %s568
          %571 = dma.hbm_to_vmem [thread:$0]  %s3, 128, %s569, [#allocation9]
        $region16: #{tpu_custom_call.1} parent=11 // pred_fallthru
          _
        // Predicated region
        $region17: #{tpu_custom_call.1} parent=11 // pred_check
          %p572 = pneg %p163
        $region18: #{tpu_custom_call.1} parent=11 // pred_check_branch
          %574 = sbr.rel (%p572) target = $region20
        $region19: #{tpu_custom_call.1} parent=11 // pred_region
          _
        $region20: #{tpu_custom_call.1} parent=11 // pred_fallthru
          _
        // Predicated region
        $region21: #{tpu_custom_call.1} parent=11 // pred_check
          %p575 = pneg %p184
        $region22: #{tpu_custom_call.1} parent=11 // pred_check_branch
          %577 = sbr.rel (%p575) target = $region24
        $region23: #{tpu_custom_call.1} parent=11 // pred_region
          %s579 = ssub.s32 16, 16
          %580 = vsyncadd [#allocation9], %s579
          %s582 = sshll.u32 [#allocation10], 4
          %s583 = int_to_ptr.vmem [resolvable:$true] %s582
          %585 = dma.hbm_to_vmem [thread:$0]  %s5, 16, %s583, [#allocation9]
        $region24: #{tpu_custom_call.1} parent=11 // pred_fallthru
          _
        // Predicated region
        $region25: #{tpu_custom_call.1} parent=11 // pred_check
          %p586 = pneg %p205
        $region26: #{tpu_custom_call.1} parent=11 // pred_check_branch
          %588 = sbr.rel (%p586) target = $region28
        $region27: #{tpu_custom_call.1} parent=11 // pred_region
          _
        $region28: #{tpu_custom_call.1} parent=11 // pred_fallthru
          _
        // Predicated region
        $region29: #{tpu_custom_call.1} parent=11 // pred_check
          %p589 = pneg %p226
        $region30: #{tpu_custom_call.1} parent=11 // pred_check_branch
          %591 = sbr.rel (%p589) target = $region32
        $region31: #{tpu_custom_call.1} parent=11 // pred_region
          %s593 = ssub.s32 16, 16
          %594 = vsyncadd [#allocation12], %s593
          %s596 = sshll.u32 [#allocation11], 4
          %s597 = int_to_ptr.vmem [resolvable:$true] %s596
          %599 = dma.hbm_to_vmem [thread:$0]  %s7, 16, %s597, [#allocation12]
        $region32: #{tpu_custom_call.1} parent=11 // pred_fallthru
          _
        // Predicated region
        $region33: #{tpu_custom_call.1} parent=11 // pred_check
          %p600 = pneg %p247
        $region34: #{tpu_custom_call.1} parent=11 // pred_check_branch
          %602 = sbr.rel (%p600) target = $region36
        $region35: #{tpu_custom_call.1} parent=11 // pred_region
          %s604 = ssub.s32 16, 16
          %605 = vsyncadd [#allocation12], %s604
          %s607 = sshll.u32 [#allocation13], 4
          %s608 = int_to_ptr.vmem [resolvable:$true] %s607
          %610 = dma.hbm_to_vmem [thread:$0]  %s8, 16, %s608, [#allocation12]
        $region36: #{tpu_custom_call.1} parent=11 // pred_fallthru
          _
        // Predicated region
        $region37: #{tpu_custom_call.1} parent=11 // pred_check
          %p611 = pneg %p268
        $region38: #{tpu_custom_call.1} parent=11 // pred_check_branch
          %613 = sbr.rel (%p611) target = $region40
        $region39: #{tpu_custom_call.1} parent=11 // pred_region
          %s615 = ssub.s32 16, 16
          %616 = vsyncadd [#allocation15], %s615
          %s618 = sshll.u32 [#allocation14], 4
          %s619 = int_to_ptr.vmem [resolvable:$true] %s618
          %621 = dma.hbm_to_vmem [thread:$0]  %s9, 16, %s619, [#allocation15]
        $region40: #{tpu_custom_call.1} parent=11 // pred_fallthru
          _
        // Predicated region
        $region41: #{tpu_custom_call.1} parent=11 // pred_check
          %p622 = pneg %p289
        $region42: #{tpu_custom_call.1} parent=11 // pred_check_branch
          %624 = sbr.rel (%p622) target = $region44
        $region43: #{tpu_custom_call.1} parent=11 // pred_region
          _
        $region44: #{tpu_custom_call.1} parent=11 // pred_fallthru
          _
        // Predicated region
        $region45: #{tpu_custom_call.1} parent=11 // pred_check
          %p625 = pneg %p310
        $region46: #{tpu_custom_call.1} parent=11 // pred_check_branch
          %627 = sbr.rel (%p625) target = $region48
        $region47: #{tpu_custom_call.1} parent=11 // pred_region
          %s629 = ssub.s32 16, 16
          %630 = vsyncadd [#allocation15], %s629
          %s632 = sshll.u32 [#allocation16], 4
          %s633 = int_to_ptr.vmem [resolvable:$true] %s632
          %635 = dma.hbm_to_vmem [thread:$0]  %s11, 16, %s633, [#allocation15]
        $region48: #{tpu_custom_call.1} parent=11 // pred_fallthru
          _
        // Predicated region
        $region49: #{tpu_custom_call.1} parent=11 // pred_check
          %p636 = pneg %p331
        $region50: #{tpu_custom_call.1} parent=11 // pred_check_branch
          %638 = sbr.rel (%p636) target = $region52
        $region51: #{tpu_custom_call.1} parent=11 // pred_region
          _
        $region52: #{tpu_custom_call.1} parent=11 // pred_fallthru
          _
        // Predicated region
        $region53: #{tpu_custom_call.1} parent=11 // pred_check
          %p639 = pneg %p352
        $region54: #{tpu_custom_call.1} parent=11 // pred_check_branch
          %641 = sbr.rel (%p639) target = $region56
        $region55: #{tpu_custom_call.1} parent=11 // pred_region
          %s643 = ssub.s32 16, 16
          %644 = vsyncadd [#allocation18], %s643
          %s646 = sshll.u32 [#allocation17], 4
          %s647 = int_to_ptr.vmem [resolvable:$true] %s646
          %649 = dma.hbm_to_vmem [thread:$0]  %s13, 16, %s647, [#allocation18]
        $region56: #{tpu_custom_call.1} parent=11 // pred_fallthru
          _
        // Predicated region
        $region57: #{tpu_custom_call.1} parent=11 // pred_check
          %p650 = pneg %p373
        $region58: #{tpu_custom_call.1} parent=11 // pred_check_branch
          %652 = sbr.rel (%p650) target = $region60
        $region59: #{tpu_custom_call.1} parent=11 // pred_region
          %s654 = ssub.s32 16, 16
          %655 = vsyncadd [#allocation18], %s654
          %s657 = sshll.u32 [#allocation19], 4
          %s658 = int_to_ptr.vmem [resolvable:$true] %s657
          %660 = dma.hbm_to_vmem [thread:$0]  %s14, 16, %s658, [#allocation18]
        $region60: #{tpu_custom_call.1} parent=11 // pred_fallthru
          _
        // Predicated region
        $region61: #{tpu_custom_call.1} parent=11 // pred_check
          %p661 = pneg %p394
        $region62: #{tpu_custom_call.1} parent=11 // pred_check_branch
          %663 = sbr.rel (%p661) target = $region64
        $region63: #{tpu_custom_call.1} parent=11 // pred_region
          %s665 = ssub.s32 16, 16
          %666 = vsyncadd [#allocation21], %s665
          %s668 = sshll.u32 [#allocation20], 4
          %s669 = int_to_ptr.vmem [resolvable:$true] %s668
          %671 = dma.hbm_to_vmem [thread:$0]  %s15, 16, %s669, [#allocation21]
        $region64: #{tpu_custom_call.1} parent=11 // pred_fallthru
          _
        // Predicated region
        $region65: #{tpu_custom_call.1} parent=11 // pred_check
          %p672 = pneg %p415
        $region66: #{tpu_custom_call.1} parent=11 // pred_check_branch
          %674 = sbr.rel (%p672) target = $region68
        $region67: #{tpu_custom_call.1} parent=11 // pred_region
          %s676 = ssub.s32 512, 512
          %677 = vsyncadd [#allocation21], %s676
          %s678 = sshll.u32 [#allocation22], 4
          %s679 = int_to_ptr.vmem [resolvable:$true] %s678
          %684 = dma.hbm_to_vmem [thread:$0]  %s16, 512, %s679, [#allocation21], 128, 128, 8
        $region68: #{tpu_custom_call.1} parent=11 // pred_fallthru
          _
        // Predicated region
        $region69: #{tpu_custom_call.1} parent=11 // pred_check
          %p685 = pneg %p436
        $region70: #{tpu_custom_call.1} parent=11 // pred_check_branch
          %687 = sbr.rel (%p685) target = $region72
        $region71: #{tpu_custom_call.1} parent=11 // pred_region
          %s689 = ssub.s32 16, 16
          %690 = vsyncadd [#allocation24], %s689
          %s692 = sshll.u32 [#allocation23], 4
          %s693 = int_to_ptr.vmem [resolvable:$true] %s692
          %695 = dma.hbm_to_vmem [thread:$0]  %s17, 16, %s693, [#allocation24]
        $region72: #{tpu_custom_call.1} parent=11 // pred_fallthru
          _
        // Predicated region
        $region73: #{tpu_custom_call.1} parent=11 // pred_check
          %p696 = pneg %p457
        $region74: #{tpu_custom_call.1} parent=11 // pred_check_branch
          %698 = sbr.rel (%p696) target = $region76
        $region75: #{tpu_custom_call.1} parent=11 // pred_region
          _
        $region76: #{tpu_custom_call.1} parent=11 // pred_fallthru
          _
        // Predicated region
        $region77: #{tpu_custom_call.1} parent=11 // pred_check
          %p699 = pneg %p478
        $region78: #{tpu_custom_call.1} parent=11 // pred_check_branch
          %701 = sbr.rel (%p699) target = $region80
        $region79: #{tpu_custom_call.1} parent=11 // pred_region
          _
        $region80: #{tpu_custom_call.1} parent=11 // pred_fallthru
          _
        // Predicated region
        $region81: #{tpu_custom_call.1} parent=11 // pred_check
          %p702 = pneg %p499
        $region82: #{tpu_custom_call.1} parent=11 // pred_check_branch
          %704 = sbr.rel (%p702) target = $region84
        $region83: #{tpu_custom_call.1} parent=11 // pred_region
          _
        $region84: #{tpu_custom_call.1} parent=11 // pred_fallthru
          _
        // Predicated region
        $region85: #{tpu_custom_call.1} parent=11 // pred_check
          %p705 = pneg %p520
        $region86: #{tpu_custom_call.1} parent=11 // pred_check_branch
          %707 = sbr.rel (%p705) target = $region88
        $region87: #{tpu_custom_call.1} parent=11 // pred_region
          _
        $region88: #{tpu_custom_call.1} parent=11 // pred_fallthru
          _
      $region12: #{tpu_custom_call.1} parent=5 // pred_fallthru
        _
      %p708 = scmp.lt.s32.totalorder %s43, 2
      // Predicated region
      $region89: #{tpu_custom_call.1} parent=5 // pred_check
        %p709 = pneg %p708
      $region90: #{tpu_custom_call.1} parent=5 // pred_check_branch
        %711 = sbr.rel (%p709) target = $region92
      $region91: #{tpu_custom_call.1} parent=5 // pred_region
        // Predicated region
        $region93: #{tpu_custom_call.1} parent=91 // pred_check
          %p712 = pneg %p63
        $region94: #{tpu_custom_call.1} parent=91 // pred_check_branch
          %714 = sbr.rel (%p712) target = $region96
        $region95: #{tpu_custom_call.1} parent=91 // pred_region
          %s715 = sand.u32 %s53, 1
          %s716 = scalar_lea.sflag [#allocation3], %s715
          %s717 = sand.u32 %s53, 1
          %s718 = smul.addr %s717, 8
          %s719 = scalar_lea.vmem [#allocation2], %s718
          %s721 = ssub.s32 128, 128
          %722 = vsyncadd %s716, %s721
          %s723 = smul.addr %s43, 128
          %s724 = scalar_lea.hbm %s0, %s723
          %s726 = sshll.u32 %s719, 4
          %s727 = int_to_ptr.vmem [resolvable:$true] %s726
          %729 = dma.hbm_to_vmem [thread:$0]  %s724, 128, %s727, %s716
        $region96: #{tpu_custom_call.1} parent=91 // pred_fallthru
          _
        // Predicated region
        $region97: #{tpu_custom_call.1} parent=91 // pred_check
          %p730 = pneg %p89
        $region98: #{tpu_custom_call.1} parent=91 // pred_check_branch
          %732 = sbr.rel (%p730) target = $region100
        $region99: #{tpu_custom_call.1} parent=91 // pred_region
          %s733 = sand.u32 %s43, 1
          %s734 = scalar_lea.sflag [#allocation6], %s733
          %s735 = sand.u32 %s79, 1
          %s736 = smul.addr %s735, 8
          %s737 = scalar_lea.vmem [#allocation5], %s736
          %s739 = ssub.s32 128, 128
          %740 = vsyncadd %s734, %s739
          %s741 = smul.addr %s43, 128
          %s742 = scalar_lea.hbm %s1, %s741
          %s744 = sshll.u32 %s737, 4
          %s745 = int_to_ptr.vmem [resolvable:$true] %s744
          %747 = dma.hbm_to_vmem [thread:$0]  %s742, 128, %s745, %s734
        $region100: #{tpu_custom_call.1} parent=91 // pred_fallthru
          _
        // Predicated region
        $region101: #{tpu_custom_call.1} parent=91 // pred_check
          %p748 = pneg %p115
        $region102: #{tpu_custom_call.1} parent=91 // pred_check_branch
          %750 = sbr.rel (%p748) target = $region104
        $region103: #{tpu_custom_call.1} parent=91 // pred_region
          %s751 = sand.u32 %s43, 1
          %s752 = scalar_lea.sflag [#allocation6], %s751
          %s753 = sand.u32 %s105, 1
          %s754 = smul.addr %s753, 8
          %s755 = scalar_lea.vmem [#allocation7], %s754
          %s757 = ssub.s32 128, 128
          %758 = vsyncadd %s752, %s757
          %s759 = smul.addr %s43, 128
          %s760 = scalar_lea.hbm %s2, %s759
          %s762 = sshll.u32 %s755, 4
          %s763 = int_to_ptr.vmem [resolvable:$true] %s762
          %765 = dma.hbm_to_vmem [thread:$0]  %s760, 128, %s763, %s752
        $region104: #{tpu_custom_call.1} parent=91 // pred_fallthru
          _
      $region92: #{tpu_custom_call.1} parent=5 // pred_fallthru
        _
      %p766 = scmp.le.s32.totalorder 1, %s43
      %p767 = scmp.lt.s32.totalorder %s43, 3
      %p768 = pnand %p766, %p767
      %p769 = pneg %p768
      // Predicated region
      $region105: #{tpu_custom_call.1} parent=5 // pred_check
        _
      $region106: #{tpu_custom_call.1} parent=5 // pred_check_branch
        %771 = sbr.rel (%p768) target = $region108
      $region107: #{tpu_custom_call.1} parent=5 // pred_region
        %s772 = ssub.s32 %s43, 1
        %s773 = sand.u32 %s56, 1
        %s774 = scalar_lea.sflag [#allocation3], %s773
        %s775 = sand.u32 %s56, 1
        %s776 = smul.addr %s775, 8
        %s777 = scalar_lea.vmem [#allocation2], %s776
        // Predicated region
        $region109: #{tpu_custom_call.1} parent=107 // pred_check
          %p778 = pneg %p69
        $region110: #{tpu_custom_call.1} parent=107 // pred_check_branch
          %780 = sbr.rel (%p778) target = $region112
        $region111: #{tpu_custom_call.1} parent=107 // pred_region
          %781 = dma.done %s774, 128
        $region112: #{tpu_custom_call.1} parent=107 // pred_fallthru
          _
        %s782 = sand.u32 %s48, 1
        %s783 = scalar_lea.sflag [#allocation6], %s782
        %s784 = sand.u32 %s82, 1
        %s785 = smul.addr %s784, 8
        %s786 = scalar_lea.vmem [#allocation5], %s785
        // Predicated region
        $region113: #{tpu_custom_call.1} parent=107 // pred_check
          %p787 = pneg %p95
        $region114: #{tpu_custom_call.1} parent=107 // pred_check_branch
          %789 = sbr.rel (%p787) target = $region116
        $region115: #{tpu_custom_call.1} parent=107 // pred_region
          %790 = dma.done %s783, 128
        $region116: #{tpu_custom_call.1} parent=107 // pred_fallthru
          _
        %s791 = sand.u32 %s48, 1
        %s792 = scalar_lea.sflag [#allocation6], %s791
        %s793 = sand.u32 %s108, 1
        %s794 = smul.addr %s793, 8
        %s795 = scalar_lea.vmem [#allocation7], %s794
        // Predicated region
        $region117: #{tpu_custom_call.1} parent=107 // pred_check
          %p796 = pneg %p121
        $region118: #{tpu_custom_call.1} parent=107 // pred_check_branch
          %798 = sbr.rel (%p796) target = $region120
        $region119: #{tpu_custom_call.1} parent=107 // pred_region
          %799 = dma.done %s792, 128
        $region120: #{tpu_custom_call.1} parent=107 // pred_fallthru
          _
        // Predicated region
        $region121: #{tpu_custom_call.1} parent=107 // pred_check
          %p800 = pneg %p142
        $region122: #{tpu_custom_call.1} parent=107 // pred_check_branch
          %802 = sbr.rel (%p800) target = $region124
        $region123: #{tpu_custom_call.1} parent=107 // pred_region
          %803 = dma.done [#allocation9], 128
        $region124: #{tpu_custom_call.1} parent=107 // pred_fallthru
          _
        // Predicated region
        $region125: #{tpu_custom_call.1} parent=107 // pred_check
          %p804 = pneg %p184
        $region126: #{tpu_custom_call.1} parent=107 // pred_check_branch
          %806 = sbr.rel (%p804) target = $region128
        $region127: #{tpu_custom_call.1} parent=107 // pred_region
          %807 = dma.done [#allocation9], 16
        $region128: #{tpu_custom_call.1} parent=107 // pred_fallthru
          _
        // Predicated region
        $region129: #{tpu_custom_call.1} parent=107 // pred_check
          %p808 = pneg %p226
        $region130: #{tpu_custom_call.1} parent=107 // pred_check_branch
          %810 = sbr.rel (%p808) target = $region132
        $region131: #{tpu_custom_call.1} parent=107 // pred_region
          %811 = dma.done [#allocation12], 16
        $region132: #{tpu_custom_call.1} parent=107 // pred_fallthru
          _
        // Predicated region
        $region133: #{tpu_custom_call.1} parent=107 // pred_check
          %p812 = pneg %p247
        $region134: #{tpu_custom_call.1} parent=107 // pred_check_branch
          %814 = sbr.rel (%p812) target = $region136
        $region135: #{tpu_custom_call.1} parent=107 // pred_region
          %815 = dma.done [#allocation12], 16
        $region136: #{tpu_custom_call.1} parent=107 // pred_fallthru
          _
        // Predicated region
        $region137: #{tpu_custom_call.1} parent=107 // pred_check
          %p816 = pneg %p268
        $region138: #{tpu_custom_call.1} parent=107 // pred_check_branch
          %818 = sbr.rel (%p816) target = $region140
        $region139: #{tpu_custom_call.1} parent=107 // pred_region
          %819 = dma.done [#allocation15], 16
        $region140: #{tpu_custom_call.1} parent=107 // pred_fallthru
          _
        // Predicated region
        $region141: #{tpu_custom_call.1} parent=107 // pred_check
          %p820 = pneg %p310
        $region142: #{tpu_custom_call.1} parent=107 // pred_check_branch
          %822 = sbr.rel (%p820) target = $region144
        $region143: #{tpu_custom_call.1} parent=107 // pred_region
          %823 = dma.done [#allocation15], 16
        $region144: #{tpu_custom_call.1} parent=107 // pred_fallthru
          _
        // Predicated region
        $region145: #{tpu_custom_call.1} parent=107 // pred_check
          %p824 = pneg %p352
        $region146: #{tpu_custom_call.1} parent=107 // pred_check_branch
          %826 = sbr.rel (%p824) target = $region148
        $region147: #{tpu_custom_call.1} parent=107 // pred_region
          %827 = dma.done [#allocation18], 16
        $region148: #{tpu_custom_call.1} parent=107 // pred_fallthru
          _
        // Predicated region
        $region149: #{tpu_custom_call.1} parent=107 // pred_check
          %p828 = pneg %p373
        $region150: #{tpu_custom_call.1} parent=107 // pred_check_branch
          %830 = sbr.rel (%p828) target = $region152
        $region151: #{tpu_custom_call.1} parent=107 // pred_region
          %831 = dma.done [#allocation18], 16
        $region152: #{tpu_custom_call.1} parent=107 // pred_fallthru
          _
        // Predicated region
        $region153: #{tpu_custom_call.1} parent=107 // pred_check
          %p832 = pneg %p394
        $region154: #{tpu_custom_call.1} parent=107 // pred_check_branch
          %834 = sbr.rel (%p832) target = $region156
        $region155: #{tpu_custom_call.1} parent=107 // pred_region
          %835 = dma.done [#allocation21], 16
        $region156: #{tpu_custom_call.1} parent=107 // pred_fallthru
          _
        // Predicated region
        $region157: #{tpu_custom_call.1} parent=107 // pred_check
          %p836 = pneg %p415
        $region158: #{tpu_custom_call.1} parent=107 // pred_check_branch
          %838 = sbr.rel (%p836) target = $region160
        $region159: #{tpu_custom_call.1} parent=107 // pred_region
          %839 = dma.done [#allocation21], 512
        $region160: #{tpu_custom_call.1} parent=107 // pred_fallthru
          _
        // Predicated region
        $region161: #{tpu_custom_call.1} parent=107 // pred_check
          %p840 = pneg %p436
        $region162: #{tpu_custom_call.1} parent=107 // pred_check_branch
          %842 = sbr.rel (%p840) target = $region164
        $region163: #{tpu_custom_call.1} parent=107 // pred_region
          %843 = dma.done [#allocation24], 16
        $region164: #{tpu_custom_call.1} parent=107 // pred_fallthru
          _
        %s844 = sand.u32 %s56, 1
        %s845 = scalar_lea.sflag [#allocation3], %s844
        %s846 = sand.u32 %s56, 1
        %s847 = smul.addr %s846, 8
        %s848 = scalar_lea.vmem [#allocation2], %s847
        %p849 = pneg %p69
        %p850 = pneg %p66
        %s851 = sand.u32 %s48, 1
        %s852 = scalar_lea.sflag [#allocation6], %s851
        %s853 = sand.u32 %s82, 1
        %s854 = smul.addr %s853, 8
        %s855 = scalar_lea.vmem [#allocation5], %s854
        %p856 = pneg %p95
        %p857 = pneg %p92
        %s858 = sand.u32 %s48, 1
        %s859 = scalar_lea.sflag [#allocation6], %s858
        %s860 = sand.u32 %s108, 1
        %s861 = smul.addr %s860, 8
        %s862 = scalar_lea.vmem [#allocation7], %s861
        %p863 = pneg %p121
        %p864 = pneg %p118
        %p865 = pneg %p142
        %p866 = pneg %p139
        %p867 = pneg %p163
        %p868 = pneg %p160
        %p869 = pneg %p184
        %p870 = pneg %p181
        %p871 = pneg %p205
        %p872 = pneg %p202
        %p873 = pneg %p226
        %p874 = pneg %p223
        %p875 = pneg %p247
        %p876 = pneg %p244
        %p877 = pneg %p268
        %p878 = pneg %p265
        %p879 = pneg %p289
        %p880 = pneg %p286
        %p881 = pneg %p310
        %p882 = pneg %p307
        %p883 = pneg %p331
        %p884 = pneg %p328
        %p885 = pneg %p352
        %p886 = pneg %p349
        %p887 = pneg %p373
        %p888 = pneg %p370
        %p889 = pneg %p394
        %p890 = pneg %p391
        %p891 = pneg %p415
        %p892 = pneg %p412
        %p893 = pneg %p436
        %p894 = pneg %p433
        %p895 = pneg %p457
        %p896 = pneg %p454
        %p897 = pneg %p478
        %p898 = pneg %p475
        %p899 = pneg %p499
        %p900 = pneg %p496
        %p901 = pneg %p520
        %p902 = pneg %p517
        %p903 = pneg %p546
        %p904 = pneg %p543
        %s905 = sand.u32 %s533, 1
        %s906 = scalar_lea.sflag [#allocation4], %s905
        %s907 = sand.u32 %s533, 1
        %s908 = smul.addr %s907, 8
        %s909 = scalar_lea.vmem [#allocation25], %s908
        %v910 = vld [vmem:[%s777] sm:$0xff]
        %v911 = vld [vmem:[%s4] sm:$0xff]
        %v912 = vld [vmem:[%s4 + $0x8] sm:$0xff]
        %v913 = vld [vmem:[%s4 + $0x10] sm:$0xff]
        %v914 = vld [vmem:[%s4 + $0x18] sm:$0xff]
        %v915 = vld [vmem:[#allocation10] sm:$0x1]
        %v917 = vlaneseq
        %v918 = vshrl.u32 %v917, 7
        %v919 = vsub.s32 0, %v918
        %v920 = vrot.slane %v915, %v919
        %vm922 = vcmask 261120
        %v924 = vsel %vm922, %v910, 0
        %926 = vmatprep.subr.mxu0 0.0
        %927 = vmatpush1.msra.mxu0 %v911
        %928 = vmatprep.subr.mxu0 0.0
        %929 = vmatpush1.msra.mxu0 %v912
        %930 = vmatprep.subr.mxu0 0.0
        %931 = vmatpush1.msra.mxu0 %v913
        %932 = vmatprep.subr.mxu0 0.0
        %933 = vmatpush1.msra.mxu0 %v914
        %934 = vmatprep.subr.mxu0 0.0
        %935 = vmatpush1.msra.mxu0 0.0
        %936 = vmatprep.subr.mxu0 0.0
        %937 = vmatpush1.msra.mxu0 0.0
        %938 = vmatprep.subr.mxu0 0.0
        %939 = vmatpush1.msra.mxu0 0.0
        %940 = vmatprep.subr.mxu0 0.0
        %941 = vmatpush1.msra.mxu0 0.0
        %942 = vmatprep.subr.mxu0 0.0
        %943 = vmatpush1.msra.mxu0 0.0
        %944 = vmatprep.subr.mxu0 0.0
        %945 = vmatpush1.msra.mxu0 0.0
        %946 = vmatprep.subr.mxu0 0.0
        %947 = vmatpush1.msra.mxu0 0.0
        %948 = vmatprep.subr.mxu0 0.0
        %949 = vmatpush1.msra.mxu0 0.0
        %950 = vmatprep.subr.mxu0 0.0
        %951 = vmatpush1.msra.mxu0 0.0
        %952 = vmatprep.subr.mxu0 0.0
        %953 = vmatpush1.msra.mxu0 0.0
        %954 = vmatprep.subr.mxu0 0.0
        %955 = vmatpush1.msra.mxu0 0.0
        %956 = vmatprep.subr.mxu0 0.0
        %957 = vmatpush1.msra.mxu0 0.0
        %958 = vmatprep.subr.mxu0 0.0
        %959 = vmatpush1.msra.mxu0 0.0
        %960 = vmatprep.subr.mxu0 0.0
        %961 = vmatpush1.msra.mxu0 0.0
        %962 = vmatprep.subr.mxu0 0.0
        %963 = vmatpush1.msra.mxu0 0.0
        %964 = vmatprep.subr.mxu0 0.0
        %965 = vmatpush1.msra.mxu0 0.0
        %966 = vmatprep.subr.mxu0 0.0
        %967 = vmatpush1.msra.mxu0 0.0
        %968 = vmatprep.subr.mxu0 0.0
        %969 = vmatpush1.msra.mxu0 0.0
        %970 = vmatprep.subr.mxu0 0.0
        %971 = vmatpush1.msra.mxu0 0.0
        %972 = vmatprep.subr.mxu0 0.0
        %973 = vmatpush1.msra.mxu0 0.0
        %974 = vmatprep.subr.mxu0 0.0
        %975 = vmatpush1.msra.mxu0 0.0
        %976 = vmatprep.subr.mxu0 0.0
        %977 = vmatpush1.msra.mxu0 0.0
        %978 = vmatprep.subr.mxu0 0.0
        %979 = vmatpush1.msra.mxu0 0.0
        %980 = vmatprep.subr.mxu0 0.0
        %981 = vmatpush1.msra.mxu0 0.0
        %982 = vmatprep.subr.mxu0 0.0
        %983 = vmatpush1.msra.mxu0 0.0
        %984 = vmatprep.subr.mxu0 0.0
        %985 = vmatpush1.msra.mxu0 0.0
        %986 = vmatprep.subr.mxu0 0.0
        %987 = vmatpush1.msra.mxu0 0.0
        %988 = vmatprep.subr.mxu0 0.0
        %989 = vmatpush1.msra.mxu0 0.0
        %990 = vmatprep.mubr.f32.mxu0 0.0
        %991 = vmatmul.mubr.f32.gmra.mrb[0].mxu0 %v924
        %v992 = vpop.f32.mrb[0].mxu0
        %v993 = vadd.f32 %v920, %v992
        %v994 = vpop.f32.mrb[0].mxu0
        %995 = vdwg.mxu0
        %v997 = vrot.slane %v993, 7
        %998 = vrot.lane.b32.xlu0 %v997, 120
        %v999 = vpop.permute.xlu0 %998
        %v1001 = vrot.slane %v993, 6
        %1002 = vrot.lane.b32.xlu0 %v1001, 112
        %v1003 = vpop.permute.xlu0 %1002
        %v1005 = vrot.slane %v993, 5
        %1006 = vrot.lane.b32.xlu0 %v1005, 104
        %v1007 = vpop.permute.xlu0 %1006
        %v1010 = vrot.slane %v993, 4
        %1011 = vrot.lane.b32.xlu0 %v1010, 120
        %v1012 = vpop.permute.xlu0 %1011
        %v1014 = vrot.slane %v993, 3
        %1015 = vrot.lane.b32.xlu0 %v1014, 112
        %v1016 = vpop.permute.xlu0 %1015
        %v1018 = vrot.slane %v993, 2
        %1019 = vrot.lane.b32.xlu0 %v1018, 104
        %v1020 = vpop.permute.xlu0 %1019
        %vm1022 = vcmask 1040384
        %v1023 = vsel %vm1022, %v993, %v999
        %vm1024 = vcmask 1041408
        %v1025 = vsel %vm1024, %v1023, %v1003
        %vm1026 = vcmask 1042432
        %v1027 = vsel %vm1026, %v1025, %v1007
        %vm1028 = vcmask 1043456
        %v1029 = vsel %vm1028, %v1027, %v1005
        %vm1030 = vcmask 1044480
        %v1031 = vsel %vm1030, %v1029, %v1012
        %vm1032 = vcmask 1045504
        %v1033 = vsel %vm1032, %v1031, %v1016
        %vm1034 = vcmask 1046528
        %v1035 = vsel %vm1034, %v1033, %v1020
        %v1037 = vrot.slane %v993, 1
        %1038 = vrot.lane.b32.xlu0 %v1037, 120
        %v1039 = vpop.permute.xlu0 %1038
        %1041 = vrot.lane.b32.xlu0 %v993, 112
        %v1042 = vpop.permute.xlu0 %1041
        %1044 = vrot.lane.b32.xlu0 %v997, 104
        %v1045 = vpop.permute.xlu0 %1044
        %1048 = vrot.lane.b32.xlu0 %v1001, 120
        %v1049 = vpop.permute.xlu0 %1048
        %1051 = vrot.lane.b32.xlu0 %v1005, 112
        %v1052 = vpop.permute.xlu0 %1051
        %1054 = vrot.lane.b32.xlu0 %v1010, 104
        %v1055 = vpop.permute.xlu0 %1054
        %v1057 = vsel %vm1022, %v1018, %v1039
        %v1058 = vsel %vm1024, %v1057, %v1042
        %v1059 = vsel %vm1026, %v1058, %v1045
        %v1060 = vsel %vm1028, %v1059, %v997
        %v1061 = vsel %vm1030, %v1060, %v1049
        %v1062 = vsel %vm1032, %v1061, %v1052
        %v1063 = vsel %vm1034, %v1062, %v1055
        %1065 = vrot.lane.b32.xlu0 %v1014, 120
        %v1066 = vpop.permute.xlu0 %1065
        %1068 = vrot.lane.b32.xlu0 %v1018, 112
        %v1069 = vpop.permute.xlu0 %1068
        %1071 = vrot.lane.b32.xlu0 %v1037, 104
        %v1072 = vpop.permute.xlu0 %1071
        %1075 = vrot.lane.b32.xlu0 %v993, 120
        %v1076 = vpop.permute.xlu0 %1075
        %1078 = vrot.lane.b32.xlu0 %v997, 112
        %v1079 = vpop.permute.xlu0 %1078
        %1081 = vrot.lane.b32.xlu0 %v1001, 104
        %v1082 = vpop.permute.xlu0 %1081
        %v1084 = vsel %vm1022, %v1010, %v1066
        %v1085 = vsel %vm1024, %v1084, %v1069
        %v1086 = vsel %vm1026, %v1085, %v1072
        %v1087 = vsel %vm1028, %v1086, %v1037
        %v1088 = vsel %vm1030, %v1087, %v1076
        %v1089 = vsel %vm1032, %v1088, %v1079
        %v1090 = vsel %vm1034, %v1089, %v1082
        %1092 = vrot.lane.b32.xlu0 %v1005, 120
        %v1093 = vpop.permute.xlu0 %1092
        %1095 = vrot.lane.b32.xlu0 %v1010, 112
        %v1096 = vpop.permute.xlu0 %1095
        %1098 = vrot.lane.b32.xlu0 %v1014, 104
        %v1099 = vpop.permute.xlu0 %1098
        %1102 = vrot.lane.b32.xlu0 %v1018, 120
        %v1103 = vpop.permute.xlu0 %1102
        %1105 = vrot.lane.b32.xlu0 %v1037, 112
        %v1106 = vpop.permute.xlu0 %1105
        %1108 = vrot.lane.b32.xlu0 %v993, 104
        %v1109 = vpop.permute.xlu0 %1108
        %v1111 = vsel %vm1022, %v1001, %v1093
        %v1112 = vsel %vm1024, %v1111, %v1096
        %v1113 = vsel %vm1026, %v1112, %v1099
        %v1114 = vsel %vm1028, %v1113, %v1014
        %v1115 = vsel %vm1030, %v1114, %v1103
        %v1116 = vsel %vm1032, %v1115, %v1106
        %v1117 = vsel %vm1034, %v1116, %v1109
        %v1118 = vld [vmem:[#allocation8] sm:$0xff]
        %v1119 = vmul.f32 %v1035, 0.35355338
        %v1120 = vmul.f32 %v1063, 0.35355338
        %v1121 = vmul.f32 %v1090, 0.35355338
        %v1122 = vmul.f32 %v1117, 0.35355338
        %vm1123 = vcmask 64512
        %v1125 = vsel %vm1123, %v1119, 0
        %v1128 = vsel %vm1123, %v1035, 0
        %1130 = vmatprep.subr.mxu0 0.0
        %1131 = vmatpush1.xpose.msra.mxu0 %v1128
        %1132 = vmatprep.subr.mxu0 0.0
        %1133 = vmatpush1.xpose.msra.mxu0 0.0
        %1134 = vmatprep.subr.mxu0 0.0
        %1135 = vmatpush1.xpose.msra.mxu0 0.0
        %1136 = vmatprep.subr.mxu0 0.0
        %1137 = vmatpush1.xpose.msra.mxu0 0.0
        %1138 = vmatprep.subr.mxu0 0.0
        %1139 = vmatpush1.xpose.msra.mxu0 0.0
        %1140 = vmatprep.subr.mxu0 0.0
        %1141 = vmatpush1.xpose.msra.mxu0 0.0
        %1142 = vmatprep.subr.mxu0 0.0
        %1143 = vmatpush1.xpose.msra.mxu0 0.0
        %1144 = vmatprep.subr.mxu0 0.0
        %1145 = vmatpush1.xpose.msra.mxu0 0.0
        %1146 = vmatprep.subr.mxu0 0.0
        %1147 = vmatpush1.xpose.msra.mxu0 0.0
        %1148 = vmatprep.subr.mxu0 0.0
        %1149 = vmatpush1.xpose.msra.mxu0 0.0
        %1150 = vmatprep.subr.mxu0 0.0
        %1151 = vmatpush1.xpose.msra.mxu0 0.0
        %1152 = vmatprep.subr.mxu0 0.0
        %1153 = vmatpush1.xpose.msra.mxu0 0.0
        %1154 = vmatprep.subr.mxu0 0.0
        %1155 = vmatpush1.xpose.msra.mxu0 0.0
        %1156 = vmatprep.subr.mxu0 0.0
        %1157 = vmatpush1.xpose.msra.mxu0 0.0
        %1158 = vmatprep.subr.mxu0 0.0
        %1159 = vmatpush1.xpose.msra.mxu0 0.0
        %1160 = vmatprep.subr.mxu0 0.0
        %1161 = vmatpush1.xpose.msra.mxu0 0.0
        %1162 = vmatprep.subr.mxu0 0.0
        %1163 = vmatpush1.xpose.msra.mxu0 0.0
        %1164 = vmatprep.subr.mxu0 0.0
        %1165 = vmatpush1.xpose.msra.mxu0 0.0
        %1166 = vmatprep.subr.mxu0 0.0
        %1167 = vmatpush1.xpose.msra.mxu0 0.0
        %1168 = vmatprep.subr.mxu0 0.0
        %1169 = vmatpush1.xpose.msra.mxu0 0.0
        %1170 = vmatprep.subr.mxu0 0.0
        %1171 = vmatpush1.xpose.msra.mxu0 0.0
        %1172 = vmatprep.subr.mxu0 0.0
        %1173 = vmatpush1.xpose.msra.mxu0 0.0
        %1174 = vmatprep.subr.mxu0 0.0
        %1175 = vmatpush1.xpose.msra.mxu0 0.0
        %1176 = vmatprep.subr.mxu0 0.0
        %1177 = vmatpush1.xpose.msra.mxu0 0.0
        %1178 = vmatprep.subr.mxu0 0.0
        %1179 = vmatpush1.xpose.msra.mxu0 0.0
        %1180 = vmatprep.subr.mxu0 0.0
        %1181 = vmatpush1.xpose.msra.mxu0 0.0
        %1182 = vmatprep.subr.mxu0 0.0
        %1183 = vmatpush1.xpose.msra.mxu0 0.0
        %1184 = vmatprep.subr.mxu0 0.0
        %1185 = vmatpush1.xpose.msra.mxu0 0.0
        %1186 = vmatprep.subr.mxu0 0.0
        %1187 = vmatpush1.xpose.msra.mxu0 0.0
        %1188 = vmatprep.subr.mxu0 0.0
        %1189 = vmatpush1.xpose.msra.mxu0 0.0
        %1190 = vmatprep.subr.mxu0 0.0
        %1191 = vmatpush1.xpose.msra.mxu0 0.0
        %1192 = vmatprep.subr.mxu0 0.0
        %1193 = vmatpush1.xpose.msra.mxu0 0.0
        %1194 = vmatprep.mubr.f32.mxu0 0.0
        %1195 = vmatmul.mubr.f32.gmra.mrb[0].mxu0 %v1125
        %v1196 = vpop.f32.mrb[0].mxu0
        %v1197 = vadd.f32 0.0, %v1196
        %v1198 = vpop.f32.mrb[0].mxu0
        %1199 = vdwg.mxu0
        %v1201 = vsel %vm1123, %v1120, 0
        %v1204 = vsel %vm1123, %v1063, 0
        %1206 = vmatprep.subr.mxu0 0.0
        %1207 = vmatpush1.xpose.msra.mxu0 %v1204
        %1208 = vmatprep.subr.mxu0 0.0
        %1209 = vmatpush1.xpose.msra.mxu0 0.0
        %1210 = vmatprep.subr.mxu0 0.0
        %1211 = vmatpush1.xpose.msra.mxu0 0.0
        %1212 = vmatprep.subr.mxu0 0.0
        %1213 = vmatpush1.xpose.msra.mxu0 0.0
        %1214 = vmatprep.subr.mxu0 0.0
        %1215 = vmatpush1.xpose.msra.mxu0 0.0
        %1216 = vmatprep.subr.mxu0 0.0
        %1217 = vmatpush1.xpose.msra.mxu0 0.0
        %1218 = vmatprep.subr.mxu0 0.0
        %1219 = vmatpush1.xpose.msra.mxu0 0.0
        %1220 = vmatprep.subr.mxu0 0.0
        %1221 = vmatpush1.xpose.msra.mxu0 0.0
        %1222 = vmatprep.subr.mxu0 0.0
        %1223 = vmatpush1.xpose.msra.mxu0 0.0
        %1224 = vmatprep.subr.mxu0 0.0
        %1225 = vmatpush1.xpose.msra.mxu0 0.0
        %1226 = vmatprep.subr.mxu0 0.0
        %1227 = vmatpush1.xpose.msra.mxu0 0.0
        %1228 = vmatprep.subr.mxu0 0.0
        %1229 = vmatpush1.xpose.msra.mxu0 0.0
        %1230 = vmatprep.subr.mxu0 0.0
        %1231 = vmatpush1.xpose.msra.mxu0 0.0
        %1232 = vmatprep.subr.mxu0 0.0
        %1233 = vmatpush1.xpose.msra.mxu0 0.0
        %1234 = vmatprep.subr.mxu0 0.0
        %1235 = vmatpush1.xpose.msra.mxu0 0.0
        %1236 = vmatprep.subr.mxu0 0.0
        %1237 = vmatpush1.xpose.msra.mxu0 0.0
        %1238 = vmatprep.subr.mxu0 0.0
        %1239 = vmatpush1.xpose.msra.mxu0 0.0
        %1240 = vmatprep.subr.mxu0 0.0
        %1241 = vmatpush1.xpose.msra.mxu0 0.0
        %1242 = vmatprep.subr.mxu0 0.0
        %1243 = vmatpush1.xpose.msra.mxu0 0.0
        %1244 = vmatprep.subr.mxu0 0.0
        %1245 = vmatpush1.xpose.msra.mxu0 0.0
        %1246 = vmatprep.subr.mxu0 0.0
        %1247 = vmatpush1.xpose.msra.mxu0 0.0
        %1248 = vmatprep.subr.mxu0 0.0
        %1249 = vmatpush1.xpose.msra.mxu0 0.0
        %1250 = vmatprep.subr.mxu0 0.0
        %1251 = vmatpush1.xpose.msra.mxu0 0.0
        %1252 = vmatprep.subr.mxu0 0.0
        %1253 = vmatpush1.xpose.msra.mxu0 0.0
        %1254 = vmatprep.subr.mxu0 0.0
        %1255 = vmatpush1.xpose.msra.mxu0 0.0
        %1256 = vmatprep.subr.mxu0 0.0
        %1257 = vmatpush1.xpose.msra.mxu0 0.0
        %1258 = vmatprep.subr.mxu0 0.0
        %1259 = vmatpush1.xpose.msra.mxu0 0.0
        %1260 = vmatprep.subr.mxu0 0.0
        %1261 = vmatpush1.xpose.msra.mxu0 0.0
        %1262 = vmatprep.subr.mxu0 0.0
        %1263 = vmatpush1.xpose.msra.mxu0 0.0
        %1264 = vmatprep.subr.mxu0 0.0
        %1265 = vmatpush1.xpose.msra.mxu0 0.0
        %1266 = vmatprep.subr.mxu0 0.0
        %1267 = vmatpush1.xpose.msra.mxu0 0.0
        %1268 = vmatprep.subr.mxu0 0.0
        %1269 = vmatpush1.xpose.msra.mxu0 0.0
        %1270 = vmatprep.mubr.f32.mxu0 0.0
        %1271 = vmatmul.mubr.f32.gmra.mrb[0].mxu0 %v1201
        %v1272 = vpop.f32.mrb[0].mxu0
        %v1273 = vadd.f32 0.0, %v1272
        %v1274 = vpop.f32.mrb[0].mxu0
        %1275 = vdwg.mxu0
        %v1277 = vsel %vm1123, %v1121, 0
        %v1280 = vsel %vm1123, %v1090, 0
        %1282 = vmatprep.subr.mxu0 0.0
        %1283 = vmatpush1.xpose.msra.mxu0 %v1280
        %1284 = vmatprep.subr.mxu0 0.0
        %1285 = vmatpush1.xpose.msra.mxu0 0.0
        %1286 = vmatprep.subr.mxu0 0.0
        %1287 = vmatpush1.xpose.msra.mxu0 0.0
        %1288 = vmatprep.subr.mxu0 0.0
        %1289 = vmatpush1.xpose.msra.mxu0 0.0
        %1290 = vmatprep.subr.mxu0 0.0
        %1291 = vmatpush1.xpose.msra.mxu0 0.0
        %1292 = vmatprep.subr.mxu0 0.0
        %1293 = vmatpush1.xpose.msra.mxu0 0.0
        %1294 = vmatprep.subr.mxu0 0.0
        %1295 = vmatpush1.xpose.msra.mxu0 0.0
        %1296 = vmatprep.subr.mxu0 0.0
        %1297 = vmatpush1.xpose.msra.mxu0 0.0
        %1298 = vmatprep.subr.mxu0 0.0
        %1299 = vmatpush1.xpose.msra.mxu0 0.0
        %1300 = vmatprep.subr.mxu0 0.0
        %1301 = vmatpush1.xpose.msra.mxu0 0.0
        %1302 = vmatprep.subr.mxu0 0.0
        %1303 = vmatpush1.xpose.msra.mxu0 0.0
        %1304 = vmatprep.subr.mxu0 0.0
        %1305 = vmatpush1.xpose.msra.mxu0 0.0
        %1306 = vmatprep.subr.mxu0 0.0
        %1307 = vmatpush1.xpose.msra.mxu0 0.0
        %1308 = vmatprep.subr.mxu0 0.0
        %1309 = vmatpush1.xpose.msra.mxu0 0.0
        %1310 = vmatprep.subr.mxu0 0.0
        %1311 = vmatpush1.xpose.msra.mxu0 0.0
        %1312 = vmatprep.subr.mxu0 0.0
        %1313 = vmatpush1.xpose.msra.mxu0 0.0
        %1314 = vmatprep.subr.mxu0 0.0
        %1315 = vmatpush1.xpose.msra.mxu0 0.0
        %1316 = vmatprep.subr.mxu0 0.0
        %1317 = vmatpush1.xpose.msra.mxu0 0.0
        %1318 = vmatprep.subr.mxu0 0.0
        %1319 = vmatpush1.xpose.msra.mxu0 0.0
        %1320 = vmatprep.subr.mxu0 0.0
        %1321 = vmatpush1.xpose.msra.mxu0 0.0
        %1322 = vmatprep.subr.mxu0 0.0
        %1323 = vmatpush1.xpose.msra.mxu0 0.0
        %1324 = vmatprep.subr.mxu0 0.0
        %1325 = vmatpush1.xpose.msra.mxu0 0.0
        %1326 = vmatprep.subr.mxu0 0.0
        %1327 = vmatpush1.xpose.msra.mxu0 0.0
        %1328 = vmatprep.subr.mxu0 0.0
        %1329 = vmatpush1.xpose.msra.mxu0 0.0
        %1330 = vmatprep.subr.mxu0 0.0
        %1331 = vmatpush1.xpose.msra.mxu0 0.0
        %1332 = vmatprep.subr.mxu0 0.0
        %1333 = vmatpush1.xpose.msra.mxu0 0.0
        %1334 = vmatprep.subr.mxu0 0.0
        %1335 = vmatpush1.xpose.msra.mxu0 0.0
        %1336 = vmatprep.subr.mxu0 0.0
        %1337 = vmatpush1.xpose.msra.mxu0 0.0
        %1338 = vmatprep.subr.mxu0 0.0
        %1339 = vmatpush1.xpose.msra.mxu0 0.0
        %1340 = vmatprep.subr.mxu0 0.0
        %1341 = vmatpush1.xpose.msra.mxu0 0.0
        %1342 = vmatprep.subr.mxu0 0.0
        %1343 = vmatpush1.xpose.msra.mxu0 0.0
        %1344 = vmatprep.subr.mxu0 0.0
        %1345 = vmatpush1.xpose.msra.mxu0 0.0
        %1346 = vmatprep.mubr.f32.mxu0 0.0
        %1347 = vmatmul.mubr.f32.gmra.mrb[0].mxu0 %v1277
        %v1348 = vpop.f32.mrb[0].mxu0
        %v1349 = vadd.f32 0.0, %v1348
        %v1350 = vpop.f32.mrb[0].mxu0
        %1351 = vdwg.mxu0
        %v1353 = vsel %vm1123, %v1122, 0
        %v1356 = vsel %vm1123, %v1117, 0
        %1358 = vmatprep.subr.mxu0 0.0
        %1359 = vmatpush1.xpose.msra.mxu0 %v1356
        %1360 = vmatprep.subr.mxu0 0.0
        %1361 = vmatpush1.xpose.msra.mxu0 0.0
        %1362 = vmatprep.subr.mxu0 0.0
        %1363 = vmatpush1.xpose.msra.mxu0 0.0
        %1364 = vmatprep.subr.mxu0 0.0
        %1365 = vmatpush1.xpose.msra.mxu0 0.0
        %1366 = vmatprep.subr.mxu0 0.0
        %1367 = vmatpush1.xpose.msra.mxu0 0.0
        %1368 = vmatprep.subr.mxu0 0.0
        %1369 = vmatpush1.xpose.msra.mxu0 0.0
        %1370 = vmatprep.subr.mxu0 0.0
        %1371 = vmatpush1.xpose.msra.mxu0 0.0
        %1372 = vmatprep.subr.mxu0 0.0
        %1373 = vmatpush1.xpose.msra.mxu0 0.0
        %1374 = vmatprep.subr.mxu0 0.0
        %1375 = vmatpush1.xpose.msra.mxu0 0.0
        %1376 = vmatprep.subr.mxu0 0.0
        %1377 = vmatpush1.xpose.msra.mxu0 0.0
        %1378 = vmatprep.subr.mxu0 0.0
        %1379 = vmatpush1.xpose.msra.mxu0 0.0
        %1380 = vmatprep.subr.mxu0 0.0
        %1381 = vmatpush1.xpose.msra.mxu0 0.0
        %1382 = vmatprep.subr.mxu0 0.0
        %1383 = vmatpush1.xpose.msra.mxu0 0.0
        %1384 = vmatprep.subr.mxu0 0.0
        %1385 = vmatpush1.xpose.msra.mxu0 0.0
        %1386 = vmatprep.subr.mxu0 0.0
        %1387 = vmatpush1.xpose.msra.mxu0 0.0
        %1388 = vmatprep.subr.mxu0 0.0
        %1389 = vmatpush1.xpose.msra.mxu0 0.0
        %1390 = vmatprep.subr.mxu0 0.0
        %1391 = vmatpush1.xpose.msra.mxu0 0.0
        %1392 = vmatprep.subr.mxu0 0.0
        %1393 = vmatpush1.xpose.msra.mxu0 0.0
        %1394 = vmatprep.subr.mxu0 0.0
        %1395 = vmatpush1.xpose.msra.mxu0 0.0
        %1396 = vmatprep.subr.mxu0 0.0
        %1397 = vmatpush1.xpose.msra.mxu0 0.0
        %1398 = vmatprep.subr.mxu0 0.0
        %1399 = vmatpush1.xpose.msra.mxu0 0.0
        %1400 = vmatprep.subr.mxu0 0.0
        %1401 = vmatpush1.xpose.msra.mxu0 0.0
        %1402 = vmatprep.subr.mxu0 0.0
        %1403 = vmatpush1.xpose.msra.mxu0 0.0
        %1404 = vmatprep.subr.mxu0 0.0
        %1405 = vmatpush1.xpose.msra.mxu0 0.0
        %1406 = vmatprep.subr.mxu0 0.0
        %1407 = vmatpush1.xpose.msra.mxu0 0.0
        %1408 = vmatprep.subr.mxu0 0.0
        %1409 = vmatpush1.xpose.msra.mxu0 0.0
        %1410 = vmatprep.subr.mxu0 0.0
        %1411 = vmatpush1.xpose.msra.mxu0 0.0
        %1412 = vmatprep.subr.mxu0 0.0
        %1413 = vmatpush1.xpose.msra.mxu0 0.0
        %1414 = vmatprep.subr.mxu0 0.0
        %1415 = vmatpush1.xpose.msra.mxu0 0.0
        %1416 = vmatprep.subr.mxu0 0.0
        %1417 = vmatpush1.xpose.msra.mxu0 0.0
        %1418 = vmatprep.subr.mxu0 0.0
        %1419 = vmatpush1.xpose.msra.mxu0 0.0
        %1420 = vmatprep.subr.mxu0 0.0
        %1421 = vmatpush1.xpose.msra.mxu0 0.0
        %1422 = vmatprep.mubr.f32.mxu0 0.0
        %1423 = vmatmul.mubr.f32.gmra.mrb[0].mxu0 %v1353
        %v1424 = vpop.f32.mrb[0].mxu0
        %v1425 = vadd.f32 0.0, %v1424
        %v1426 = vpop.f32.mrb[0].mxu0
        %1427 = vdwg.mxu0
        %vm1428 = vcmp.ne.f32.partialorder %v1118, 0.0
        %v1429 = vsel %vm1428, 1, 0
        %vm1430 = vcmp.eq.s32.totalorder %v1429, 1
        %v1431 = vsel %vm1430, 0.0, %v1197
        %v1432 = vsel %vm1430, 0.0, %v1273
        %v1433 = vsel %vm1430, 0.0, %v1349
        %v1434 = vsel %vm1430, 0.0, %v1425
        %v1435 = vsel %vm1123, %v1431, -inf
        %1436 = vmax.xlane.f32.xlu0 %v1435
        %v1437 = vpop.xlane.xlu0 %1436
        %v1438 = vsel %vm1123, %v1432, -inf
        %1439 = vmax.xlane.f32.xlu0 %v1438
        %v1440 = vpop.xlane.xlu0 %1439
        %v1441 = vsel %vm1123, %v1433, -inf
        %1442 = vmax.xlane.f32.xlu0 %v1441
        %v1443 = vpop.xlane.xlu0 %1442
        %v1444 = vsel %vm1123, %v1434, -inf
        %1445 = vmax.xlane.f32.xlu0 %v1444
        %v1446 = vpop.xlane.xlu0 %1445
        %v1447 = vsub.f32 %v1431, %v1437
        %v1448 = vsub.f32 %v1432, %v1440
        %v1449 = vsub.f32 %v1433, %v1443
        %v1450 = vsub.f32 %v1434, %v1446
        %v1451 = vmul.f32 %v1447, 1.442695
        %v1452 = vpow.pop %v1451
        %v1453 = vmul.f32 %v1448, 1.442695
        %v1454 = vpow.pop %v1453
        %v1455 = vmul.f32 %v1449, 1.442695
        %v1456 = vpow.pop %v1455
        %v1457 = vmul.f32 %v1450, 1.442695
        %v1458 = vpow.pop %v1457
        %v1459 = vsel %vm1123, %v1452, 0.0
        %1460 = vadd.xlane.f32.xlu0 %v1459
        %v1461 = vpop.xlane.xlu0 %1460
        %v1462 = vsel %vm1123, %v1454, 0.0
        %1463 = vadd.xlane.f32.xlu0 %v1462
        %v1464 = vpop.xlane.xlu0 %1463
        %v1465 = vsel %vm1123, %v1456, 0.0
        %1466 = vadd.xlane.f32.xlu0 %v1465
        %v1467 = vpop.xlane.xlu0 %1466
        %v1468 = vsel %vm1123, %v1458, 0.0
        %1469 = vadd.xlane.f32.xlu0 %v1468
        %v1470 = vpop.xlane.xlu0 %1469
        %v1471 = vrcp.pop %v1461
        %v1472 = vrcp.pop %v1464
        %v1473 = vrcp.pop %v1467
        %v1474 = vrcp.pop %v1470
        %v1475 = vmul.f32 %v1461, %v1471
        %v1476 = vmul.f32 %v1464, %v1472
        %v1477 = vmul.f32 %v1467, %v1473
        %v1478 = vmul.f32 %v1470, %v1474
        %v1479 = vsub.f32 2.0, %v1475
        %v1480 = vsub.f32 2.0, %v1476
        %v1481 = vsub.f32 2.0, %v1477
        %v1482 = vsub.f32 2.0, %v1478
        %v1483 = vmul.f32 %v1471, %v1479
        %v1484 = vmul.f32 %v1472, %v1480
        %v1485 = vmul.f32 %v1473, %v1481
        %v1486 = vmul.f32 %v1474, %v1482
        %v1487 = vmul.f32 %v1452, %v1483
        %v1488 = vmul.f32 %v1454, %v1484
        %v1489 = vmul.f32 %v1456, %v1485
        %v1490 = vmul.f32 %v1458, %v1486
        %v1492 = vsel %vm1123, %v1487, 0
        %1494 = vmatprep.subr.mxu0 0.0
        %1495 = vmatpush1.msra.mxu0 %v1035
        %1496 = vmatprep.subr.mxu0 0.0
        %1497 = vmatpush1.msra.mxu0 0.0
        %1498 = vmatprep.subr.mxu0 0.0
        %1499 = vmatpush1.msra.mxu0 0.0
        %1500 = vmatprep.subr.mxu0 0.0
        %1501 = vmatpush1.msra.mxu0 0.0
        %1502 = vmatprep.subr.mxu0 0.0
        %1503 = vmatpush1.msra.mxu0 0.0
        %1504 = vmatprep.subr.mxu0 0.0
        %1505 = vmatpush1.msra.mxu0 0.0
        %1506 = vmatprep.subr.mxu0 0.0
        %1507 = vmatpush1.msra.mxu0 0.0
        %1508 = vmatprep.subr.mxu0 0.0
        %1509 = vmatpush1.msra.mxu0 0.0
        %1510 = vmatprep.subr.mxu0 0.0
        %1511 = vmatpush1.msra.mxu0 0.0
        %1512 = vmatprep.subr.mxu0 0.0
        %1513 = vmatpush1.msra.mxu0 0.0
        %1514 = vmatprep.subr.mxu0 0.0
        %1515 = vmatpush1.msra.mxu0 0.0
        %1516 = vmatprep.subr.mxu0 0.0
        %1517 = vmatpush1.msra.mxu0 0.0
        %1518 = vmatprep.subr.mxu0 0.0
        %1519 = vmatpush1.msra.mxu0 0.0
        %1520 = vmatprep.subr.mxu0 0.0
        %1521 = vmatpush1.msra.mxu0 0.0
        %1522 = vmatprep.subr.mxu0 0.0
        %1523 = vmatpush1.msra.mxu0 0.0
        %1524 = vmatprep.subr.mxu0 0.0
        %1525 = vmatpush1.msra.mxu0 0.0
        %1526 = vmatprep.subr.mxu0 0.0
        %1527 = vmatpush1.msra.mxu0 0.0
        %1528 = vmatprep.subr.mxu0 0.0
        %1529 = vmatpush1.msra.mxu0 0.0
        %1530 = vmatprep.subr.mxu0 0.0
        %1531 = vmatpush1.msra.mxu0 0.0
        %1532 = vmatprep.subr.mxu0 0.0
        %1533 = vmatpush1.msra.mxu0 0.0
        %1534 = vmatprep.subr.mxu0 0.0
        %1535 = vmatpush1.msra.mxu0 0.0
        %1536 = vmatprep.subr.mxu0 0.0
        %1537 = vmatpush1.msra.mxu0 0.0
        %1538 = vmatprep.subr.mxu0 0.0
        %1539 = vmatpush1.msra.mxu0 0.0
        %1540 = vmatprep.subr.mxu0 0.0
        %1541 = vmatpush1.msra.mxu0 0.0
        %1542 = vmatprep.subr.mxu0 0.0
        %1543 = vmatpush1.msra.mxu0 0.0
        %1544 = vmatprep.subr.mxu0 0.0
        %1545 = vmatpush1.msra.mxu0 0.0
        %1546 = vmatprep.subr.mxu0 0.0
        %1547 = vmatpush1.msra.mxu0 0.0
        %1548 = vmatprep.subr.mxu0 0.0
        %1549 = vmatpush1.msra.mxu0 0.0
        %1550 = vmatprep.subr.mxu0 0.0
        %1551 = vmatpush1.msra.mxu0 0.0
        %1552 = vmatprep.subr.mxu0 0.0
        %1553 = vmatpush1.msra.mxu0 0.0
        %1554 = vmatprep.subr.mxu0 0.0
        %1555 = vmatpush1.msra.mxu0 0.0
        %1556 = vmatprep.subr.mxu0 0.0
        %1557 = vmatpush1.msra.mxu0 0.0
        %1558 = vmatprep.mubr.f32.mxu0 0.0
        %1559 = vmatmul.mubr.f32.gmra.mrb[0].mxu0 %v1492
        %v1560 = vpop.f32.mrb[0].mxu0
        %v1561 = vadd.f32 0.0, %v1560
        %v1562 = vpop.f32.mrb[0].mxu0
        %1563 = vdwg.mxu0
        %v1565 = vsel %vm1123, %v1488, 0
        %1567 = vmatprep.subr.mxu0 0.0
        %1568 = vmatpush1.msra.mxu0 %v1063
        %1569 = vmatprep.subr.mxu0 0.0
        %1570 = vmatpush1.msra.mxu0 0.0
        %1571 = vmatprep.subr.mxu0 0.0
        %1572 = vmatpush1.msra.mxu0 0.0
        %1573 = vmatprep.subr.mxu0 0.0
        %1574 = vmatpush1.msra.mxu0 0.0
        %1575 = vmatprep.subr.mxu0 0.0
        %1576 = vmatpush1.msra.mxu0 0.0
        %1577 = vmatprep.subr.mxu0 0.0
        %1578 = vmatpush1.msra.mxu0 0.0
        %1579 = vmatprep.subr.mxu0 0.0
        %1580 = vmatpush1.msra.mxu0 0.0
        %1581 = vmatprep.subr.mxu0 0.0
        %1582 = vmatpush1.msra.mxu0 0.0
        %1583 = vmatprep.subr.mxu0 0.0
        %1584 = vmatpush1.msra.mxu0 0.0
        %1585 = vmatprep.subr.mxu0 0.0
        %1586 = vmatpush1.msra.mxu0 0.0
        %1587 = vmatprep.subr.mxu0 0.0
        %1588 = vmatpush1.msra.mxu0 0.0
        %1589 = vmatprep.subr.mxu0 0.0
        %1590 = vmatpush1.msra.mxu0 0.0
        %1591 = vmatprep.subr.mxu0 0.0
        %1592 = vmatpush1.msra.mxu0 0.0
        %1593 = vmatprep.subr.mxu0 0.0
        %1594 = vmatpush1.msra.mxu0 0.0
        %1595 = vmatprep.subr.mxu0 0.0
        %1596 = vmatpush1.msra.mxu0 0.0
        %1597 = vmatprep.subr.mxu0 0.0
        %1598 = vmatpush1.msra.mxu0 0.0
        %1599 = vmatprep.subr.mxu0 0.0
        %1600 = vmatpush1.msra.mxu0 0.0
        %1601 = vmatprep.subr.mxu0 0.0
        %1602 = vmatpush1.msra.mxu0 0.0
        %1603 = vmatprep.subr.mxu0 0.0
        %1604 = vmatpush1.msra.mxu0 0.0
        %1605 = vmatprep.subr.mxu0 0.0
        %1606 = vmatpush1.msra.mxu0 0.0
        %1607 = vmatprep.subr.mxu0 0.0
        %1608 = vmatpush1.msra.mxu0 0.0
        %1609 = vmatprep.subr.mxu0 0.0
        %1610 = vmatpush1.msra.mxu0 0.0
        %1611 = vmatprep.subr.mxu0 0.0
        %1612 = vmatpush1.msra.mxu0 0.0
        %1613 = vmatprep.subr.mxu0 0.0
        %1614 = vmatpush1.msra.mxu0 0.0
        %1615 = vmatprep.subr.mxu0 0.0
        %1616 = vmatpush1.msra.mxu0 0.0
        %1617 = vmatprep.subr.mxu0 0.0
        %1618 = vmatpush1.msra.mxu0 0.0
        %1619 = vmatprep.subr.mxu0 0.0
        %1620 = vmatpush1.msra.mxu0 0.0
        %1621 = vmatprep.subr.mxu0 0.0
        %1622 = vmatpush1.msra.mxu0 0.0
        %1623 = vmatprep.subr.mxu0 0.0
        %1624 = vmatpush1.msra.mxu0 0.0
        %1625 = vmatprep.subr.mxu0 0.0
        %1626 = vmatpush1.msra.mxu0 0.0
        %1627 = vmatprep.subr.mxu0 0.0
        %1628 = vmatpush1.msra.mxu0 0.0
        %1629 = vmatprep.subr.mxu0 0.0
        %1630 = vmatpush1.msra.mxu0 0.0
        %1631 = vmatprep.mubr.f32.mxu0 0.0
        %1632 = vmatmul.mubr.f32.gmra.mrb[0].mxu0 %v1565
        %v1633 = vpop.f32.mrb[0].mxu0
        %v1634 = vadd.f32 0.0, %v1633
        %v1635 = vpop.f32.mrb[0].mxu0
        %1636 = vdwg.mxu0
        %v1638 = vsel %vm1123, %v1489, 0
        %1640 = vmatprep.subr.mxu0 0.0
        %1641 = vmatpush1.msra.mxu0 %v1090
        %1642 = vmatprep.subr.mxu0 0.0
        %1643 = vmatpush1.msra.mxu0 0.0
        %1644 = vmatprep.subr.mxu0 0.0
        %1645 = vmatpush1.msra.mxu0 0.0
        %1646 = vmatprep.subr.mxu0 0.0
        %1647 = vmatpush1.msra.mxu0 0.0
        %1648 = vmatprep.subr.mxu0 0.0
        %1649 = vmatpush1.msra.mxu0 0.0
        %1650 = vmatprep.subr.mxu0 0.0
        %1651 = vmatpush1.msra.mxu0 0.0
        %1652 = vmatprep.subr.mxu0 0.0
        %1653 = vmatpush1.msra.mxu0 0.0
        %1654 = vmatprep.subr.mxu0 0.0
        %1655 = vmatpush1.msra.mxu0 0.0
        %1656 = vmatprep.subr.mxu0 0.0
        %1657 = vmatpush1.msra.mxu0 0.0
        %1658 = vmatprep.subr.mxu0 0.0
        %1659 = vmatpush1.msra.mxu0 0.0
        %1660 = vmatprep.subr.mxu0 0.0
        %1661 = vmatpush1.msra.mxu0 0.0
        %1662 = vmatprep.subr.mxu0 0.0
        %1663 = vmatpush1.msra.mxu0 0.0
        %1664 = vmatprep.subr.mxu0 0.0
        %1665 = vmatpush1.msra.mxu0 0.0
        %1666 = vmatprep.subr.mxu0 0.0
        %1667 = vmatpush1.msra.mxu0 0.0
        %1668 = vmatprep.subr.mxu0 0.0
        %1669 = vmatpush1.msra.mxu0 0.0
        %1670 = vmatprep.subr.mxu0 0.0
        %1671 = vmatpush1.msra.mxu0 0.0
        %1672 = vmatprep.subr.mxu0 0.0
        %1673 = vmatpush1.msra.mxu0 0.0
        %1674 = vmatprep.subr.mxu0 0.0
        %1675 = vmatpush1.msra.mxu0 0.0
        %1676 = vmatprep.subr.mxu0 0.0
        %1677 = vmatpush1.msra.mxu0 0.0
        %1678 = vmatprep.subr.mxu0 0.0
        %1679 = vmatpush1.msra.mxu0 0.0
        %1680 = vmatprep.subr.mxu0 0.0
        %1681 = vmatpush1.msra.mxu0 0.0
        %1682 = vmatprep.subr.mxu0 0.0
        %1683 = vmatpush1.msra.mxu0 0.0
        %1684 = vmatprep.subr.mxu0 0.0
        %1685 = vmatpush1.msra.mxu0 0.0
        %1686 = vmatprep.subr.mxu0 0.0
        %1687 = vmatpush1.msra.mxu0 0.0
        %1688 = vmatprep.subr.mxu0 0.0
        %1689 = vmatpush1.msra.mxu0 0.0
        %1690 = vmatprep.subr.mxu0 0.0
        %1691 = vmatpush1.msra.mxu0 0.0
        %1692 = vmatprep.subr.mxu0 0.0
        %1693 = vmatpush1.msra.mxu0 0.0
        %1694 = vmatprep.subr.mxu0 0.0
        %1695 = vmatpush1.msra.mxu0 0.0
        %1696 = vmatprep.subr.mxu0 0.0
        %1697 = vmatpush1.msra.mxu0 0.0
        %1698 = vmatprep.subr.mxu0 0.0
        %1699 = vmatpush1.msra.mxu0 0.0
        %1700 = vmatprep.subr.mxu0 0.0
        %1701 = vmatpush1.msra.mxu0 0.0
        %1702 = vmatprep.subr.mxu0 0.0
        %1703 = vmatpush1.msra.mxu0 0.0
        %1704 = vmatprep.mubr.f32.mxu0 0.0
        %1705 = vmatmul.mubr.f32.gmra.mrb[0].mxu0 %v1638
        %v1706 = vpop.f32.mrb[0].mxu0
        %v1707 = vadd.f32 0.0, %v1706
        %v1708 = vpop.f32.mrb[0].mxu0
        %1709 = vdwg.mxu0
        %v1711 = vsel %vm1123, %v1490, 0
        %1713 = vmatprep.subr.mxu0 0.0
        %1714 = vmatpush1.msra.mxu0 %v1117
        %1715 = vmatprep.subr.mxu0 0.0
        %1716 = vmatpush1.msra.mxu0 0.0
        %1717 = vmatprep.subr.mxu0 0.0
        %1718 = vmatpush1.msra.mxu0 0.0
        %1719 = vmatprep.subr.mxu0 0.0
        %1720 = vmatpush1.msra.mxu0 0.0
        %1721 = vmatprep.subr.mxu0 0.0
        %1722 = vmatpush1.msra.mxu0 0.0
        %1723 = vmatprep.subr.mxu0 0.0
        %1724 = vmatpush1.msra.mxu0 0.0
        %1725 = vmatprep.subr.mxu0 0.0
        %1726 = vmatpush1.msra.mxu0 0.0
        %1727 = vmatprep.subr.mxu0 0.0
        %1728 = vmatpush1.msra.mxu0 0.0
        %1729 = vmatprep.subr.mxu0 0.0
        %1730 = vmatpush1.msra.mxu0 0.0
        %1731 = vmatprep.subr.mxu0 0.0
        %1732 = vmatpush1.msra.mxu0 0.0
        %1733 = vmatprep.subr.mxu0 0.0
        %1734 = vmatpush1.msra.mxu0 0.0
        %1735 = vmatprep.subr.mxu0 0.0
        %1736 = vmatpush1.msra.mxu0 0.0
        %1737 = vmatprep.subr.mxu0 0.0
        %1738 = vmatpush1.msra.mxu0 0.0
        %1739 = vmatprep.subr.mxu0 0.0
        %1740 = vmatpush1.msra.mxu0 0.0
        %1741 = vmatprep.subr.mxu0 0.0
        %1742 = vmatpush1.msra.mxu0 0.0
        %1743 = vmatprep.subr.mxu0 0.0
        %1744 = vmatpush1.msra.mxu0 0.0
        %1745 = vmatprep.subr.mxu0 0.0
        %1746 = vmatpush1.msra.mxu0 0.0
        %1747 = vmatprep.subr.mxu0 0.0
        %1748 = vmatpush1.msra.mxu0 0.0
        %1749 = vmatprep.subr.mxu0 0.0
        %1750 = vmatpush1.msra.mxu0 0.0
        %1751 = vmatprep.subr.mxu0 0.0
        %1752 = vmatpush1.msra.mxu0 0.0
        %1753 = vmatprep.subr.mxu0 0.0
        %1754 = vmatpush1.msra.mxu0 0.0
        %1755 = vmatprep.subr.mxu0 0.0
        %1756 = vmatpush1.msra.mxu0 0.0
        %1757 = vmatprep.subr.mxu0 0.0
        %1758 = vmatpush1.msra.mxu0 0.0
        %1759 = vmatprep.subr.mxu0 0.0
        %1760 = vmatpush1.msra.mxu0 0.0
        %1761 = vmatprep.subr.mxu0 0.0
        %1762 = vmatpush1.msra.mxu0 0.0
        %1763 = vmatprep.subr.mxu0 0.0
        %1764 = vmatpush1.msra.mxu0 0.0
        %1765 = vmatprep.subr.mxu0 0.0
        %1766 = vmatpush1.msra.mxu0 0.0
        %1767 = vmatprep.subr.mxu0 0.0
        %1768 = vmatpush1.msra.mxu0 0.0
        %1769 = vmatprep.subr.mxu0 0.0
        %1770 = vmatpush1.msra.mxu0 0.0
        %1771 = vmatprep.subr.mxu0 0.0
        %1772 = vmatpush1.msra.mxu0 0.0
        %1773 = vmatprep.subr.mxu0 0.0
        %1774 = vmatpush1.msra.mxu0 0.0
        %1775 = vmatprep.subr.mxu0 0.0
        %1776 = vmatpush1.msra.mxu0 0.0
        %1777 = vmatprep.mubr.f32.mxu0 0.0
        %1778 = vmatmul.mubr.f32.gmra.mrb[0].mxu0 %v1711
        %v1779 = vpop.f32.mrb[0].mxu0
        %v1780 = vadd.f32 0.0, %v1779
        %v1781 = vpop.f32.mrb[0].mxu0
        %1782 = vdwg.mxu0
        %v1783 = vld [vmem:[%s6] sm:$0xff]
        %v1784 = vld [vmem:[%s6 + $0x8] sm:$0xff]
        %v1785 = vld [vmem:[%s6 + $0x10] sm:$0xff]
        %v1786 = vld [vmem:[%s6 + $0x18] sm:$0xff]
        %v1788 = vrot.slane %v1561, 3
        %v1791 = vrot.slane %v1634, 6
        %v1793 = vrot.slane %v1634, 1
        %v1796 = vrot.slane %v1707, 4
        %v1798 = vrot.slane %v1707, 7
        %v1801 = vrot.slane %v1780, 2
        %v1803 = vrot.slane %v1780, 5
        %v1805 = vsel %vm1022, %v1561, %v1788
        %v1806 = vsel %vm1024, %v1805, %v1791
        %v1807 = vsel %vm1026, %v1806, %v1793
        %v1808 = vsel %vm1028, %v1807, %v1796
        %v1809 = vsel %vm1030, %v1808, %v1798
        %v1810 = vsel %vm1032, %v1809, %v1801
        %v1811 = vsel %vm1034, %v1810, %v1803
        %v1812 = vrot.slane %v1561, 1
        %v1814 = vrot.slane %v1561, 4
        %v1816 = vrot.slane %v1634, 7
        %v1818 = vrot.slane %v1634, 2
        %v1820 = vrot.slane %v1707, 5
        %v1822 = vrot.slane %v1780, 3
        %v1824 = vrot.slane %v1780, 6
        %v1826 = vsel %vm1022, %v1812, %v1814
        %v1827 = vsel %vm1024, %v1826, %v1816
        %v1828 = vsel %vm1026, %v1827, %v1818
        %v1829 = vsel %vm1028, %v1828, %v1820
        %v1830 = vsel %vm1030, %v1829, %v1707
        %v1831 = vsel %vm1032, %v1830, %v1822
        %v1832 = vsel %vm1034, %v1831, %v1824
        %v1834 = vsel %vm1123, %v1832, 0
        %1836 = vmatprep.subr.mxu0 0.0
        %1837 = vmatpush1.msra.mxu0 %v1784
        %1838 = vmatprep.subr.mxu0 0.0
        %1839 = vmatpush1.msra.mxu0 0.0
        %1840 = vmatprep.subr.mxu0 0.0
        %1841 = vmatpush1.msra.mxu0 0.0
        %1842 = vmatprep.subr.mxu0 0.0
        %1843 = vmatpush1.msra.mxu0 0.0
        %1844 = vmatprep.subr.mxu0 0.0
        %1845 = vmatpush1.msra.mxu0 0.0
        %1846 = vmatprep.subr.mxu0 0.0
        %1847 = vmatpush1.msra.mxu0 0.0
        %1848 = vmatprep.subr.mxu0 0.0
        %1849 = vmatpush1.msra.mxu0 0.0
        %1850 = vmatprep.subr.mxu0 0.0
        %1851 = vmatpush1.msra.mxu0 0.0
        %1852 = vmatprep.subr.mxu0 0.0
        %1853 = vmatpush1.msra.mxu0 0.0
        %1854 = vmatprep.subr.mxu0 0.0
        %1855 = vmatpush1.msra.mxu0 0.0
        %1856 = vmatprep.subr.mxu0 0.0
        %1857 = vmatpush1.msra.mxu0 0.0
        %1858 = vmatprep.subr.mxu0 0.0
        %1859 = vmatpush1.msra.mxu0 0.0
        %1860 = vmatprep.subr.mxu0 0.0
        %1861 = vmatpush1.msra.mxu0 0.0
        %1862 = vmatprep.subr.mxu0 0.0
        %1863 = vmatpush1.msra.mxu0 0.0
        %1864 = vmatprep.subr.mxu0 0.0
        %1865 = vmatpush1.msra.mxu0 0.0
        %1866 = vmatprep.subr.mxu0 0.0
        %1867 = vmatpush1.msra.mxu0 0.0
        %1868 = vmatprep.subr.mxu0 0.0
        %1869 = vmatpush1.msra.mxu0 0.0
        %1870 = vmatprep.subr.mxu0 0.0
        %1871 = vmatpush1.msra.mxu0 0.0
        %1872 = vmatprep.subr.mxu0 0.0
        %1873 = vmatpush1.msra.mxu0 0.0
        %1874 = vmatprep.subr.mxu0 0.0
        %1875 = vmatpush1.msra.mxu0 0.0
        %1876 = vmatprep.subr.mxu0 0.0
        %1877 = vmatpush1.msra.mxu0 0.0
        %1878 = vmatprep.subr.mxu0 0.0
        %1879 = vmatpush1.msra.mxu0 0.0
        %1880 = vmatprep.subr.mxu0 0.0
        %1881 = vmatpush1.msra.mxu0 0.0
        %1882 = vmatprep.subr.mxu0 0.0
        %1883 = vmatpush1.msra.mxu0 0.0
        %1884 = vmatprep.subr.mxu0 0.0
        %1885 = vmatpush1.msra.mxu0 0.0
        %1886 = vmatprep.subr.mxu0 0.0
        %1887 = vmatpush1.msra.mxu0 0.0
        %1888 = vmatprep.subr.mxu0 0.0
        %1889 = vmatpush1.msra.mxu0 0.0
        %1890 = vmatprep.subr.mxu0 0.0
        %1891 = vmatpush1.msra.mxu0 0.0
        %1892 = vmatprep.subr.mxu0 0.0
        %1893 = vmatpush1.msra.mxu0 0.0
        %1894 = vmatprep.subr.mxu0 0.0
        %1895 = vmatpush1.msra.mxu0 0.0
        %1896 = vmatprep.subr.mxu0 0.0
        %1897 = vmatpush1.msra.mxu0 0.0
        %1898 = vmatprep.subr.mxu0 0.0
        %1899 = vmatpush1.msra.mxu0 0.0
        %1900 = vmatprep.mubr.f32.mxu0 0.0
        %1901 = vmatmul.mubr.f32.gmra.mrb[0].mxu0 %v1834
        %v1902 = vpop.f32.mrb[0].mxu0
        %v1903 = vadd.f32 0.0, %v1902
        %v1904 = vpop.f32.mrb[0].mxu0
        %1905 = vdwg.mxu0
        %v1907 = vsel %vm1123, %v1811, 0
        %1909 = vmatprep.subr.mxu0 0.0
        %1910 = vmatpush1.msra.mxu0 %v1783
        %1911 = vmatprep.subr.mxu0 0.0
        %1912 = vmatpush1.msra.mxu0 0.0
        %1913 = vmatprep.subr.mxu0 0.0
        %1914 = vmatpush1.msra.mxu0 0.0
        %1915 = vmatprep.subr.mxu0 0.0
        %1916 = vmatpush1.msra.mxu0 0.0
        %1917 = vmatprep.subr.mxu0 0.0
        %1918 = vmatpush1.msra.mxu0 0.0
        %1919 = vmatprep.subr.mxu0 0.0
        %1920 = vmatpush1.msra.mxu0 0.0
        %1921 = vmatprep.subr.mxu0 0.0
        %1922 = vmatpush1.msra.mxu0 0.0
        %1923 = vmatprep.subr.mxu0 0.0
        %1924 = vmatpush1.msra.mxu0 0.0
        %1925 = vmatprep.subr.mxu0 0.0
        %1926 = vmatpush1.msra.mxu0 0.0
        %1927 = vmatprep.subr.mxu0 0.0
        %1928 = vmatpush1.msra.mxu0 0.0
        %1929 = vmatprep.subr.mxu0 0.0
        %1930 = vmatpush1.msra.mxu0 0.0
        %1931 = vmatprep.subr.mxu0 0.0
        %1932 = vmatpush1.msra.mxu0 0.0
        %1933 = vmatprep.subr.mxu0 0.0
        %1934 = vmatpush1.msra.mxu0 0.0
        %1935 = vmatprep.subr.mxu0 0.0
        %1936 = vmatpush1.msra.mxu0 0.0
        %1937 = vmatprep.subr.mxu0 0.0
        %1938 = vmatpush1.msra.mxu0 0.0
        %1939 = vmatprep.subr.mxu0 0.0
        %1940 = vmatpush1.msra.mxu0 0.0
        %1941 = vmatprep.subr.mxu0 0.0
        %1942 = vmatpush1.msra.mxu0 0.0
        %1943 = vmatprep.subr.mxu0 0.0
        %1944 = vmatpush1.msra.mxu0 0.0
        %1945 = vmatprep.subr.mxu0 0.0
        %1946 = vmatpush1.msra.mxu0 0.0
        %1947 = vmatprep.subr.mxu0 0.0
        %1948 = vmatpush1.msra.mxu0 0.0
        %1949 = vmatprep.subr.mxu0 0.0
        %1950 = vmatpush1.msra.mxu0 0.0
        %1951 = vmatprep.subr.mxu0 0.0
        %1952 = vmatpush1.msra.mxu0 0.0
        %1953 = vmatprep.subr.mxu0 0.0
        %1954 = vmatpush1.msra.mxu0 0.0
        %1955 = vmatprep.subr.mxu0 0.0
        %1956 = vmatpush1.msra.mxu0 0.0
        %1957 = vmatprep.subr.mxu0 0.0
        %1958 = vmatpush1.msra.mxu0 0.0
        %1959 = vmatprep.subr.mxu0 0.0
        %1960 = vmatpush1.msra.mxu0 0.0
        %1961 = vmatprep.subr.mxu0 0.0
        %1962 = vmatpush1.msra.mxu0 0.0
        %1963 = vmatprep.subr.mxu0 0.0
        %1964 = vmatpush1.msra.mxu0 0.0
        %1965 = vmatprep.subr.mxu0 0.0
        %1966 = vmatpush1.msra.mxu0 0.0
        %1967 = vmatprep.subr.mxu0 0.0
        %1968 = vmatpush1.msra.mxu0 0.0
        %1969 = vmatprep.subr.mxu0 0.0
        %1970 = vmatpush1.msra.mxu0 0.0
        %1971 = vmatprep.subr.mxu0 0.0
        %1972 = vmatpush1.msra.mxu0 0.0
        %1973 = vmatprep.mubr.f32.mxu0 0.0
        %1974 = vmatmul.mubr.f32.gmra.mrb[0].mxu0 %v1907
        %v1975 = vpop.f32.mrb[0].mxu0
        %v1976 = vadd.f32 %v1903, %v1975
        %v1977 = vpop.f32.mrb[0].mxu0
        %1978 = vdwg.mxu0
        %v1979 = vrot.slane %v1561, 2
        %v1981 = vrot.slane %v1561, 5
        %v1983 = vrot.slane %v1634, 3
        %v1985 = vrot.slane %v1707, 6
        %v1987 = vrot.slane %v1707, 1
        %v1989 = vrot.slane %v1780, 4
        %v1991 = vrot.slane %v1780, 7
        %v1993 = vsel %vm1022, %v1979, %v1981
        %v1994 = vsel %vm1024, %v1993, %v1634
        %v1995 = vsel %vm1026, %v1994, %v1983
        %v1996 = vsel %vm1028, %v1995, %v1985
        %v1997 = vsel %vm1030, %v1996, %v1987
        %v1998 = vsel %vm1032, %v1997, %v1989
        %v1999 = vsel %vm1034, %v1998, %v1991
        %v2001 = vsel %vm1123, %v1999, 0
        %2003 = vmatprep.subr.mxu0 0.0
        %2004 = vmatpush1.msra.mxu0 %v1785
        %2005 = vmatprep.subr.mxu0 0.0
        %2006 = vmatpush1.msra.mxu0 0.0
        %2007 = vmatprep.subr.mxu0 0.0
        %2008 = vmatpush1.msra.mxu0 0.0
        %2009 = vmatprep.subr.mxu0 0.0
        %2010 = vmatpush1.msra.mxu0 0.0
        %2011 = vmatprep.subr.mxu0 0.0
        %2012 = vmatpush1.msra.mxu0 0.0
        %2013 = vmatprep.subr.mxu0 0.0
        %2014 = vmatpush1.msra.mxu0 0.0
        %2015 = vmatprep.subr.mxu0 0.0
        %2016 = vmatpush1.msra.mxu0 0.0
        %2017 = vmatprep.subr.mxu0 0.0
        %2018 = vmatpush1.msra.mxu0 0.0
        %2019 = vmatprep.subr.mxu0 0.0
        %2020 = vmatpush1.msra.mxu0 0.0
        %2021 = vmatprep.subr.mxu0 0.0
        %2022 = vmatpush1.msra.mxu0 0.0
        %2023 = vmatprep.subr.mxu0 0.0
        %2024 = vmatpush1.msra.mxu0 0.0
        %2025 = vmatprep.subr.mxu0 0.0
        %2026 = vmatpush1.msra.mxu0 0.0
        %2027 = vmatprep.subr.mxu0 0.0
        %2028 = vmatpush1.msra.mxu0 0.0
        %2029 = vmatprep.subr.mxu0 0.0
        %2030 = vmatpush1.msra.mxu0 0.0
        %2031 = vmatprep.subr.mxu0 0.0
        %2032 = vmatpush1.msra.mxu0 0.0
        %2033 = vmatprep.subr.mxu0 0.0
        %2034 = vmatpush1.msra.mxu0 0.0
        %2035 = vmatprep.subr.mxu0 0.0
        %2036 = vmatpush1.msra.mxu0 0.0
        %2037 = vmatprep.subr.mxu0 0.0
        %2038 = vmatpush1.msra.mxu0 0.0
        %2039 = vmatprep.subr.mxu0 0.0
        %2040 = vmatpush1.msra.mxu0 0.0
        %2041 = vmatprep.subr.mxu0 0.0
        %2042 = vmatpush1.msra.mxu0 0.0
        %2043 = vmatprep.subr.mxu0 0.0
        %2044 = vmatpush1.msra.mxu0 0.0
        %2045 = vmatprep.subr.mxu0 0.0
        %2046 = vmatpush1.msra.mxu0 0.0
        %2047 = vmatprep.subr.mxu0 0.0
        %2048 = vmatpush1.msra.mxu0 0.0
        %2049 = vmatprep.subr.mxu0 0.0
        %2050 = vmatpush1.msra.mxu0 0.0
        %2051 = vmatprep.subr.mxu0 0.0
        %2052 = vmatpush1.msra.mxu0 0.0
        %2053 = vmatprep.subr.mxu0 0.0
        %2054 = vmatpush1.msra.mxu0 0.0
        %2055 = vmatprep.subr.mxu0 0.0
        %2056 = vmatpush1.msra.mxu0 0.0
        %2057 = vmatprep.subr.mxu0 0.0
        %2058 = vmatpush1.msra.mxu0 0.0
        %2059 = vmatprep.subr.mxu0 0.0
        %2060 = vmatpush1.msra.mxu0 0.0
        %2061 = vmatprep.subr.mxu0 0.0
        %2062 = vmatpush1.msra.mxu0 0.0
        %2063 = vmatprep.subr.mxu0 0.0
        %2064 = vmatpush1.msra.mxu0 0.0
        %2065 = vmatprep.subr.mxu0 0.0
        %2066 = vmatpush1.msra.mxu0 0.0
        %2067 = vmatprep.mubr.f32.mxu0 0.0
        %2068 = vmatmul.mubr.f32.gmra.mrb[0].mxu0 %v2001
        %v2069 = vpop.f32.mrb[0].mxu0
        %v2070 = vadd.f32 0.0, %v2069
        %v2071 = vpop.f32.mrb[0].mxu0
        %2072 = vdwg.mxu0
        %v2073 = vadd.f32 %v1976, %v2070
        %v2074 = vrot.slane %v1561, 6
        %v2076 = vrot.slane %v1634, 4
        %v2078 = vrot.slane %v1707, 2
        %v2080 = vsel %vm1022, %v1788, %v2074
        %v2081 = vsel %vm1024, %v2080, %v1793
        %v2082 = vsel %vm1026, %v2081, %v2076
        %v2083 = vsel %vm1028, %v2082, %v1798
        %v2084 = vsel %vm1030, %v2083, %v2078
        %v2085 = vsel %vm1032, %v2084, %v1803
        %v2086 = vsel %vm1034, %v2085, %v1780
        %v2088 = vsel %vm1123, %v2086, 0
        %2090 = vmatprep.subr.mxu0 0.0
        %2091 = vmatpush1.msra.mxu0 %v1786
        %2092 = vmatprep.subr.mxu0 0.0
        %2093 = vmatpush1.msra.mxu0 0.0
        %2094 = vmatprep.subr.mxu0 0.0
        %2095 = vmatpush1.msra.mxu0 0.0
        %2096 = vmatprep.subr.mxu0 0.0
        %2097 = vmatpush1.msra.mxu0 0.0
        %2098 = vmatprep.subr.mxu0 0.0
        %2099 = vmatpush1.msra.mxu0 0.0
        %2100 = vmatprep.subr.mxu0 0.0
        %2101 = vmatpush1.msra.mxu0 0.0
        %2102 = vmatprep.subr.mxu0 0.0
        %2103 = vmatpush1.msra.mxu0 0.0
        %2104 = vmatprep.subr.mxu0 0.0
        %2105 = vmatpush1.msra.mxu0 0.0
        %2106 = vmatprep.subr.mxu0 0.0
        %2107 = vmatpush1.msra.mxu0 0.0
        %2108 = vmatprep.subr.mxu0 0.0
        %2109 = vmatpush1.msra.mxu0 0.0
        %2110 = vmatprep.subr.mxu0 0.0
        %2111 = vmatpush1.msra.mxu0 0.0
        %2112 = vmatprep.subr.mxu0 0.0
        %2113 = vmatpush1.msra.mxu0 0.0
        %2114 = vmatprep.subr.mxu0 0.0
        %2115 = vmatpush1.msra.mxu0 0.0
        %2116 = vmatprep.subr.mxu0 0.0
        %2117 = vmatpush1.msra.mxu0 0.0
        %2118 = vmatprep.subr.mxu0 0.0
        %2119 = vmatpush1.msra.mxu0 0.0
        %2120 = vmatprep.subr.mxu0 0.0
        %2121 = vmatpush1.msra.mxu0 0.0
        %2122 = vmatprep.subr.mxu0 0.0
        %2123 = vmatpush1.msra.mxu0 0.0
        %2124 = vmatprep.subr.mxu0 0.0
        %2125 = vmatpush1.msra.mxu0 0.0
        %2126 = vmatprep.subr.mxu0 0.0
        %2127 = vmatpush1.msra.mxu0 0.0
        %2128 = vmatprep.subr.mxu0 0.0
        %2129 = vmatpush1.msra.mxu0 0.0
        %2130 = vmatprep.subr.mxu0 0.0
        %2131 = vmatpush1.msra.mxu0 0.0
        %2132 = vmatprep.subr.mxu0 0.0
        %2133 = vmatpush1.msra.mxu0 0.0
        %2134 = vmatprep.subr.mxu0 0.0
        %2135 = vmatpush1.msra.mxu0 0.0
        %2136 = vmatprep.subr.mxu0 0.0
        %2137 = vmatpush1.msra.mxu0 0.0
        %2138 = vmatprep.subr.mxu0 0.0
        %2139 = vmatpush1.msra.mxu0 0.0
        %2140 = vmatprep.subr.mxu0 0.0
        %2141 = vmatpush1.msra.mxu0 0.0
        %2142 = vmatprep.subr.mxu0 0.0
        %2143 = vmatpush1.msra.mxu0 0.0
        %2144 = vmatprep.subr.mxu0 0.0
        %2145 = vmatpush1.msra.mxu0 0.0
        %2146 = vmatprep.subr.mxu0 0.0
        %2147 = vmatpush1.msra.mxu0 0.0
        %2148 = vmatprep.subr.mxu0 0.0
        %2149 = vmatpush1.msra.mxu0 0.0
        %2150 = vmatprep.subr.mxu0 0.0
        %2151 = vmatpush1.msra.mxu0 0.0
        %2152 = vmatprep.subr.mxu0 0.0
        %2153 = vmatpush1.msra.mxu0 0.0
        %2154 = vmatprep.mubr.f32.mxu0 0.0
        %2155 = vmatmul.mubr.f32.gmra.mrb[0].mxu0 %v2088
        %v2156 = vpop.f32.mrb[0].mxu0
        %v2157 = vadd.f32 0.0, %v2156
        %v2158 = vpop.f32.mrb[0].mxu0
        %2159 = vdwg.mxu0
        %v2160 = vadd.f32 %v2073, %v2157
        %v2161 = vld [vmem:[#allocation11] sm:$0x1]
        %v2163 = vlaneseq
        %v2164 = vshrl.u32 %v2163, 7
        %v2165 = vsub.s32 0, %v2164
        %v2166 = vrot.slane %v2161, %v2165
        %v2168 = vadd.f32 %v2160, %v2166
        %v2169 = vadd.f32 %v910, %v2168
        %v2170 = vld [vmem:[#allocation13] sm:$0x1]
        %v2171 = vld [vmem:[#allocation14] sm:$0x1]
        %v2172 = vsel %vm922, %v2169, 0.0
        %2173 = vadd.xlane.f32.xlu0 %v2172
        %v2174 = vpop.xlane.xlu0 %2173
        %v2175 = vrcp.pop 32.0
        %v2176 = vmul.f32 %v2174, %v2175
        %v2177 = vsub.f32 %v2169, %v2176
        %v2178 = vmul.f32 %v2177, %v2177
        %v2179 = vsel %vm922, %v2178, 0.0
        %2180 = vadd.xlane.f32.xlu0 %v2179
        %v2181 = vpop.xlane.xlu0 %2180
        %v2182 = vmul.f32 %v2181, %v2175
        %v2183 = vadd.f32 %v2182, 1e-05
        %v2184 = vrsqrt.pop %v2183
        %v2185 = vmul.f32 %v2177, %v2184
        %v2187 = vlaneseq
        %v2188 = vshrl.u32 %v2187, 7
        %v2189 = vsub.s32 0, %v2188
        %v2190 = vrot.slane %v2170, %v2189
        %v2192 = vmul.f32 %v2185, %v2190
        %v2194 = vlaneseq
        %v2195 = vshrl.u32 %v2194, 7
        %v2196 = vsub.s32 0, %v2195
        %v2197 = vrot.slane %v2171, %v2196
        %v2199 = vadd.f32 %v2192, %v2197
        %v2200 = vld [vmem:[%s786] sm:$0xff]
        %v2201 = vld [vmem:[%s795] sm:$0xff]
        %v2202 = vld [vmem:[%s10] sm:$0xff]
        %v2203 = vld [vmem:[%s10 + $0x8] sm:$0xff]
        %v2204 = vld [vmem:[%s10 + $0x10] sm:$0xff]
        %v2205 = vld [vmem:[%s10 + $0x18] sm:$0xff]
        %v2206 = vld [vmem:[#allocation16] sm:$0x1]
        %v2208 = vlaneseq
        %v2209 = vshrl.u32 %v2208, 7
        %v2210 = vsub.s32 0, %v2209
        %v2211 = vrot.slane %v2206, %v2210
        %v2214 = vsel %vm922, %v2199, 0
        %2216 = vmatprep.subr.mxu0 0.0
        %2217 = vmatpush1.msra.mxu0 %v2202
        %2218 = vmatprep.subr.mxu0 0.0
        %2219 = vmatpush1.msra.mxu0 %v2203
        %2220 = vmatprep.subr.mxu0 0.0
        %2221 = vmatpush1.msra.mxu0 %v2204
        %2222 = vmatprep.subr.mxu0 0.0
        %2223 = vmatpush1.msra.mxu0 %v2205
        %2224 = vmatprep.subr.mxu0 0.0
        %2225 = vmatpush1.msra.mxu0 0.0
        %2226 = vmatprep.subr.mxu0 0.0
        %2227 = vmatpush1.msra.mxu0 0.0
        %2228 = vmatprep.subr.mxu0 0.0
        %2229 = vmatpush1.msra.mxu0 0.0
        %2230 = vmatprep.subr.mxu0 0.0
        %2231 = vmatpush1.msra.mxu0 0.0
        %2232 = vmatprep.subr.mxu0 0.0
        %2233 = vmatpush1.msra.mxu0 0.0
        %2234 = vmatprep.subr.mxu0 0.0
        %2235 = vmatpush1.msra.mxu0 0.0
        %2236 = vmatprep.subr.mxu0 0.0
        %2237 = vmatpush1.msra.mxu0 0.0
        %2238 = vmatprep.subr.mxu0 0.0
        %2239 = vmatpush1.msra.mxu0 0.0
        %2240 = vmatprep.subr.mxu0 0.0
        %2241 = vmatpush1.msra.mxu0 0.0
        %2242 = vmatprep.subr.mxu0 0.0
        %2243 = vmatpush1.msra.mxu0 0.0
        %2244 = vmatprep.subr.mxu0 0.0
        %2245 = vmatpush1.msra.mxu0 0.0
        %2246 = vmatprep.subr.mxu0 0.0
        %2247 = vmatpush1.msra.mxu0 0.0
        %2248 = vmatprep.subr.mxu0 0.0
        %2249 = vmatpush1.msra.mxu0 0.0
        %2250 = vmatprep.subr.mxu0 0.0
        %2251 = vmatpush1.msra.mxu0 0.0
        %2252 = vmatprep.subr.mxu0 0.0
        %2253 = vmatpush1.msra.mxu0 0.0
        %2254 = vmatprep.subr.mxu0 0.0
        %2255 = vmatpush1.msra.mxu0 0.0
        %2256 = vmatprep.subr.mxu0 0.0
        %2257 = vmatpush1.msra.mxu0 0.0
        %2258 = vmatprep.subr.mxu0 0.0
        %2259 = vmatpush1.msra.mxu0 0.0
        %2260 = vmatprep.subr.mxu0 0.0
        %2261 = vmatpush1.msra.mxu0 0.0
        %2262 = vmatprep.subr.mxu0 0.0
        %2263 = vmatpush1.msra.mxu0 0.0
        %2264 = vmatprep.subr.mxu0 0.0
        %2265 = vmatpush1.msra.mxu0 0.0
        %2266 = vmatprep.subr.mxu0 0.0
        %2267 = vmatpush1.msra.mxu0 0.0
        %2268 = vmatprep.subr.mxu0 0.0
        %2269 = vmatpush1.msra.mxu0 0.0
        %2270 = vmatprep.subr.mxu0 0.0
        %2271 = vmatpush1.msra.mxu0 0.0
        %2272 = vmatprep.subr.mxu0 0.0
        %2273 = vmatpush1.msra.mxu0 0.0
        %2274 = vmatprep.subr.mxu0 0.0
        %2275 = vmatpush1.msra.mxu0 0.0
        %2276 = vmatprep.subr.mxu0 0.0
        %2277 = vmatpush1.msra.mxu0 0.0
        %2278 = vmatprep.subr.mxu0 0.0
        %2279 = vmatpush1.msra.mxu0 0.0
        %2280 = vmatprep.mubr.f32.mxu0 0.0
        %2281 = vmatmul.mubr.f32.gmra.mrb[0].mxu0 %v2214
        %v2282 = vpop.f32.mrb[0].mxu0
        %v2283 = vadd.f32 %v2211, %v2282
        %v2284 = vpop.f32.mrb[0].mxu0
        %2285 = vdwg.mxu0
        %v2287 = vsel %vm922, %v2200, 0
        %2289 = vmatprep.subr.mxu0 0.0
        %2290 = vmatpush1.msra.mxu0 %v2202
        %2291 = vmatprep.subr.mxu0 0.0
        %2292 = vmatpush1.msra.mxu0 %v2203
        %2293 = vmatprep.subr.mxu0 0.0
        %2294 = vmatpush1.msra.mxu0 %v2204
        %2295 = vmatprep.subr.mxu0 0.0
        %2296 = vmatpush1.msra.mxu0 %v2205
        %2297 = vmatprep.subr.mxu0 0.0
        %2298 = vmatpush1.msra.mxu0 0.0
        %2299 = vmatprep.subr.mxu0 0.0
        %2300 = vmatpush1.msra.mxu0 0.0
        %2301 = vmatprep.subr.mxu0 0.0
        %2302 = vmatpush1.msra.mxu0 0.0
        %2303 = vmatprep.subr.mxu0 0.0
        %2304 = vmatpush1.msra.mxu0 0.0
        %2305 = vmatprep.subr.mxu0 0.0
        %2306 = vmatpush1.msra.mxu0 0.0
        %2307 = vmatprep.subr.mxu0 0.0
        %2308 = vmatpush1.msra.mxu0 0.0
        %2309 = vmatprep.subr.mxu0 0.0
        %2310 = vmatpush1.msra.mxu0 0.0
        %2311 = vmatprep.subr.mxu0 0.0
        %2312 = vmatpush1.msra.mxu0 0.0
        %2313 = vmatprep.subr.mxu0 0.0
        %2314 = vmatpush1.msra.mxu0 0.0
        %2315 = vmatprep.subr.mxu0 0.0
        %2316 = vmatpush1.msra.mxu0 0.0
        %2317 = vmatprep.subr.mxu0 0.0
        %2318 = vmatpush1.msra.mxu0 0.0
        %2319 = vmatprep.subr.mxu0 0.0
        %2320 = vmatpush1.msra.mxu0 0.0
        %2321 = vmatprep.subr.mxu0 0.0
        %2322 = vmatpush1.msra.mxu0 0.0
        %2323 = vmatprep.subr.mxu0 0.0
        %2324 = vmatpush1.msra.mxu0 0.0
        %2325 = vmatprep.subr.mxu0 0.0
        %2326 = vmatpush1.msra.mxu0 0.0
        %2327 = vmatprep.subr.mxu0 0.0
        %2328 = vmatpush1.msra.mxu0 0.0
        %2329 = vmatprep.subr.mxu0 0.0
        %2330 = vmatpush1.msra.mxu0 0.0
        %2331 = vmatprep.subr.mxu0 0.0
        %2332 = vmatpush1.msra.mxu0 0.0
        %2333 = vmatprep.subr.mxu0 0.0
        %2334 = vmatpush1.msra.mxu0 0.0
        %2335 = vmatprep.subr.mxu0 0.0
        %2336 = vmatpush1.msra.mxu0 0.0
        %2337 = vmatprep.subr.mxu0 0.0
        %2338 = vmatpush1.msra.mxu0 0.0
        %2339 = vmatprep.subr.mxu0 0.0
        %2340 = vmatpush1.msra.mxu0 0.0
        %2341 = vmatprep.subr.mxu0 0.0
        %2342 = vmatpush1.msra.mxu0 0.0
        %2343 = vmatprep.subr.mxu0 0.0
        %2344 = vmatpush1.msra.mxu0 0.0
        %2345 = vmatprep.subr.mxu0 0.0
        %2346 = vmatpush1.msra.mxu0 0.0
        %2347 = vmatprep.subr.mxu0 0.0
        %2348 = vmatpush1.msra.mxu0 0.0
        %2349 = vmatprep.subr.mxu0 0.0
        %2350 = vmatpush1.msra.mxu0 0.0
        %2351 = vmatprep.subr.mxu0 0.0
        %2352 = vmatpush1.msra.mxu0 0.0
        %2353 = vmatprep.mubr.f32.mxu0 0.0
        %2354 = vmatmul.mubr.f32.gmra.mrb[0].mxu0 %v2287
        %v2355 = vpop.f32.mrb[0].mxu0
        %v2356 = vadd.f32 %v2211, %v2355
        %v2357 = vpop.f32.mrb[0].mxu0
        %2358 = vdwg.mxu0
        %v2360 = vsel %vm922, %v2201, 0
        %2362 = vmatprep.subr.mxu0 0.0
        %2363 = vmatpush1.msra.mxu0 %v2202
        %2364 = vmatprep.subr.mxu0 0.0
        %2365 = vmatpush1.msra.mxu0 %v2203
        %2366 = vmatprep.subr.mxu0 0.0
        %2367 = vmatpush1.msra.mxu0 %v2204
        %2368 = vmatprep.subr.mxu0 0.0
        %2369 = vmatpush1.msra.mxu0 %v2205
        %2370 = vmatprep.subr.mxu0 0.0
        %2371 = vmatpush1.msra.mxu0 0.0
        %2372 = vmatprep.subr.mxu0 0.0
        %2373 = vmatpush1.msra.mxu0 0.0
        %2374 = vmatprep.subr.mxu0 0.0
        %2375 = vmatpush1.msra.mxu0 0.0
        %2376 = vmatprep.subr.mxu0 0.0
        %2377 = vmatpush1.msra.mxu0 0.0
        %2378 = vmatprep.subr.mxu0 0.0
        %2379 = vmatpush1.msra.mxu0 0.0
        %2380 = vmatprep.subr.mxu0 0.0
        %2381 = vmatpush1.msra.mxu0 0.0
        %2382 = vmatprep.subr.mxu0 0.0
        %2383 = vmatpush1.msra.mxu0 0.0
        %2384 = vmatprep.subr.mxu0 0.0
        %2385 = vmatpush1.msra.mxu0 0.0
        %2386 = vmatprep.subr.mxu0 0.0
        %2387 = vmatpush1.msra.mxu0 0.0
        %2388 = vmatprep.subr.mxu0 0.0
        %2389 = vmatpush1.msra.mxu0 0.0
        %2390 = vmatprep.subr.mxu0 0.0
        %2391 = vmatpush1.msra.mxu0 0.0
        %2392 = vmatprep.subr.mxu0 0.0
        %2393 = vmatpush1.msra.mxu0 0.0
        %2394 = vmatprep.subr.mxu0 0.0
        %2395 = vmatpush1.msra.mxu0 0.0
        %2396 = vmatprep.subr.mxu0 0.0
        %2397 = vmatpush1.msra.mxu0 0.0
        %2398 = vmatprep.subr.mxu0 0.0
        %2399 = vmatpush1.msra.mxu0 0.0
        %2400 = vmatprep.subr.mxu0 0.0
        %2401 = vmatpush1.msra.mxu0 0.0
        %2402 = vmatprep.subr.mxu0 0.0
        %2403 = vmatpush1.msra.mxu0 0.0
        %2404 = vmatprep.subr.mxu0 0.0
        %2405 = vmatpush1.msra.mxu0 0.0
        %2406 = vmatprep.subr.mxu0 0.0
        %2407 = vmatpush1.msra.mxu0 0.0
        %2408 = vmatprep.subr.mxu0 0.0
        %2409 = vmatpush1.msra.mxu0 0.0
        %2410 = vmatprep.subr.mxu0 0.0
        %2411 = vmatpush1.msra.mxu0 0.0
        %2412 = vmatprep.subr.mxu0 0.0
        %2413 = vmatpush1.msra.mxu0 0.0
        %2414 = vmatprep.subr.mxu0 0.0
        %2415 = vmatpush1.msra.mxu0 0.0
        %2416 = vmatprep.subr.mxu0 0.0
        %2417 = vmatpush1.msra.mxu0 0.0
        %2418 = vmatprep.subr.mxu0 0.0
        %2419 = vmatpush1.msra.mxu0 0.0
        %2420 = vmatprep.subr.mxu0 0.0
        %2421 = vmatpush1.msra.mxu0 0.0
        %2422 = vmatprep.subr.mxu0 0.0
        %2423 = vmatpush1.msra.mxu0 0.0
        %2424 = vmatprep.subr.mxu0 0.0
        %2425 = vmatpush1.msra.mxu0 0.0
        %2426 = vmatprep.mubr.f32.mxu0 0.0
        %2427 = vmatmul.mubr.f32.gmra.mrb[0].mxu0 %v2360
        %v2428 = vpop.f32.mrb[0].mxu0
        %v2429 = vadd.f32 %v2211, %v2428
        %v2430 = vpop.f32.mrb[0].mxu0
        %2431 = vdwg.mxu0
        %v2433 = vrot.slane %v2283, 7
        %2434 = vrot.lane.b32.xlu0 %v2433, 120
        %v2435 = vpop.permute.xlu0 %2434
        %v2437 = vrot.slane %v2283, 6
        %2438 = vrot.lane.b32.xlu0 %v2437, 112
        %v2439 = vpop.permute.xlu0 %2438
        %v2441 = vrot.slane %v2283, 5
        %2442 = vrot.lane.b32.xlu0 %v2441, 104
        %v2443 = vpop.permute.xlu0 %2442
        %v2446 = vrot.slane %v2283, 4
        %2447 = vrot.lane.b32.xlu0 %v2446, 120
        %v2448 = vpop.permute.xlu0 %2447
        %v2450 = vrot.slane %v2283, 3
        %2451 = vrot.lane.b32.xlu0 %v2450, 112
        %v2452 = vpop.permute.xlu0 %2451
        %v2454 = vrot.slane %v2283, 2
        %2455 = vrot.lane.b32.xlu0 %v2454, 104
        %v2456 = vpop.permute.xlu0 %2455
        %v2458 = vsel %vm1022, %v2283, %v2435
        %v2459 = vsel %vm1024, %v2458, %v2439
        %v2460 = vsel %vm1026, %v2459, %v2443
        %v2461 = vsel %vm1028, %v2460, %v2441
        %v2462 = vsel %vm1030, %v2461, %v2448
        %v2463 = vsel %vm1032, %v2462, %v2452
        %v2464 = vsel %vm1034, %v2463, %v2456
        %v2466 = vrot.slane %v2283, 1
        %2467 = vrot.lane.b32.xlu0 %v2466, 120
        %v2468 = vpop.permute.xlu0 %2467
        %2470 = vrot.lane.b32.xlu0 %v2283, 112
        %v2471 = vpop.permute.xlu0 %2470
        %2473 = vrot.lane.b32.xlu0 %v2433, 104
        %v2474 = vpop.permute.xlu0 %2473
        %2477 = vrot.lane.b32.xlu0 %v2437, 120
        %v2478 = vpop.permute.xlu0 %2477
        %2480 = vrot.lane.b32.xlu0 %v2441, 112
        %v2481 = vpop.permute.xlu0 %2480
        %2483 = vrot.lane.b32.xlu0 %v2446, 104
        %v2484 = vpop.permute.xlu0 %2483
        %v2486 = vsel %vm1022, %v2454, %v2468
        %v2487 = vsel %vm1024, %v2486, %v2471
        %v2488 = vsel %vm1026, %v2487, %v2474
        %v2489 = vsel %vm1028, %v2488, %v2433
        %v2490 = vsel %vm1030, %v2489, %v2478
        %v2491 = vsel %vm1032, %v2490, %v2481
        %v2492 = vsel %vm1034, %v2491, %v2484
        %2494 = vrot.lane.b32.xlu0 %v2450, 120
        %v2495 = vpop.permute.xlu0 %2494
        %2497 = vrot.lane.b32.xlu0 %v2454, 112
        %v2498 = vpop.permute.xlu0 %2497
        %2500 = vrot.lane.b32.xlu0 %v2466, 104
        %v2501 = vpop.permute.xlu0 %2500
        %2504 = vrot.lane.b32.xlu0 %v2283, 120
        %v2505 = vpop.permute.xlu0 %2504
        %2507 = vrot.lane.b32.xlu0 %v2433, 112
        %v2508 = vpop.permute.xlu0 %2507
        %2510 = vrot.lane.b32.xlu0 %v2437, 104
        %v2511 = vpop.permute.xlu0 %2510
        %v2513 = vsel %vm1022, %v2446, %v2495
        %v2514 = vsel %vm1024, %v2513, %v2498
        %v2515 = vsel %vm1026, %v2514, %v2501
        %v2516 = vsel %vm1028, %v2515, %v2466
        %v2517 = vsel %vm1030, %v2516, %v2505
        %v2518 = vsel %vm1032, %v2517, %v2508
        %v2519 = vsel %vm1034, %v2518, %v2511
        %2521 = vrot.lane.b32.xlu0 %v2441, 120
        %v2522 = vpop.permute.xlu0 %2521
        %2524 = vrot.lane.b32.xlu0 %v2446, 112
        %v2525 = vpop.permute.xlu0 %2524
        %2527 = vrot.lane.b32.xlu0 %v2450, 104
        %v2528 = vpop.permute.xlu0 %2527
        %2531 = vrot.lane.b32.xlu0 %v2454, 120
        %v2532 = vpop.permute.xlu0 %2531
        %2534 = vrot.lane.b32.xlu0 %v2466, 112
        %v2535 = vpop.permute.xlu0 %2534
        %2537 = vrot.lane.b32.xlu0 %v2283, 104
        %v2538 = vpop.permute.xlu0 %2537
        %v2540 = vsel %vm1022, %v2437, %v2522
        %v2541 = vsel %vm1024, %v2540, %v2525
        %v2542 = vsel %vm1026, %v2541, %v2528
        %v2543 = vsel %vm1028, %v2542, %v2450
        %v2544 = vsel %vm1030, %v2543, %v2532
        %v2545 = vsel %vm1032, %v2544, %v2535
        %v2546 = vsel %vm1034, %v2545, %v2538
        %v2548 = vrot.slane %v2356, 7
        %2549 = vrot.lane.b32.xlu0 %v2548, 120
        %v2550 = vpop.permute.xlu0 %2549
        %v2552 = vrot.slane %v2356, 6
        %2553 = vrot.lane.b32.xlu0 %v2552, 112
        %v2554 = vpop.permute.xlu0 %2553
        %v2556 = vrot.slane %v2356, 5
        %2557 = vrot.lane.b32.xlu0 %v2556, 104
        %v2558 = vpop.permute.xlu0 %2557
        %v2561 = vrot.slane %v2356, 4
        %2562 = vrot.lane.b32.xlu0 %v2561, 120
        %v2563 = vpop.permute.xlu0 %2562
        %v2565 = vrot.slane %v2356, 3
        %2566 = vrot.lane.b32.xlu0 %v2565, 112
        %v2567 = vpop.permute.xlu0 %2566
        %v2569 = vrot.slane %v2356, 2
        %2570 = vrot.lane.b32.xlu0 %v2569, 104
        %v2571 = vpop.permute.xlu0 %2570
        %v2573 = vsel %vm1022, %v2356, %v2550
        %v2574 = vsel %vm1024, %v2573, %v2554
        %v2575 = vsel %vm1026, %v2574, %v2558
        %v2576 = vsel %vm1028, %v2575, %v2556
        %v2577 = vsel %vm1030, %v2576, %v2563
        %v2578 = vsel %vm1032, %v2577, %v2567
        %v2579 = vsel %vm1034, %v2578, %v2571
        %v2581 = vrot.slane %v2356, 1
        %2582 = vrot.lane.b32.xlu0 %v2581, 120
        %v2583 = vpop.permute.xlu0 %2582
        %2585 = vrot.lane.b32.xlu0 %v2356, 112
        %v2586 = vpop.permute.xlu0 %2585
        %2588 = vrot.lane.b32.xlu0 %v2548, 104
        %v2589 = vpop.permute.xlu0 %2588
        %2592 = vrot.lane.b32.xlu0 %v2552, 120
        %v2593 = vpop.permute.xlu0 %2592
        %2595 = vrot.lane.b32.xlu0 %v2556, 112
        %v2596 = vpop.permute.xlu0 %2595
        %2598 = vrot.lane.b32.xlu0 %v2561, 104
        %v2599 = vpop.permute.xlu0 %2598
        %v2601 = vsel %vm1022, %v2569, %v2583
        %v2602 = vsel %vm1024, %v2601, %v2586
        %v2603 = vsel %vm1026, %v2602, %v2589
        %v2604 = vsel %vm1028, %v2603, %v2548
        %v2605 = vsel %vm1030, %v2604, %v2593
        %v2606 = vsel %vm1032, %v2605, %v2596
        %v2607 = vsel %vm1034, %v2606, %v2599
        %2609 = vrot.lane.b32.xlu0 %v2565, 120
        %v2610 = vpop.permute.xlu0 %2609
        %2612 = vrot.lane.b32.xlu0 %v2569, 112
        %v2613 = vpop.permute.xlu0 %2612
        %2615 = vrot.lane.b32.xlu0 %v2581, 104
        %v2616 = vpop.permute.xlu0 %2615
        %2619 = vrot.lane.b32.xlu0 %v2356, 120
        %v2620 = vpop.permute.xlu0 %2619
        %2622 = vrot.lane.b32.xlu0 %v2548, 112
        %v2623 = vpop.permute.xlu0 %2622
        %2625 = vrot.lane.b32.xlu0 %v2552, 104
        %v2626 = vpop.permute.xlu0 %2625
        %v2628 = vsel %vm1022, %v2561, %v2610
        %v2629 = vsel %vm1024, %v2628, %v2613
        %v2630 = vsel %vm1026, %v2629, %v2616
        %v2631 = vsel %vm1028, %v2630, %v2581
        %v2632 = vsel %vm1030, %v2631, %v2620
        %v2633 = vsel %vm1032, %v2632, %v2623
        %v2634 = vsel %vm1034, %v2633, %v2626
        %2636 = vrot.lane.b32.xlu0 %v2556, 120
        %v2637 = vpop.permute.xlu0 %2636
        %2639 = vrot.lane.b32.xlu0 %v2561, 112
        %v2640 = vpop.permute.xlu0 %2639
        %2642 = vrot.lane.b32.xlu0 %v2565, 104
        %v2643 = vpop.permute.xlu0 %2642
        %2646 = vrot.lane.b32.xlu0 %v2569, 120
        %v2647 = vpop.permute.xlu0 %2646
        %2649 = vrot.lane.b32.xlu0 %v2581, 112
        %v2650 = vpop.permute.xlu0 %2649
        %2652 = vrot.lane.b32.xlu0 %v2356, 104
        %v2653 = vpop.permute.xlu0 %2652
        %v2655 = vsel %vm1022, %v2552, %v2637
        %v2656 = vsel %vm1024, %v2655, %v2640
        %v2657 = vsel %vm1026, %v2656, %v2643
        %v2658 = vsel %vm1028, %v2657, %v2565
        %v2659 = vsel %vm1030, %v2658, %v2647
        %v2660 = vsel %vm1032, %v2659, %v2650
        %v2661 = vsel %vm1034, %v2660, %v2653
        %v2663 = vrot.slane %v2429, 7
        %2664 = vrot.lane.b32.xlu0 %v2663, 120
        %v2665 = vpop.permute.xlu0 %2664
        %v2667 = vrot.slane %v2429, 6
        %2668 = vrot.lane.b32.xlu0 %v2667, 112
        %v2669 = vpop.permute.xlu0 %2668
        %v2671 = vrot.slane %v2429, 5
        %2672 = vrot.lane.b32.xlu0 %v2671, 104
        %v2673 = vpop.permute.xlu0 %2672
        %v2676 = vrot.slane %v2429, 4
        %2677 = vrot.lane.b32.xlu0 %v2676, 120
        %v2678 = vpop.permute.xlu0 %2677
        %v2680 = vrot.slane %v2429, 3
        %2681 = vrot.lane.b32.xlu0 %v2680, 112
        %v2682 = vpop.permute.xlu0 %2681
        %v2684 = vrot.slane %v2429, 2
        %2685 = vrot.lane.b32.xlu0 %v2684, 104
        %v2686 = vpop.permute.xlu0 %2685
        %v2688 = vsel %vm1022, %v2429, %v2665
        %v2689 = vsel %vm1024, %v2688, %v2669
        %v2690 = vsel %vm1026, %v2689, %v2673
        %v2691 = vsel %vm1028, %v2690, %v2671
        %v2692 = vsel %vm1030, %v2691, %v2678
        %v2693 = vsel %vm1032, %v2692, %v2682
        %v2694 = vsel %vm1034, %v2693, %v2686
        %v2696 = vrot.slane %v2429, 1
        %2697 = vrot.lane.b32.xlu0 %v2696, 120
        %v2698 = vpop.permute.xlu0 %2697
        %2700 = vrot.lane.b32.xlu0 %v2429, 112
        %v2701 = vpop.permute.xlu0 %2700
        %2703 = vrot.lane.b32.xlu0 %v2663, 104
        %v2704 = vpop.permute.xlu0 %2703
        %2707 = vrot.lane.b32.xlu0 %v2667, 120
        %v2708 = vpop.permute.xlu0 %2707
        %2710 = vrot.lane.b32.xlu0 %v2671, 112
        %v2711 = vpop.permute.xlu0 %2710
        %2713 = vrot.lane.b32.xlu0 %v2676, 104
        %v2714 = vpop.permute.xlu0 %2713
        %v2716 = vsel %vm1022, %v2684, %v2698
        %v2717 = vsel %vm1024, %v2716, %v2701
        %v2718 = vsel %vm1026, %v2717, %v2704
        %v2719 = vsel %vm1028, %v2718, %v2663
        %v2720 = vsel %vm1030, %v2719, %v2708
        %v2721 = vsel %vm1032, %v2720, %v2711
        %v2722 = vsel %vm1034, %v2721, %v2714
        %2724 = vrot.lane.b32.xlu0 %v2680, 120
        %v2725 = vpop.permute.xlu0 %2724
        %2727 = vrot.lane.b32.xlu0 %v2684, 112
        %v2728 = vpop.permute.xlu0 %2727
        %2730 = vrot.lane.b32.xlu0 %v2696, 104
        %v2731 = vpop.permute.xlu0 %2730
        %2734 = vrot.lane.b32.xlu0 %v2429, 120
        %v2735 = vpop.permute.xlu0 %2734
        %2737 = vrot.lane.b32.xlu0 %v2663, 112
        %v2738 = vpop.permute.xlu0 %2737
        %2740 = vrot.lane.b32.xlu0 %v2667, 104
        %v2741 = vpop.permute.xlu0 %2740
        %v2743 = vsel %vm1022, %v2676, %v2725
        %v2744 = vsel %vm1024, %v2743, %v2728
        %v2745 = vsel %vm1026, %v2744, %v2731
        %v2746 = vsel %vm1028, %v2745, %v2696
        %v2747 = vsel %vm1030, %v2746, %v2735
        %v2748 = vsel %vm1032, %v2747, %v2738
        %v2749 = vsel %vm1034, %v2748, %v2741
        %2751 = vrot.lane.b32.xlu0 %v2671, 120
        %v2752 = vpop.permute.xlu0 %2751
        %2754 = vrot.lane.b32.xlu0 %v2676, 112
        %v2755 = vpop.permute.xlu0 %2754
        %2757 = vrot.lane.b32.xlu0 %v2680, 104
        %v2758 = vpop.permute.xlu0 %2757
        %2761 = vrot.lane.b32.xlu0 %v2684, 120
        %v2762 = vpop.permute.xlu0 %2761
        %2764 = vrot.lane.b32.xlu0 %v2696, 112
        %v2765 = vpop.permute.xlu0 %2764
        %2767 = vrot.lane.b32.xlu0 %v2429, 104
        %v2768 = vpop.permute.xlu0 %2767
        %v2770 = vsel %vm1022, %v2667, %v2752
        %v2771 = vsel %vm1024, %v2770, %v2755
        %v2772 = vsel %vm1026, %v2771, %v2758
        %v2773 = vsel %vm1028, %v2772, %v2680
        %v2774 = vsel %vm1030, %v2773, %v2762
        %v2775 = vsel %vm1032, %v2774, %v2765
        %v2776 = vsel %vm1034, %v2775, %v2768
        %v2777 = vmul.f32 %v2464, 0.35355338
        %v2778 = vmul.f32 %v2492, 0.35355338
        %v2779 = vmul.f32 %v2519, 0.35355338
        %v2780 = vmul.f32 %v2546, 0.35355338
        %v2782 = vsel %vm1123, %v2777, 0
        %v2785 = vsel %vm1123, %v2579, 0
        %2787 = vmatprep.subr.mxu0 0.0
        %2788 = vmatpush1.xpose.msra.mxu0 %v2785
        %2789 = vmatprep.subr.mxu0 0.0
        %2790 = vmatpush1.xpose.msra.mxu0 0.0
        %2791 = vmatprep.subr.mxu0 0.0
        %2792 = vmatpush1.xpose.msra.mxu0 0.0
        %2793 = vmatprep.subr.mxu0 0.0
        %2794 = vmatpush1.xpose.msra.mxu0 0.0
        %2795 = vmatprep.subr.mxu0 0.0
        %2796 = vmatpush1.xpose.msra.mxu0 0.0
        %2797 = vmatprep.subr.mxu0 0.0
        %2798 = vmatpush1.xpose.msra.mxu0 0.0
        %2799 = vmatprep.subr.mxu0 0.0
        %2800 = vmatpush1.xpose.msra.mxu0 0.0
        %2801 = vmatprep.subr.mxu0 0.0
        %2802 = vmatpush1.xpose.msra.mxu0 0.0
        %2803 = vmatprep.subr.mxu0 0.0
        %2804 = vmatpush1.xpose.msra.mxu0 0.0
        %2805 = vmatprep.subr.mxu0 0.0
        %2806 = vmatpush1.xpose.msra.mxu0 0.0
        %2807 = vmatprep.subr.mxu0 0.0
        %2808 = vmatpush1.xpose.msra.mxu0 0.0
        %2809 = vmatprep.subr.mxu0 0.0
        %2810 = vmatpush1.xpose.msra.mxu0 0.0
        %2811 = vmatprep.subr.mxu0 0.0
        %2812 = vmatpush1.xpose.msra.mxu0 0.0
        %2813 = vmatprep.subr.mxu0 0.0
        %2814 = vmatpush1.xpose.msra.mxu0 0.0
        %2815 = vmatprep.subr.mxu0 0.0
        %2816 = vmatpush1.xpose.msra.mxu0 0.0
        %2817 = vmatprep.subr.mxu0 0.0
        %2818 = vmatpush1.xpose.msra.mxu0 0.0
        %2819 = vmatprep.subr.mxu0 0.0
        %2820 = vmatpush1.xpose.msra.mxu0 0.0
        %2821 = vmatprep.subr.mxu0 0.0
        %2822 = vmatpush1.xpose.msra.mxu0 0.0
        %2823 = vmatprep.subr.mxu0 0.0
        %2824 = vmatpush1.xpose.msra.mxu0 0.0
        %2825 = vmatprep.subr.mxu0 0.0
        %2826 = vmatpush1.xpose.msra.mxu0 0.0
        %2827 = vmatprep.subr.mxu0 0.0
        %2828 = vmatpush1.xpose.msra.mxu0 0.0
        %2829 = vmatprep.subr.mxu0 0.0
        %2830 = vmatpush1.xpose.msra.mxu0 0.0
        %2831 = vmatprep.subr.mxu0 0.0
        %2832 = vmatpush1.xpose.msra.mxu0 0.0
        %2833 = vmatprep.subr.mxu0 0.0
        %2834 = vmatpush1.xpose.msra.mxu0 0.0
        %2835 = vmatprep.subr.mxu0 0.0
        %2836 = vmatpush1.xpose.msra.mxu0 0.0
        %2837 = vmatprep.subr.mxu0 0.0
        %2838 = vmatpush1.xpose.msra.mxu0 0.0
        %2839 = vmatprep.subr.mxu0 0.0
        %2840 = vmatpush1.xpose.msra.mxu0 0.0
        %2841 = vmatprep.subr.mxu0 0.0
        %2842 = vmatpush1.xpose.msra.mxu0 0.0
        %2843 = vmatprep.subr.mxu0 0.0
        %2844 = vmatpush1.xpose.msra.mxu0 0.0
        %2845 = vmatprep.subr.mxu0 0.0
        %2846 = vmatpush1.xpose.msra.mxu0 0.0
        %2847 = vmatprep.subr.mxu0 0.0
        %2848 = vmatpush1.xpose.msra.mxu0 0.0
        %2849 = vmatprep.subr.mxu0 0.0
        %2850 = vmatpush1.xpose.msra.mxu0 0.0
        %2851 = vmatprep.mubr.f32.mxu0 0.0
        %2852 = vmatmul.mubr.f32.gmra.mrb[0].mxu0 %v2782
        %v2853 = vpop.f32.mrb[0].mxu0
        %v2854 = vadd.f32 0.0, %v2853
        %v2855 = vpop.f32.mrb[0].mxu0
        %2856 = vdwg.mxu0
        %v2858 = vsel %vm1123, %v2778, 0
        %v2861 = vsel %vm1123, %v2607, 0
        %2863 = vmatprep.subr.mxu0 0.0
        %2864 = vmatpush1.xpose.msra.mxu0 %v2861
        %2865 = vmatprep.subr.mxu0 0.0
        %2866 = vmatpush1.xpose.msra.mxu0 0.0
        %2867 = vmatprep.subr.mxu0 0.0
        %2868 = vmatpush1.xpose.msra.mxu0 0.0
        %2869 = vmatprep.subr.mxu0 0.0
        %2870 = vmatpush1.xpose.msra.mxu0 0.0
        %2871 = vmatprep.subr.mxu0 0.0
        %2872 = vmatpush1.xpose.msra.mxu0 0.0
        %2873 = vmatprep.subr.mxu0 0.0
        %2874 = vmatpush1.xpose.msra.mxu0 0.0
        %2875 = vmatprep.subr.mxu0 0.0
        %2876 = vmatpush1.xpose.msra.mxu0 0.0
        %2877 = vmatprep.subr.mxu0 0.0
        %2878 = vmatpush1.xpose.msra.mxu0 0.0
        %2879 = vmatprep.subr.mxu0 0.0
        %2880 = vmatpush1.xpose.msra.mxu0 0.0
        %2881 = vmatprep.subr.mxu0 0.0
        %2882 = vmatpush1.xpose.msra.mxu0 0.0
        %2883 = vmatprep.subr.mxu0 0.0
        %2884 = vmatpush1.xpose.msra.mxu0 0.0
        %2885 = vmatprep.subr.mxu0 0.0
        %2886 = vmatpush1.xpose.msra.mxu0 0.0
        %2887 = vmatprep.subr.mxu0 0.0
        %2888 = vmatpush1.xpose.msra.mxu0 0.0
        %2889 = vmatprep.subr.mxu0 0.0
        %2890 = vmatpush1.xpose.msra.mxu0 0.0
        %2891 = vmatprep.subr.mxu0 0.0
        %2892 = vmatpush1.xpose.msra.mxu0 0.0
        %2893 = vmatprep.subr.mxu0 0.0
        %2894 = vmatpush1.xpose.msra.mxu0 0.0
        %2895 = vmatprep.subr.mxu0 0.0
        %2896 = vmatpush1.xpose.msra.mxu0 0.0
        %2897 = vmatprep.subr.mxu0 0.0
        %2898 = vmatpush1.xpose.msra.mxu0 0.0
        %2899 = vmatprep.subr.mxu0 0.0
        %2900 = vmatpush1.xpose.msra.mxu0 0.0
        %2901 = vmatprep.subr.mxu0 0.0
        %2902 = vmatpush1.xpose.msra.mxu0 0.0
        %2903 = vmatprep.subr.mxu0 0.0
        %2904 = vmatpush1.xpose.msra.mxu0 0.0
        %2905 = vmatprep.subr.mxu0 0.0
        %2906 = vmatpush1.xpose.msra.mxu0 0.0
        %2907 = vmatprep.subr.mxu0 0.0
        %2908 = vmatpush1.xpose.msra.mxu0 0.0
        %2909 = vmatprep.subr.mxu0 0.0
        %2910 = vmatpush1.xpose.msra.mxu0 0.0
        %2911 = vmatprep.subr.mxu0 0.0
        %2912 = vmatpush1.xpose.msra.mxu0 0.0
        %2913 = vmatprep.subr.mxu0 0.0
        %2914 = vmatpush1.xpose.msra.mxu0 0.0
        %2915 = vmatprep.subr.mxu0 0.0
        %2916 = vmatpush1.xpose.msra.mxu0 0.0
        %2917 = vmatprep.subr.mxu0 0.0
        %2918 = vmatpush1.xpose.msra.mxu0 0.0
        %2919 = vmatprep.subr.mxu0 0.0
        %2920 = vmatpush1.xpose.msra.mxu0 0.0
        %2921 = vmatprep.subr.mxu0 0.0
        %2922 = vmatpush1.xpose.msra.mxu0 0.0
        %2923 = vmatprep.subr.mxu0 0.0
        %2924 = vmatpush1.xpose.msra.mxu0 0.0
        %2925 = vmatprep.subr.mxu0 0.0
        %2926 = vmatpush1.xpose.msra.mxu0 0.0
        %2927 = vmatprep.mubr.f32.mxu0 0.0
        %2928 = vmatmul.mubr.f32.gmra.mrb[0].mxu0 %v2858
        %v2929 = vpop.f32.mrb[0].mxu0
        %v2930 = vadd.f32 0.0, %v2929
        %v2931 = vpop.f32.mrb[0].mxu0
        %2932 = vdwg.mxu0
        %v2934 = vsel %vm1123, %v2779, 0
        %v2937 = vsel %vm1123, %v2634, 0
        %2939 = vmatprep.subr.mxu0 0.0
        %2940 = vmatpush1.xpose.msra.mxu0 %v2937
        %2941 = vmatprep.subr.mxu0 0.0
        %2942 = vmatpush1.xpose.msra.mxu0 0.0
        %2943 = vmatprep.subr.mxu0 0.0
        %2944 = vmatpush1.xpose.msra.mxu0 0.0
        %2945 = vmatprep.subr.mxu0 0.0
        %2946 = vmatpush1.xpose.msra.mxu0 0.0
        %2947 = vmatprep.subr.mxu0 0.0
        %2948 = vmatpush1.xpose.msra.mxu0 0.0
        %2949 = vmatprep.subr.mxu0 0.0
        %2950 = vmatpush1.xpose.msra.mxu0 0.0
        %2951 = vmatprep.subr.mxu0 0.0
        %2952 = vmatpush1.xpose.msra.mxu0 0.0
        %2953 = vmatprep.subr.mxu0 0.0
        %2954 = vmatpush1.xpose.msra.mxu0 0.0
        %2955 = vmatprep.subr.mxu0 0.0
        %2956 = vmatpush1.xpose.msra.mxu0 0.0
        %2957 = vmatprep.subr.mxu0 0.0
        %2958 = vmatpush1.xpose.msra.mxu0 0.0
        %2959 = vmatprep.subr.mxu0 0.0
        %2960 = vmatpush1.xpose.msra.mxu0 0.0
        %2961 = vmatprep.subr.mxu0 0.0
        %2962 = vmatpush1.xpose.msra.mxu0 0.0
        %2963 = vmatprep.subr.mxu0 0.0
        %2964 = vmatpush1.xpose.msra.mxu0 0.0
        %2965 = vmatprep.subr.mxu0 0.0
        %2966 = vmatpush1.xpose.msra.mxu0 0.0
        %2967 = vmatprep.subr.mxu0 0.0
        %2968 = vmatpush1.xpose.msra.mxu0 0.0
        %2969 = vmatprep.subr.mxu0 0.0
        %2970 = vmatpush1.xpose.msra.mxu0 0.0
        %2971 = vmatprep.subr.mxu0 0.0
        %2972 = vmatpush1.xpose.msra.mxu0 0.0
        %2973 = vmatprep.subr.mxu0 0.0
        %2974 = vmatpush1.xpose.msra.mxu0 0.0
        %2975 = vmatprep.subr.mxu0 0.0
        %2976 = vmatpush1.xpose.msra.mxu0 0.0
        %2977 = vmatprep.subr.mxu0 0.0
        %2978 = vmatpush1.xpose.msra.mxu0 0.0
        %2979 = vmatprep.subr.mxu0 0.0
        %2980 = vmatpush1.xpose.msra.mxu0 0.0
        %2981 = vmatprep.subr.mxu0 0.0
        %2982 = vmatpush1.xpose.msra.mxu0 0.0
        %2983 = vmatprep.subr.mxu0 0.0
        %2984 = vmatpush1.xpose.msra.mxu0 0.0
        %2985 = vmatprep.subr.mxu0 0.0
        %2986 = vmatpush1.xpose.msra.mxu0 0.0
        %2987 = vmatprep.subr.mxu0 0.0
        %2988 = vmatpush1.xpose.msra.mxu0 0.0
        %2989 = vmatprep.subr.mxu0 0.0
        %2990 = vmatpush1.xpose.msra.mxu0 0.0
        %2991 = vmatprep.subr.mxu0 0.0
        %2992 = vmatpush1.xpose.msra.mxu0 0.0
        %2993 = vmatprep.subr.mxu0 0.0
        %2994 = vmatpush1.xpose.msra.mxu0 0.0
        %2995 = vmatprep.subr.mxu0 0.0
        %2996 = vmatpush1.xpose.msra.mxu0 0.0
        %2997 = vmatprep.subr.mxu0 0.0
        %2998 = vmatpush1.xpose.msra.mxu0 0.0
        %2999 = vmatprep.subr.mxu0 0.0
        %3000 = vmatpush1.xpose.msra.mxu0 0.0
        %3001 = vmatprep.subr.mxu0 0.0
        %3002 = vmatpush1.xpose.msra.mxu0 0.0
        %3003 = vmatprep.mubr.f32.mxu0 0.0
        %3004 = vmatmul.mubr.f32.gmra.mrb[0].mxu0 %v2934
        %v3005 = vpop.f32.mrb[0].mxu0
        %v3006 = vadd.f32 0.0, %v3005
        %v3007 = vpop.f32.mrb[0].mxu0
        %3008 = vdwg.mxu0
        %v3010 = vsel %vm1123, %v2780, 0
        %v3013 = vsel %vm1123, %v2661, 0
        %3015 = vmatprep.subr.mxu0 0.0
        %3016 = vmatpush1.xpose.msra.mxu0 %v3013
        %3017 = vmatprep.subr.mxu0 0.0
        %3018 = vmatpush1.xpose.msra.mxu0 0.0
        %3019 = vmatprep.subr.mxu0 0.0
        %3020 = vmatpush1.xpose.msra.mxu0 0.0
        %3021 = vmatprep.subr.mxu0 0.0
        %3022 = vmatpush1.xpose.msra.mxu0 0.0
        %3023 = vmatprep.subr.mxu0 0.0
        %3024 = vmatpush1.xpose.msra.mxu0 0.0
        %3025 = vmatprep.subr.mxu0 0.0
        %3026 = vmatpush1.xpose.msra.mxu0 0.0
        %3027 = vmatprep.subr.mxu0 0.0
        %3028 = vmatpush1.xpose.msra.mxu0 0.0
        %3029 = vmatprep.subr.mxu0 0.0
        %3030 = vmatpush1.xpose.msra.mxu0 0.0
        %3031 = vmatprep.subr.mxu0 0.0
        %3032 = vmatpush1.xpose.msra.mxu0 0.0
        %3033 = vmatprep.subr.mxu0 0.0
        %3034 = vmatpush1.xpose.msra.mxu0 0.0
        %3035 = vmatprep.subr.mxu0 0.0
        %3036 = vmatpush1.xpose.msra.mxu0 0.0
        %3037 = vmatprep.subr.mxu0 0.0
        %3038 = vmatpush1.xpose.msra.mxu0 0.0
        %3039 = vmatprep.subr.mxu0 0.0
        %3040 = vmatpush1.xpose.msra.mxu0 0.0
        %3041 = vmatprep.subr.mxu0 0.0
        %3042 = vmatpush1.xpose.msra.mxu0 0.0
        %3043 = vmatprep.subr.mxu0 0.0
        %3044 = vmatpush1.xpose.msra.mxu0 0.0
        %3045 = vmatprep.subr.mxu0 0.0
        %3046 = vmatpush1.xpose.msra.mxu0 0.0
        %3047 = vmatprep.subr.mxu0 0.0
        %3048 = vmatpush1.xpose.msra.mxu0 0.0
        %3049 = vmatprep.subr.mxu0 0.0
        %3050 = vmatpush1.xpose.msra.mxu0 0.0
        %3051 = vmatprep.subr.mxu0 0.0
        %3052 = vmatpush1.xpose.msra.mxu0 0.0
        %3053 = vmatprep.subr.mxu0 0.0
        %3054 = vmatpush1.xpose.msra.mxu0 0.0
        %3055 = vmatprep.subr.mxu0 0.0
        %3056 = vmatpush1.xpose.msra.mxu0 0.0
        %3057 = vmatprep.subr.mxu0 0.0
        %3058 = vmatpush1.xpose.msra.mxu0 0.0
        %3059 = vmatprep.subr.mxu0 0.0
        %3060 = vmatpush1.xpose.msra.mxu0 0.0
        %3061 = vmatprep.subr.mxu0 0.0
        %3062 = vmatpush1.xpose.msra.mxu0 0.0
        %3063 = vmatprep.subr.mxu0 0.0
        %3064 = vmatpush1.xpose.msra.mxu0 0.0
        %3065 = vmatprep.subr.mxu0 0.0
        %3066 = vmatpush1.xpose.msra.mxu0 0.0
        %3067 = vmatprep.subr.mxu0 0.0
        %3068 = vmatpush1.xpose.msra.mxu0 0.0
        %3069 = vmatprep.subr.mxu0 0.0
        %3070 = vmatpush1.xpose.msra.mxu0 0.0
        %3071 = vmatprep.subr.mxu0 0.0
        %3072 = vmatpush1.xpose.msra.mxu0 0.0
        %3073 = vmatprep.subr.mxu0 0.0
        %3074 = vmatpush1.xpose.msra.mxu0 0.0
        %3075 = vmatprep.subr.mxu0 0.0
        %3076 = vmatpush1.xpose.msra.mxu0 0.0
        %3077 = vmatprep.subr.mxu0 0.0
        %3078 = vmatpush1.xpose.msra.mxu0 0.0
        %3079 = vmatprep.mubr.f32.mxu0 0.0
        %3080 = vmatmul.mubr.f32.gmra.mrb[0].mxu0 %v3010
        %v3081 = vpop.f32.mrb[0].mxu0
        %v3082 = vadd.f32 0.0, %v3081
        %v3083 = vpop.f32.mrb[0].mxu0
        %3084 = vdwg.mxu0
        %v3085 = vsel %vm1123, %v2854, -inf
        %3086 = vmax.xlane.f32.xlu0 %v3085
        %v3087 = vpop.xlane.xlu0 %3086
        %v3088 = vsel %vm1123, %v2930, -inf
        %3089 = vmax.xlane.f32.xlu0 %v3088
        %v3090 = vpop.xlane.xlu0 %3089
        %v3091 = vsel %vm1123, %v3006, -inf
        %3092 = vmax.xlane.f32.xlu0 %v3091
        %v3093 = vpop.xlane.xlu0 %3092
        %v3094 = vsel %vm1123, %v3082, -inf
        %3095 = vmax.xlane.f32.xlu0 %v3094
        %v3096 = vpop.xlane.xlu0 %3095
        %v3097 = vsub.f32 %v2854, %v3087
        %v3098 = vsub.f32 %v2930, %v3090
        %v3099 = vsub.f32 %v3006, %v3093
        %v3100 = vsub.f32 %v3082, %v3096
        %v3101 = vmul.f32 %v3097, 1.442695
        %v3102 = vpow.pop %v3101
        %v3103 = vmul.f32 %v3098, 1.442695
        %v3104 = vpow.pop %v3103
        %v3105 = vmul.f32 %v3099, 1.442695
        %v3106 = vpow.pop %v3105
        %v3107 = vmul.f32 %v3100, 1.442695
        %v3108 = vpow.pop %v3107
        %v3109 = vsel %vm1123, %v3102, 0.0
        %3110 = vadd.xlane.f32.xlu0 %v3109
        %v3111 = vpop.xlane.xlu0 %3110
        %v3112 = vsel %vm1123, %v3104, 0.0
        %3113 = vadd.xlane.f32.xlu0 %v3112
        %v3114 = vpop.xlane.xlu0 %3113
        %v3115 = vsel %vm1123, %v3106, 0.0
        %3116 = vadd.xlane.f32.xlu0 %v3115
        %v3117 = vpop.xlane.xlu0 %3116
        %v3118 = vsel %vm1123, %v3108, 0.0
        %3119 = vadd.xlane.f32.xlu0 %v3118
        %v3120 = vpop.xlane.xlu0 %3119
        %v3121 = vrcp.pop %v3111
        %v3122 = vrcp.pop %v3114
        %v3123 = vrcp.pop %v3117
        %v3124 = vrcp.pop %v3120
        %v3125 = vmul.f32 %v3111, %v3121
        %v3126 = vmul.f32 %v3114, %v3122
        %v3127 = vmul.f32 %v3117, %v3123
        %v3128 = vmul.f32 %v3120, %v3124
        %v3129 = vsub.f32 2.0, %v3125
        %v3130 = vsub.f32 2.0, %v3126
        %v3131 = vsub.f32 2.0, %v3127
        %v3132 = vsub.f32 2.0, %v3128
        %v3133 = vmul.f32 %v3121, %v3129
        %v3134 = vmul.f32 %v3122, %v3130
        %v3135 = vmul.f32 %v3123, %v3131
        %v3136 = vmul.f32 %v3124, %v3132
        %v3137 = vmul.f32 %v3102, %v3133
        %v3138 = vmul.f32 %v3104, %v3134
        %v3139 = vmul.f32 %v3106, %v3135
        %v3140 = vmul.f32 %v3108, %v3136
        %v3142 = vsel %vm1123, %v3137, 0
        %3144 = vmatprep.subr.mxu0 0.0
        %3145 = vmatpush1.msra.mxu0 %v2694
        %3146 = vmatprep.subr.mxu0 0.0
        %3147 = vmatpush1.msra.mxu0 0.0
        %3148 = vmatprep.subr.mxu0 0.0
        %3149 = vmatpush1.msra.mxu0 0.0
        %3150 = vmatprep.subr.mxu0 0.0
        %3151 = vmatpush1.msra.mxu0 0.0
        %3152 = vmatprep.subr.mxu0 0.0
        %3153 = vmatpush1.msra.mxu0 0.0
        %3154 = vmatprep.subr.mxu0 0.0
        %3155 = vmatpush1.msra.mxu0 0.0
        %3156 = vmatprep.subr.mxu0 0.0
        %3157 = vmatpush1.msra.mxu0 0.0
        %3158 = vmatprep.subr.mxu0 0.0
        %3159 = vmatpush1.msra.mxu0 0.0
        %3160 = vmatprep.subr.mxu0 0.0
        %3161 = vmatpush1.msra.mxu0 0.0
        %3162 = vmatprep.subr.mxu0 0.0
        %3163 = vmatpush1.msra.mxu0 0.0
        %3164 = vmatprep.subr.mxu0 0.0
        %3165 = vmatpush1.msra.mxu0 0.0
        %3166 = vmatprep.subr.mxu0 0.0
        %3167 = vmatpush1.msra.mxu0 0.0
        %3168 = vmatprep.subr.mxu0 0.0
        %3169 = vmatpush1.msra.mxu0 0.0
        %3170 = vmatprep.subr.mxu0 0.0
        %3171 = vmatpush1.msra.mxu0 0.0
        %3172 = vmatprep.subr.mxu0 0.0
        %3173 = vmatpush1.msra.mxu0 0.0
        %3174 = vmatprep.subr.mxu0 0.0
        %3175 = vmatpush1.msra.mxu0 0.0
        %3176 = vmatprep.subr.mxu0 0.0
        %3177 = vmatpush1.msra.mxu0 0.0
        %3178 = vmatprep.subr.mxu0 0.0
        %3179 = vmatpush1.msra.mxu0 0.0
        %3180 = vmatprep.subr.mxu0 0.0
        %3181 = vmatpush1.msra.mxu0 0.0
        %3182 = vmatprep.subr.mxu0 0.0
        %3183 = vmatpush1.msra.mxu0 0.0
        %3184 = vmatprep.subr.mxu0 0.0
        %3185 = vmatpush1.msra.mxu0 0.0
        %3186 = vmatprep.subr.mxu0 0.0
        %3187 = vmatpush1.msra.mxu0 0.0
        %3188 = vmatprep.subr.mxu0 0.0
        %3189 = vmatpush1.msra.mxu0 0.0
        %3190 = vmatprep.subr.mxu0 0.0
        %3191 = vmatpush1.msra.mxu0 0.0
        %3192 = vmatprep.subr.mxu0 0.0
        %3193 = vmatpush1.msra.mxu0 0.0
        %3194 = vmatprep.subr.mxu0 0.0
        %3195 = vmatpush1.msra.mxu0 0.0
        %3196 = vmatprep.subr.mxu0 0.0
        %3197 = vmatpush1.msra.mxu0 0.0
        %3198 = vmatprep.subr.mxu0 0.0
        %3199 = vmatpush1.msra.mxu0 0.0
        %3200 = vmatprep.subr.mxu0 0.0
        %3201 = vmatpush1.msra.mxu0 0.0
        %3202 = vmatprep.subr.mxu0 0.0
        %3203 = vmatpush1.msra.mxu0 0.0
        %3204 = vmatprep.subr.mxu0 0.0
        %3205 = vmatpush1.msra.mxu0 0.0
        %3206 = vmatprep.subr.mxu0 0.0
        %3207 = vmatpush1.msra.mxu0 0.0
        %3208 = vmatprep.mubr.f32.mxu0 0.0
        %3209 = vmatmul.mubr.f32.gmra.mrb[0].mxu0 %v3142
        %v3210 = vpop.f32.mrb[0].mxu0
        %v3211 = vadd.f32 0.0, %v3210
        %v3212 = vpop.f32.mrb[0].mxu0
        %3213 = vdwg.mxu0
        %v3215 = vsel %vm1123, %v3138, 0
        %3217 = vmatprep.subr.mxu0 0.0
        %3218 = vmatpush1.msra.mxu0 %v2722
        %3219 = vmatprep.subr.mxu0 0.0
        %3220 = vmatpush1.msra.mxu0 0.0
        %3221 = vmatprep.subr.mxu0 0.0
        %3222 = vmatpush1.msra.mxu0 0.0
        %3223 = vmatprep.subr.mxu0 0.0
        %3224 = vmatpush1.msra.mxu0 0.0
        %3225 = vmatprep.subr.mxu0 0.0
        %3226 = vmatpush1.msra.mxu0 0.0
        %3227 = vmatprep.subr.mxu0 0.0
        %3228 = vmatpush1.msra.mxu0 0.0
        %3229 = vmatprep.subr.mxu0 0.0
        %3230 = vmatpush1.msra.mxu0 0.0
        %3231 = vmatprep.subr.mxu0 0.0
        %3232 = vmatpush1.msra.mxu0 0.0
        %3233 = vmatprep.subr.mxu0 0.0
        %3234 = vmatpush1.msra.mxu0 0.0
        %3235 = vmatprep.subr.mxu0 0.0
        %3236 = vmatpush1.msra.mxu0 0.0
        %3237 = vmatprep.subr.mxu0 0.0
        %3238 = vmatpush1.msra.mxu0 0.0
        %3239 = vmatprep.subr.mxu0 0.0
        %3240 = vmatpush1.msra.mxu0 0.0
        %3241 = vmatprep.subr.mxu0 0.0
        %3242 = vmatpush1.msra.mxu0 0.0
        %3243 = vmatprep.subr.mxu0 0.0
        %3244 = vmatpush1.msra.mxu0 0.0
        %3245 = vmatprep.subr.mxu0 0.0
        %3246 = vmatpush1.msra.mxu0 0.0
        %3247 = vmatprep.subr.mxu0 0.0
        %3248 = vmatpush1.msra.mxu0 0.0
        %3249 = vmatprep.subr.mxu0 0.0
        %3250 = vmatpush1.msra.mxu0 0.0
        %3251 = vmatprep.subr.mxu0 0.0
        %3252 = vmatpush1.msra.mxu0 0.0
        %3253 = vmatprep.subr.mxu0 0.0
        %3254 = vmatpush1.msra.mxu0 0.0
        %3255 = vmatprep.subr.mxu0 0.0
        %3256 = vmatpush1.msra.mxu0 0.0
        %3257 = vmatprep.subr.mxu0 0.0
        %3258 = vmatpush1.msra.mxu0 0.0
        %3259 = vmatprep.subr.mxu0 0.0
        %3260 = vmatpush1.msra.mxu0 0.0
        %3261 = vmatprep.subr.mxu0 0.0
        %3262 = vmatpush1.msra.mxu0 0.0
        %3263 = vmatprep.subr.mxu0 0.0
        %3264 = vmatpush1.msra.mxu0 0.0
        %3265 = vmatprep.subr.mxu0 0.0
        %3266 = vmatpush1.msra.mxu0 0.0
        %3267 = vmatprep.subr.mxu0 0.0
        %3268 = vmatpush1.msra.mxu0 0.0
        %3269 = vmatprep.subr.mxu0 0.0
        %3270 = vmatpush1.msra.mxu0 0.0
        %3271 = vmatprep.subr.mxu0 0.0
        %3272 = vmatpush1.msra.mxu0 0.0
        %3273 = vmatprep.subr.mxu0 0.0
        %3274 = vmatpush1.msra.mxu0 0.0
        %3275 = vmatprep.subr.mxu0 0.0
        %3276 = vmatpush1.msra.mxu0 0.0
        %3277 = vmatprep.subr.mxu0 0.0
        %3278 = vmatpush1.msra.mxu0 0.0
        %3279 = vmatprep.subr.mxu0 0.0
        %3280 = vmatpush1.msra.mxu0 0.0
        %3281 = vmatprep.mubr.f32.mxu0 0.0
        %3282 = vmatmul.mubr.f32.gmra.mrb[0].mxu0 %v3215
        %v3283 = vpop.f32.mrb[0].mxu0
        %v3284 = vadd.f32 0.0, %v3283
        %v3285 = vpop.f32.mrb[0].mxu0
        %3286 = vdwg.mxu0
        %v3288 = vsel %vm1123, %v3139, 0
        %3290 = vmatprep.subr.mxu0 0.0
        %3291 = vmatpush1.msra.mxu0 %v2749
        %3292 = vmatprep.subr.mxu0 0.0
        %3293 = vmatpush1.msra.mxu0 0.0
        %3294 = vmatprep.subr.mxu0 0.0
        %3295 = vmatpush1.msra.mxu0 0.0
        %3296 = vmatprep.subr.mxu0 0.0
        %3297 = vmatpush1.msra.mxu0 0.0
        %3298 = vmatprep.subr.mxu0 0.0
        %3299 = vmatpush1.msra.mxu0 0.0
        %3300 = vmatprep.subr.mxu0 0.0
        %3301 = vmatpush1.msra.mxu0 0.0
        %3302 = vmatprep.subr.mxu0 0.0
        %3303 = vmatpush1.msra.mxu0 0.0
        %3304 = vmatprep.subr.mxu0 0.0
        %3305 = vmatpush1.msra.mxu0 0.0
        %3306 = vmatprep.subr.mxu0 0.0
        %3307 = vmatpush1.msra.mxu0 0.0
        %3308 = vmatprep.subr.mxu0 0.0
        %3309 = vmatpush1.msra.mxu0 0.0
        %3310 = vmatprep.subr.mxu0 0.0
        %3311 = vmatpush1.msra.mxu0 0.0
        %3312 = vmatprep.subr.mxu0 0.0
        %3313 = vmatpush1.msra.mxu0 0.0
        %3314 = vmatprep.subr.mxu0 0.0
        %3315 = vmatpush1.msra.mxu0 0.0
        %3316 = vmatprep.subr.mxu0 0.0
        %3317 = vmatpush1.msra.mxu0 0.0
        %3318 = vmatprep.subr.mxu0 0.0
        %3319 = vmatpush1.msra.mxu0 0.0
        %3320 = vmatprep.subr.mxu0 0.0
        %3321 = vmatpush1.msra.mxu0 0.0
        %3322 = vmatprep.subr.mxu0 0.0
        %3323 = vmatpush1.msra.mxu0 0.0
        %3324 = vmatprep.subr.mxu0 0.0
        %3325 = vmatpush1.msra.mxu0 0.0
        %3326 = vmatprep.subr.mxu0 0.0
        %3327 = vmatpush1.msra.mxu0 0.0
        %3328 = vmatprep.subr.mxu0 0.0
        %3329 = vmatpush1.msra.mxu0 0.0
        %3330 = vmatprep.subr.mxu0 0.0
        %3331 = vmatpush1.msra.mxu0 0.0
        %3332 = vmatprep.subr.mxu0 0.0
        %3333 = vmatpush1.msra.mxu0 0.0
        %3334 = vmatprep.subr.mxu0 0.0
        %3335 = vmatpush1.msra.mxu0 0.0
        %3336 = vmatprep.subr.mxu0 0.0
        %3337 = vmatpush1.msra.mxu0 0.0
        %3338 = vmatprep.subr.mxu0 0.0
        %3339 = vmatpush1.msra.mxu0 0.0
        %3340 = vmatprep.subr.mxu0 0.0
        %3341 = vmatpush1.msra.mxu0 0.0
        %3342 = vmatprep.subr.mxu0 0.0
        %3343 = vmatpush1.msra.mxu0 0.0
        %3344 = vmatprep.subr.mxu0 0.0
        %3345 = vmatpush1.msra.mxu0 0.0
        %3346 = vmatprep.subr.mxu0 0.0
        %3347 = vmatpush1.msra.mxu0 0.0
        %3348 = vmatprep.subr.mxu0 0.0
        %3349 = vmatpush1.msra.mxu0 0.0
        %3350 = vmatprep.subr.mxu0 0.0
        %3351 = vmatpush1.msra.mxu0 0.0
        %3352 = vmatprep.subr.mxu0 0.0
        %3353 = vmatpush1.msra.mxu0 0.0
        %3354 = vmatprep.mubr.f32.mxu0 0.0
        %3355 = vmatmul.mubr.f32.gmra.mrb[0].mxu0 %v3288
        %v3356 = vpop.f32.mrb[0].mxu0
        %v3357 = vadd.f32 0.0, %v3356
        %v3358 = vpop.f32.mrb[0].mxu0
        %3359 = vdwg.mxu0
        %v3361 = vsel %vm1123, %v3140, 0
        %3363 = vmatprep.subr.mxu0 0.0
        %3364 = vmatpush1.msra.mxu0 %v2776
        %3365 = vmatprep.subr.mxu0 0.0
        %3366 = vmatpush1.msra.mxu0 0.0
        %3367 = vmatprep.subr.mxu0 0.0
        %3368 = vmatpush1.msra.mxu0 0.0
        %3369 = vmatprep.subr.mxu0 0.0
        %3370 = vmatpush1.msra.mxu0 0.0
        %3371 = vmatprep.subr.mxu0 0.0
        %3372 = vmatpush1.msra.mxu0 0.0
        %3373 = vmatprep.subr.mxu0 0.0
        %3374 = vmatpush1.msra.mxu0 0.0
        %3375 = vmatprep.subr.mxu0 0.0
        %3376 = vmatpush1.msra.mxu0 0.0
        %3377 = vmatprep.subr.mxu0 0.0
        %3378 = vmatpush1.msra.mxu0 0.0
        %3379 = vmatprep.subr.mxu0 0.0
        %3380 = vmatpush1.msra.mxu0 0.0
        %3381 = vmatprep.subr.mxu0 0.0
        %3382 = vmatpush1.msra.mxu0 0.0
        %3383 = vmatprep.subr.mxu0 0.0
        %3384 = vmatpush1.msra.mxu0 0.0
        %3385 = vmatprep.subr.mxu0 0.0
        %3386 = vmatpush1.msra.mxu0 0.0
        %3387 = vmatprep.subr.mxu0 0.0
        %3388 = vmatpush1.msra.mxu0 0.0
        %3389 = vmatprep.subr.mxu0 0.0
        %3390 = vmatpush1.msra.mxu0 0.0
        %3391 = vmatprep.subr.mxu0 0.0
        %3392 = vmatpush1.msra.mxu0 0.0
        %3393 = vmatprep.subr.mxu0 0.0
        %3394 = vmatpush1.msra.mxu0 0.0
        %3395 = vmatprep.subr.mxu0 0.0
        %3396 = vmatpush1.msra.mxu0 0.0
        %3397 = vmatprep.subr.mxu0 0.0
        %3398 = vmatpush1.msra.mxu0 0.0
        %3399 = vmatprep.subr.mxu0 0.0
        %3400 = vmatpush1.msra.mxu0 0.0
        %3401 = vmatprep.subr.mxu0 0.0
        %3402 = vmatpush1.msra.mxu0 0.0
        %3403 = vmatprep.subr.mxu0 0.0
        %3404 = vmatpush1.msra.mxu0 0.0
        %3405 = vmatprep.subr.mxu0 0.0
        %3406 = vmatpush1.msra.mxu0 0.0
        %3407 = vmatprep.subr.mxu0 0.0
        %3408 = vmatpush1.msra.mxu0 0.0
        %3409 = vmatprep.subr.mxu0 0.0
        %3410 = vmatpush1.msra.mxu0 0.0
        %3411 = vmatprep.subr.mxu0 0.0
        %3412 = vmatpush1.msra.mxu0 0.0
        %3413 = vmatprep.subr.mxu0 0.0
        %3414 = vmatpush1.msra.mxu0 0.0
        %3415 = vmatprep.subr.mxu0 0.0
        %3416 = vmatpush1.msra.mxu0 0.0
        %3417 = vmatprep.subr.mxu0 0.0
        %3418 = vmatpush1.msra.mxu0 0.0
        %3419 = vmatprep.subr.mxu0 0.0
        %3420 = vmatpush1.msra.mxu0 0.0
        %3421 = vmatprep.subr.mxu0 0.0
        %3422 = vmatpush1.msra.mxu0 0.0
        %3423 = vmatprep.subr.mxu0 0.0
        %3424 = vmatpush1.msra.mxu0 0.0
        %3425 = vmatprep.subr.mxu0 0.0
        %3426 = vmatpush1.msra.mxu0 0.0
        %3427 = vmatprep.mubr.f32.mxu0 0.0
        %3428 = vmatmul.mubr.f32.gmra.mrb[0].mxu0 %v3361
        %v3429 = vpop.f32.mrb[0].mxu0
        %v3430 = vadd.f32 0.0, %v3429
        %v3431 = vpop.f32.mrb[0].mxu0
        %3432 = vdwg.mxu0
        %v3433 = vld [vmem:[%s12] sm:$0xff]
        %v3434 = vld [vmem:[%s12 + $0x8] sm:$0xff]
        %v3435 = vld [vmem:[%s12 + $0x10] sm:$0xff]
        %v3436 = vld [vmem:[%s12 + $0x18] sm:$0xff]
        %v3438 = vrot.slane %v3211, 3
        %v3441 = vrot.slane %v3284, 6
        %v3443 = vrot.slane %v3284, 1
        %v3446 = vrot.slane %v3357, 4
        %v3448 = vrot.slane %v3357, 7
        %v3451 = vrot.slane %v3430, 2
        %v3453 = vrot.slane %v3430, 5
        %v3455 = vsel %vm1022, %v3211, %v3438
        %v3456 = vsel %vm1024, %v3455, %v3441
        %v3457 = vsel %vm1026, %v3456, %v3443
        %v3458 = vsel %vm1028, %v3457, %v3446
        %v3459 = vsel %vm1030, %v3458, %v3448
        %v3460 = vsel %vm1032, %v3459, %v3451
        %v3461 = vsel %vm1034, %v3460, %v3453
        %v3462 = vrot.slane %v3211, 1
        %v3464 = vrot.slane %v3211, 4
        %v3466 = vrot.slane %v3284, 7
        %v3468 = vrot.slane %v3284, 2
        %v3470 = vrot.slane %v3357, 5
        %v3472 = vrot.slane %v3430, 3
        %v3474 = vrot.slane %v3430, 6
        %v3476 = vsel %vm1022, %v3462, %v3464
        %v3477 = vsel %vm1024, %v3476, %v3466
        %v3478 = vsel %vm1026, %v3477, %v3468
        %v3479 = vsel %vm1028, %v3478, %v3470
        %v3480 = vsel %vm1030, %v3479, %v3357
        %v3481 = vsel %vm1032, %v3480, %v3472
        %v3482 = vsel %vm1034, %v3481, %v3474
        %v3484 = vsel %vm1123, %v3482, 0
        %3486 = vmatprep.subr.mxu0 0.0
        %3487 = vmatpush1.msra.mxu0 %v3434
        %3488 = vmatprep.subr.mxu0 0.0
        %3489 = vmatpush1.msra.mxu0 0.0
        %3490 = vmatprep.subr.mxu0 0.0
        %3491 = vmatpush1.msra.mxu0 0.0
        %3492 = vmatprep.subr.mxu0 0.0
        %3493 = vmatpush1.msra.mxu0 0.0
        %3494 = vmatprep.subr.mxu0 0.0
        %3495 = vmatpush1.msra.mxu0 0.0
        %3496 = vmatprep.subr.mxu0 0.0
        %3497 = vmatpush1.msra.mxu0 0.0
        %3498 = vmatprep.subr.mxu0 0.0
        %3499 = vmatpush1.msra.mxu0 0.0
        %3500 = vmatprep.subr.mxu0 0.0
        %3501 = vmatpush1.msra.mxu0 0.0
        %3502 = vmatprep.subr.mxu0 0.0
        %3503 = vmatpush1.msra.mxu0 0.0
        %3504 = vmatprep.subr.mxu0 0.0
        %3505 = vmatpush1.msra.mxu0 0.0
        %3506 = vmatprep.subr.mxu0 0.0
        %3507 = vmatpush1.msra.mxu0 0.0
        %3508 = vmatprep.subr.mxu0 0.0
        %3509 = vmatpush1.msra.mxu0 0.0
        %3510 = vmatprep.subr.mxu0 0.0
        %3511 = vmatpush1.msra.mxu0 0.0
        %3512 = vmatprep.subr.mxu0 0.0
        %3513 = vmatpush1.msra.mxu0 0.0
        %3514 = vmatprep.subr.mxu0 0.0
        %3515 = vmatpush1.msra.mxu0 0.0
        %3516 = vmatprep.subr.mxu0 0.0
        %3517 = vmatpush1.msra.mxu0 0.0
        %3518 = vmatprep.subr.mxu0 0.0
        %3519 = vmatpush1.msra.mxu0 0.0
        %3520 = vmatprep.subr.mxu0 0.0
        %3521 = vmatpush1.msra.mxu0 0.0
        %3522 = vmatprep.subr.mxu0 0.0
        %3523 = vmatpush1.msra.mxu0 0.0
        %3524 = vmatprep.subr.mxu0 0.0
        %3525 = vmatpush1.msra.mxu0 0.0
        %3526 = vmatprep.subr.mxu0 0.0
        %3527 = vmatpush1.msra.mxu0 0.0
        %3528 = vmatprep.subr.mxu0 0.0
        %3529 = vmatpush1.msra.mxu0 0.0
        %3530 = vmatprep.subr.mxu0 0.0
        %3531 = vmatpush1.msra.mxu0 0.0
        %3532 = vmatprep.subr.mxu0 0.0
        %3533 = vmatpush1.msra.mxu0 0.0
        %3534 = vmatprep.subr.mxu0 0.0
        %3535 = vmatpush1.msra.mxu0 0.0
        %3536 = vmatprep.subr.mxu0 0.0
        %3537 = vmatpush1.msra.mxu0 0.0
        %3538 = vmatprep.subr.mxu0 0.0
        %3539 = vmatpush1.msra.mxu0 0.0
        %3540 = vmatprep.subr.mxu0 0.0
        %3541 = vmatpush1.msra.mxu0 0.0
        %3542 = vmatprep.subr.mxu0 0.0
        %3543 = vmatpush1.msra.mxu0 0.0
        %3544 = vmatprep.subr.mxu0 0.0
        %3545 = vmatpush1.msra.mxu0 0.0
        %3546 = vmatprep.subr.mxu0 0.0
        %3547 = vmatpush1.msra.mxu0 0.0
        %3548 = vmatprep.subr.mxu0 0.0
        %3549 = vmatpush1.msra.mxu0 0.0
        %3550 = vmatprep.mubr.f32.mxu0 0.0
        %3551 = vmatmul.mubr.f32.gmra.mrb[0].mxu0 %v3484
        %v3552 = vpop.f32.mrb[0].mxu0
        %v3553 = vadd.f32 0.0, %v3552
        %v3554 = vpop.f32.mrb[0].mxu0
        %3555 = vdwg.mxu0
        %v3557 = vsel %vm1123, %v3461, 0
        %3559 = vmatprep.subr.mxu0 0.0
        %3560 = vmatpush1.msra.mxu0 %v3433
        %3561 = vmatprep.subr.mxu0 0.0
        %3562 = vmatpush1.msra.mxu0 0.0
        %3563 = vmatprep.subr.mxu0 0.0
        %3564 = vmatpush1.msra.mxu0 0.0
        %3565 = vmatprep.subr.mxu0 0.0
        %3566 = vmatpush1.msra.mxu0 0.0
        %3567 = vmatprep.subr.mxu0 0.0
        %3568 = vmatpush1.msra.mxu0 0.0
        %3569 = vmatprep.subr.mxu0 0.0
        %3570 = vmatpush1.msra.mxu0 0.0
        %3571 = vmatprep.subr.mxu0 0.0
        %3572 = vmatpush1.msra.mxu0 0.0
        %3573 = vmatprep.subr.mxu0 0.0
        %3574 = vmatpush1.msra.mxu0 0.0
        %3575 = vmatprep.subr.mxu0 0.0
        %3576 = vmatpush1.msra.mxu0 0.0
        %3577 = vmatprep.subr.mxu0 0.0
        %3578 = vmatpush1.msra.mxu0 0.0
        %3579 = vmatprep.subr.mxu0 0.0
        %3580 = vmatpush1.msra.mxu0 0.0
        %3581 = vmatprep.subr.mxu0 0.0
        %3582 = vmatpush1.msra.mxu0 0.0
        %3583 = vmatprep.subr.mxu0 0.0
        %3584 = vmatpush1.msra.mxu0 0.0
        %3585 = vmatprep.subr.mxu0 0.0
        %3586 = vmatpush1.msra.mxu0 0.0
        %3587 = vmatprep.subr.mxu0 0.0
        %3588 = vmatpush1.msra.mxu0 0.0
        %3589 = vmatprep.subr.mxu0 0.0
        %3590 = vmatpush1.msra.mxu0 0.0
        %3591 = vmatprep.subr.mxu0 0.0
        %3592 = vmatpush1.msra.mxu0 0.0
        %3593 = vmatprep.subr.mxu0 0.0
        %3594 = vmatpush1.msra.mxu0 0.0
        %3595 = vmatprep.subr.mxu0 0.0
        %3596 = vmatpush1.msra.mxu0 0.0
        %3597 = vmatprep.subr.mxu0 0.0
        %3598 = vmatpush1.msra.mxu0 0.0
        %3599 = vmatprep.subr.mxu0 0.0
        %3600 = vmatpush1.msra.mxu0 0.0
        %3601 = vmatprep.subr.mxu0 0.0
        %3602 = vmatpush1.msra.mxu0 0.0
        %3603 = vmatprep.subr.mxu0 0.0
        %3604 = vmatpush1.msra.mxu0 0.0
        %3605 = vmatprep.subr.mxu0 0.0
        %3606 = vmatpush1.msra.mxu0 0.0
        %3607 = vmatprep.subr.mxu0 0.0
        %3608 = vmatpush1.msra.mxu0 0.0
        %3609 = vmatprep.subr.mxu0 0.0
        %3610 = vmatpush1.msra.mxu0 0.0
        %3611 = vmatprep.subr.mxu0 0.0
        %3612 = vmatpush1.msra.mxu0 0.0
        %3613 = vmatprep.subr.mxu0 0.0
        %3614 = vmatpush1.msra.mxu0 0.0
        %3615 = vmatprep.subr.mxu0 0.0
        %3616 = vmatpush1.msra.mxu0 0.0
        %3617 = vmatprep.subr.mxu0 0.0
        %3618 = vmatpush1.msra.mxu0 0.0
        %3619 = vmatprep.subr.mxu0 0.0
        %3620 = vmatpush1.msra.mxu0 0.0
        %3621 = vmatprep.subr.mxu0 0.0
        %3622 = vmatpush1.msra.mxu0 0.0
        %3623 = vmatprep.mubr.f32.mxu0 0.0
        %3624 = vmatmul.mubr.f32.gmra.mrb[0].mxu0 %v3557
        %v3625 = vpop.f32.mrb[0].mxu0
        %v3626 = vadd.f32 %v3553, %v3625
        %v3627 = vpop.f32.mrb[0].mxu0
        %3628 = vdwg.mxu0
        %v3629 = vrot.slane %v3211, 2
        %v3631 = vrot.slane %v3211, 5
        %v3633 = vrot.slane %v3284, 3
        %v3635 = vrot.slane %v3357, 6
        %v3637 = vrot.slane %v3357, 1
        %v3639 = vrot.slane %v3430, 4
        %v3641 = vrot.slane %v3430, 7
        %v3643 = vsel %vm1022, %v3629, %v3631
        %v3644 = vsel %vm1024, %v3643, %v3284
        %v3645 = vsel %vm1026, %v3644, %v3633
        %v3646 = vsel %vm1028, %v3645, %v3635
        %v3647 = vsel %vm1030, %v3646, %v3637
        %v3648 = vsel %vm1032, %v3647, %v3639
        %v3649 = vsel %vm1034, %v3648, %v3641
        %v3651 = vsel %vm1123, %v3649, 0
        %3653 = vmatprep.subr.mxu0 0.0
        %3654 = vmatpush1.msra.mxu0 %v3435
        %3655 = vmatprep.subr.mxu0 0.0
        %3656 = vmatpush1.msra.mxu0 0.0
        %3657 = vmatprep.subr.mxu0 0.0
        %3658 = vmatpush1.msra.mxu0 0.0
        %3659 = vmatprep.subr.mxu0 0.0
        %3660 = vmatpush1.msra.mxu0 0.0
        %3661 = vmatprep.subr.mxu0 0.0
        %3662 = vmatpush1.msra.mxu0 0.0
        %3663 = vmatprep.subr.mxu0 0.0
        %3664 = vmatpush1.msra.mxu0 0.0
        %3665 = vmatprep.subr.mxu0 0.0
        %3666 = vmatpush1.msra.mxu0 0.0
        %3667 = vmatprep.subr.mxu0 0.0
        %3668 = vmatpush1.msra.mxu0 0.0
        %3669 = vmatprep.subr.mxu0 0.0
        %3670 = vmatpush1.msra.mxu0 0.0
        %3671 = vmatprep.subr.mxu0 0.0
        %3672 = vmatpush1.msra.mxu0 0.0
        %3673 = vmatprep.subr.mxu0 0.0
        %3674 = vmatpush1.msra.mxu0 0.0
        %3675 = vmatprep.subr.mxu0 0.0
        %3676 = vmatpush1.msra.mxu0 0.0
        %3677 = vmatprep.subr.mxu0 0.0
        %3678 = vmatpush1.msra.mxu0 0.0
        %3679 = vmatprep.subr.mxu0 0.0
        %3680 = vmatpush1.msra.mxu0 0.0
        %3681 = vmatprep.subr.mxu0 0.0
        %3682 = vmatpush1.msra.mxu0 0.0
        %3683 = vmatprep.subr.mxu0 0.0
        %3684 = vmatpush1.msra.mxu0 0.0
        %3685 = vmatprep.subr.mxu0 0.0
        %3686 = vmatpush1.msra.mxu0 0.0
        %3687 = vmatprep.subr.mxu0 0.0
        %3688 = vmatpush1.msra.mxu0 0.0
        %3689 = vmatprep.subr.mxu0 0.0
        %3690 = vmatpush1.msra.mxu0 0.0
        %3691 = vmatprep.subr.mxu0 0.0
        %3692 = vmatpush1.msra.mxu0 0.0
        %3693 = vmatprep.subr.mxu0 0.0
        %3694 = vmatpush1.msra.mxu0 0.0
        %3695 = vmatprep.subr.mxu0 0.0
        %3696 = vmatpush1.msra.mxu0 0.0
        %3697 = vmatprep.subr.mxu0 0.0
        %3698 = vmatpush1.msra.mxu0 0.0
        %3699 = vmatprep.subr.mxu0 0.0
        %3700 = vmatpush1.msra.mxu0 0.0
        %3701 = vmatprep.subr.mxu0 0.0
        %3702 = vmatpush1.msra.mxu0 0.0
        %3703 = vmatprep.subr.mxu0 0.0
        %3704 = vmatpush1.msra.mxu0 0.0
        %3705 = vmatprep.subr.mxu0 0.0
        %3706 = vmatpush1.msra.mxu0 0.0
        %3707 = vmatprep.subr.mxu0 0.0
        %3708 = vmatpush1.msra.mxu0 0.0
        %3709 = vmatprep.subr.mxu0 0.0
        %3710 = vmatpush1.msra.mxu0 0.0
        %3711 = vmatprep.subr.mxu0 0.0
        %3712 = vmatpush1.msra.mxu0 0.0
        %3713 = vmatprep.subr.mxu0 0.0
        %3714 = vmatpush1.msra.mxu0 0.0
        %3715 = vmatprep.subr.mxu0 0.0
        %3716 = vmatpush1.msra.mxu0 0.0
        %3717 = vmatprep.mubr.f32.mxu0 0.0
        %3718 = vmatmul.mubr.f32.gmra.mrb[0].mxu0 %v3651
        %v3719 = vpop.f32.mrb[0].mxu0
        %v3720 = vadd.f32 0.0, %v3719
        %v3721 = vpop.f32.mrb[0].mxu0
        %3722 = vdwg.mxu0
        %v3723 = vadd.f32 %v3626, %v3720
        %v3724 = vrot.slane %v3211, 6
        %v3726 = vrot.slane %v3284, 4
        %v3728 = vrot.slane %v3357, 2
        %v3730 = vsel %vm1022, %v3438, %v3724
        %v3731 = vsel %vm1024, %v3730, %v3443
        %v3732 = vsel %vm1026, %v3731, %v3726
        %v3733 = vsel %vm1028, %v3732, %v3448
        %v3734 = vsel %vm1030, %v3733, %v3728
        %v3735 = vsel %vm1032, %v3734, %v3453
        %v3736 = vsel %vm1034, %v3735, %v3430
        %v3738 = vsel %vm1123, %v3736, 0
        %3740 = vmatprep.subr.mxu0 0.0
        %3741 = vmatpush1.msra.mxu0 %v3436
        %3742 = vmatprep.subr.mxu0 0.0
        %3743 = vmatpush1.msra.mxu0 0.0
        %3744 = vmatprep.subr.mxu0 0.0
        %3745 = vmatpush1.msra.mxu0 0.0
        %3746 = vmatprep.subr.mxu0 0.0
        %3747 = vmatpush1.msra.mxu0 0.0
        %3748 = vmatprep.subr.mxu0 0.0
        %3749 = vmatpush1.msra.mxu0 0.0
        %3750 = vmatprep.subr.mxu0 0.0
        %3751 = vmatpush1.msra.mxu0 0.0
        %3752 = vmatprep.subr.mxu0 0.0
        %3753 = vmatpush1.msra.mxu0 0.0
        %3754 = vmatprep.subr.mxu0 0.0
        %3755 = vmatpush1.msra.mxu0 0.0
        %3756 = vmatprep.subr.mxu0 0.0
        %3757 = vmatpush1.msra.mxu0 0.0
        %3758 = vmatprep.subr.mxu0 0.0
        %3759 = vmatpush1.msra.mxu0 0.0
        %3760 = vmatprep.subr.mxu0 0.0
        %3761 = vmatpush1.msra.mxu0 0.0
        %3762 = vmatprep.subr.mxu0 0.0
        %3763 = vmatpush1.msra.mxu0 0.0
        %3764 = vmatprep.subr.mxu0 0.0
        %3765 = vmatpush1.msra.mxu0 0.0
        %3766 = vmatprep.subr.mxu0 0.0
        %3767 = vmatpush1.msra.mxu0 0.0
        %3768 = vmatprep.subr.mxu0 0.0
        %3769 = vmatpush1.msra.mxu0 0.0
        %3770 = vmatprep.subr.mxu0 0.0
        %3771 = vmatpush1.msra.mxu0 0.0
        %3772 = vmatprep.subr.mxu0 0.0
        %3773 = vmatpush1.msra.mxu0 0.0
        %3774 = vmatprep.subr.mxu0 0.0
        %3775 = vmatpush1.msra.mxu0 0.0
        %3776 = vmatprep.subr.mxu0 0.0
        %3777 = vmatpush1.msra.mxu0 0.0
        %3778 = vmatprep.subr.mxu0 0.0
        %3779 = vmatpush1.msra.mxu0 0.0
        %3780 = vmatprep.subr.mxu0 0.0
        %3781 = vmatpush1.msra.mxu0 0.0
        %3782 = vmatprep.subr.mxu0 0.0
        %3783 = vmatpush1.msra.mxu0 0.0
        %3784 = vmatprep.subr.mxu0 0.0
        %3785 = vmatpush1.msra.mxu0 0.0
        %3786 = vmatprep.subr.mxu0 0.0
        %3787 = vmatpush1.msra.mxu0 0.0
        %3788 = vmatprep.subr.mxu0 0.0
        %3789 = vmatpush1.msra.mxu0 0.0
        %3790 = vmatprep.subr.mxu0 0.0
        %3791 = vmatpush1.msra.mxu0 0.0
        %3792 = vmatprep.subr.mxu0 0.0
        %3793 = vmatpush1.msra.mxu0 0.0
        %3794 = vmatprep.subr.mxu0 0.0
        %3795 = vmatpush1.msra.mxu0 0.0
        %3796 = vmatprep.subr.mxu0 0.0
        %3797 = vmatpush1.msra.mxu0 0.0
        %3798 = vmatprep.subr.mxu0 0.0
        %3799 = vmatpush1.msra.mxu0 0.0
        %3800 = vmatprep.subr.mxu0 0.0
        %3801 = vmatpush1.msra.mxu0 0.0
        %3802 = vmatprep.subr.mxu0 0.0
        %3803 = vmatpush1.msra.mxu0 0.0
        %3804 = vmatprep.mubr.f32.mxu0 0.0
        %3805 = vmatmul.mubr.f32.gmra.mrb[0].mxu0 %v3738
        %v3806 = vpop.f32.mrb[0].mxu0
        %v3807 = vadd.f32 0.0, %v3806
        %v3808 = vpop.f32.mrb[0].mxu0
        %3809 = vdwg.mxu0
        %v3810 = vadd.f32 %v3723, %v3807
        %v3811 = vld [vmem:[#allocation17] sm:$0x1]
        %v3813 = vlaneseq
        %v3814 = vshrl.u32 %v3813, 7
        %v3815 = vsub.s32 0, %v3814
        %v3816 = vrot.slane %v3811, %v3815
        %v3818 = vadd.f32 %v3810, %v3816
        %v3819 = vadd.f32 %v2199, %v3818
        %v3820 = vld [vmem:[#allocation19] sm:$0x1]
        %v3821 = vld [vmem:[#allocation20] sm:$0x1]
        %v3822 = vsel %vm922, %v3819, 0.0
        %3823 = vadd.xlane.f32.xlu0 %v3822
        %v3824 = vpop.xlane.xlu0 %3823
        %v3825 = vmul.f32 %v3824, %v2175
        %v3826 = vsub.f32 %v3819, %v3825
        %v3827 = vmul.f32 %v3826, %v3826
        %v3828 = vsel %vm922, %v3827, 0.0
        %3829 = vadd.xlane.f32.xlu0 %v3828
        %v3830 = vpop.xlane.xlu0 %3829
        %v3831 = vmul.f32 %v3830, %v2175
        %v3832 = vadd.f32 %v3831, 1e-05
        %v3833 = vrsqrt.pop %v3832
        %v3834 = vmul.f32 %v3826, %v3833
        %v3836 = vlaneseq
        %v3837 = vshrl.u32 %v3836, 7
        %v3838 = vsub.s32 0, %v3837
        %v3839 = vrot.slane %v3820, %v3838
        %v3841 = vmul.f32 %v3834, %v3839
        %v3843 = vlaneseq
        %v3844 = vshrl.u32 %v3843, 7
        %v3845 = vsub.s32 0, %v3844
        %v3846 = vrot.slane %v3821, %v3845
        %v3848 = vadd.f32 %v3841, %v3846
        %v3849 = vld [vmem:[#allocation22] sm:$0xff]
        %v3850 = vld [vmem:[#allocation22 + $0x8] sm:$0xff]
        %v3851 = vld [vmem:[#allocation22 + $0x10] sm:$0xff]
        %v3852 = vld [vmem:[#allocation22 + $0x18] sm:$0xff]
        %v3853 = vld [vmem:[#allocation23] sm:$0x1]
        %v3855 = vlaneseq
        %v3856 = vshrl.u32 %v3855, 7
        %v3857 = vsub.s32 0, %v3856
        %v3858 = vrot.slane %v3853, %v3857
        %v3861 = vsel %vm922, %v3848, 0
        %3863 = vmatprep.subr.mxu0 0.0
        %3864 = vmatpush1.msra.mxu0 %v3849
        %3865 = vmatprep.subr.mxu0 0.0
        %3866 = vmatpush1.msra.mxu0 %v3850
        %3867 = vmatprep.subr.mxu0 0.0
        %3868 = vmatpush1.msra.mxu0 %v3851
        %3869 = vmatprep.subr.mxu0 0.0
        %3870 = vmatpush1.msra.mxu0 %v3852
        %3871 = vmatprep.subr.mxu0 0.0
        %3872 = vmatpush1.msra.mxu0 0.0
        %3873 = vmatprep.subr.mxu0 0.0
        %3874 = vmatpush1.msra.mxu0 0.0
        %3875 = vmatprep.subr.mxu0 0.0
        %3876 = vmatpush1.msra.mxu0 0.0
        %3877 = vmatprep.subr.mxu0 0.0
        %3878 = vmatpush1.msra.mxu0 0.0
        %3879 = vmatprep.subr.mxu0 0.0
        %3880 = vmatpush1.msra.mxu0 0.0
        %3881 = vmatprep.subr.mxu0 0.0
        %3882 = vmatpush1.msra.mxu0 0.0
        %3883 = vmatprep.subr.mxu0 0.0
        %3884 = vmatpush1.msra.mxu0 0.0
        %3885 = vmatprep.subr.mxu0 0.0
        %3886 = vmatpush1.msra.mxu0 0.0
        %3887 = vmatprep.subr.mxu0 0.0
        %3888 = vmatpush1.msra.mxu0 0.0
        %3889 = vmatprep.subr.mxu0 0.0
        %3890 = vmatpush1.msra.mxu0 0.0
        %3891 = vmatprep.subr.mxu0 0.0
        %3892 = vmatpush1.msra.mxu0 0.0
        %3893 = vmatprep.subr.mxu0 0.0
        %3894 = vmatpush1.msra.mxu0 0.0
        %3895 = vmatprep.subr.mxu0 0.0
        %3896 = vmatpush1.msra.mxu0 0.0
        %3897 = vmatprep.subr.mxu0 0.0
        %3898 = vmatpush1.msra.mxu0 0.0
        %3899 = vmatprep.subr.mxu0 0.0
        %3900 = vmatpush1.msra.mxu0 0.0
        %3901 = vmatprep.subr.mxu0 0.0
        %3902 = vmatpush1.msra.mxu0 0.0
        %3903 = vmatprep.subr.mxu0 0.0
        %3904 = vmatpush1.msra.mxu0 0.0
        %3905 = vmatprep.subr.mxu0 0.0
        %3906 = vmatpush1.msra.mxu0 0.0
        %3907 = vmatprep.subr.mxu0 0.0
        %3908 = vmatpush1.msra.mxu0 0.0
        %3909 = vmatprep.subr.mxu0 0.0
        %3910 = vmatpush1.msra.mxu0 0.0
        %3911 = vmatprep.subr.mxu0 0.0
        %3912 = vmatpush1.msra.mxu0 0.0
        %3913 = vmatprep.subr.mxu0 0.0
        %3914 = vmatpush1.msra.mxu0 0.0
        %3915 = vmatprep.subr.mxu0 0.0
        %3916 = vmatpush1.msra.mxu0 0.0
        %3917 = vmatprep.subr.mxu0 0.0
        %3918 = vmatpush1.msra.mxu0 0.0
        %3919 = vmatprep.subr.mxu0 0.0
        %3920 = vmatpush1.msra.mxu0 0.0
        %3921 = vmatprep.subr.mxu0 0.0
        %3922 = vmatpush1.msra.mxu0 0.0
        %3923 = vmatprep.subr.mxu0 0.0
        %3924 = vmatpush1.msra.mxu0 0.0
        %3925 = vmatprep.subr.mxu0 0.0
        %3926 = vmatpush1.msra.mxu0 0.0
        %3927 = vmatprep.mubr.f32.mxu0 0.0
        %3928 = vmatmul.mubr.f32.gmra.mrb[0].mxu0 %v3861
        %v3929 = vpop.f32.mrb[0].mxu0
        %v3930 = vadd.f32 %v3858, %v3929
        %v3931 = vpop.f32.mrb[0].mxu0
        %3932 = vdwg.mxu0
        %v3933 = vmax.f32 %v3930, 0.0
        %v3934 = vld [vmem:[%s18] sm:$0xff]
        %v3935 = vld [vmem:[%s18 + $0x8] sm:$0xff]
        %v3936 = vld [vmem:[%s18 + $0x10] sm:$0xff]
        %v3937 = vld [vmem:[%s18 + $0x18] sm:$0xff]
        %v3938 = vld [vmem:[%s18 + $0x20] sm:$0xff]
        %v3939 = vld [vmem:[%s18 + $0x28] sm:$0xff]
        %v3940 = vld [vmem:[%s18 + $0x30] sm:$0xff]
        %v3941 = vld [vmem:[%s18 + $0x38] sm:$0xff]
        %v3942 = vld [vmem:[%s19] sm:$0x1]
        %v3944 = vlaneseq
        %v3945 = vshrl.u32 %v3944, 7
        %v3946 = vsub.s32 0, %v3945
        %v3947 = vrot.slane %v3942, %v3946
        %vm3949 = vcmask 523264
        %v3951 = vsel %vm3949, %v3933, 0
        %3953 = vmatprep.subr.mxu0 0.0
        %3954 = vmatpush1.msra.mxu0 %v3934
        %3955 = vmatprep.subr.mxu0 0.0
        %3956 = vmatpush1.msra.mxu0 %v3935
        %3957 = vmatprep.subr.mxu0 0.0
        %3958 = vmatpush1.msra.mxu0 %v3936
        %3959 = vmatprep.subr.mxu0 0.0
        %3960 = vmatpush1.msra.mxu0 %v3937
        %3961 = vmatprep.subr.mxu0 0.0
        %3962 = vmatpush1.msra.mxu0 %v3938
        %3963 = vmatprep.subr.mxu0 0.0
        %3964 = vmatpush1.msra.mxu0 %v3939
        %3965 = vmatprep.subr.mxu0 0.0
        %3966 = vmatpush1.msra.mxu0 %v3940
        %3967 = vmatprep.subr.mxu0 0.0
        %3968 = vmatpush1.msra.mxu0 %v3941
        %3969 = vmatprep.subr.mxu0 0.0
        %3970 = vmatpush1.msra.mxu0 0.0
        %3971 = vmatprep.subr.mxu0 0.0
        %3972 = vmatpush1.msra.mxu0 0.0
        %3973 = vmatprep.subr.mxu0 0.0
        %3974 = vmatpush1.msra.mxu0 0.0
        %3975 = vmatprep.subr.mxu0 0.0
        %3976 = vmatpush1.msra.mxu0 0.0
        %3977 = vmatprep.subr.mxu0 0.0
        %3978 = vmatpush1.msra.mxu0 0.0
        %3979 = vmatprep.subr.mxu0 0.0
        %3980 = vmatpush1.msra.mxu0 0.0
        %3981 = vmatprep.subr.mxu0 0.0
        %3982 = vmatpush1.msra.mxu0 0.0
        %3983 = vmatprep.subr.mxu0 0.0
        %3984 = vmatpush1.msra.mxu0 0.0
        %3985 = vmatprep.subr.mxu0 0.0
        %3986 = vmatpush1.msra.mxu0 0.0
        %3987 = vmatprep.subr.mxu0 0.0
        %3988 = vmatpush1.msra.mxu0 0.0
        %3989 = vmatprep.subr.mxu0 0.0
        %3990 = vmatpush1.msra.mxu0 0.0
        %3991 = vmatprep.subr.mxu0 0.0
        %3992 = vmatpush1.msra.mxu0 0.0
        %3993 = vmatprep.subr.mxu0 0.0
        %3994 = vmatpush1.msra.mxu0 0.0
        %3995 = vmatprep.subr.mxu0 0.0
        %3996 = vmatpush1.msra.mxu0 0.0
        %3997 = vmatprep.subr.mxu0 0.0
        %3998 = vmatpush1.msra.mxu0 0.0
        %3999 = vmatprep.subr.mxu0 0.0
        %4000 = vmatpush1.msra.mxu0 0.0
        %4001 = vmatprep.subr.mxu0 0.0
        %4002 = vmatpush1.msra.mxu0 0.0
        %4003 = vmatprep.subr.mxu0 0.0
        %4004 = vmatpush1.msra.mxu0 0.0
        %4005 = vmatprep.subr.mxu0 0.0
        %4006 = vmatpush1.msra.mxu0 0.0
        %4007 = vmatprep.subr.mxu0 0.0
        %4008 = vmatpush1.msra.mxu0 0.0
        %4009 = vmatprep.subr.mxu0 0.0
        %4010 = vmatpush1.msra.mxu0 0.0
        %4011 = vmatprep.subr.mxu0 0.0
        %4012 = vmatpush1.msra.mxu0 0.0
        %4013 = vmatprep.subr.mxu0 0.0
        %4014 = vmatpush1.msra.mxu0 0.0
        %4015 = vmatprep.subr.mxu0 0.0
        %4016 = vmatpush1.msra.mxu0 0.0
        %4017 = vmatprep.mubr.f32.mxu0 0.0
        %4018 = vmatmul.mubr.f32.gmra.mrb[0].mxu0 %v3951
        %v4019 = vpop.f32.mrb[0].mxu0
        %v4020 = vadd.f32 %v3947, %v4019
        %v4021 = vpop.f32.mrb[0].mxu0
        %4022 = vdwg.mxu0
        %v4023 = vadd.f32 %v3848, %v4020
        %v4024 = vld [vmem:[%s20] sm:$0x1]
        %v4025 = vld [vmem:[%s21] sm:$0x1]
        %v4026 = vsel %vm922, %v4023, 0.0
        %4027 = vadd.xlane.f32.xlu0 %v4026
        %v4028 = vpop.xlane.xlu0 %4027
        %v4029 = vmul.f32 %v4028, %v2175
        %v4030 = vsub.f32 %v4023, %v4029
        %v4031 = vmul.f32 %v4030, %v4030
        %v4032 = vsel %vm922, %v4031, 0.0
        %4033 = vadd.xlane.f32.xlu0 %v4032
        %v4034 = vpop.xlane.xlu0 %4033
        %v4035 = vmul.f32 %v4034, %v2175
        %v4036 = vadd.f32 %v4035, 1e-05
        %v4037 = vrsqrt.pop %v4036
        %v4038 = vmul.f32 %v4030, %v4037
        %v4040 = vlaneseq
        %v4041 = vshrl.u32 %v4040, 7
        %v4042 = vsub.s32 0, %v4041
        %v4043 = vrot.slane %v4024, %v4042
        %v4045 = vmul.f32 %v4038, %v4043
        %v4047 = vlaneseq
        %v4048 = vshrl.u32 %v4047, 7
        %v4049 = vsub.s32 0, %v4048
        %v4050 = vrot.slane %v4025, %v4049
        %v4052 = vadd.f32 %v4045, %v4050
        %4053 = vst.msk [vmem:[%s909] sm:$0xff] %vm922, %v4052
        %s4054 = sand.u32 %s533, 1
        %s4055 = scalar_lea.sflag [#allocation4], %s4054
        %s4056 = sand.u32 %s533, 1
        %s4057 = smul.addr %s4056, 8
        %s4058 = scalar_lea.vmem [#allocation25], %s4057
        // Predicated region
        $region165: #{tpu_custom_call.1} parent=107 // pred_check
          %p4059 = pneg %p543
        $region166: #{tpu_custom_call.1} parent=107 // pred_check_branch
          %4061 = sbr.rel (%p4059) target = $region168
        $region167: #{tpu_custom_call.1} parent=107 // pred_region
          %s4063 = ssub.s32 128, 128
          %4064 = vsyncadd %s4055, %s4063
          %s4065 = smul.addr %s48, 128
          %s4066 = scalar_lea.hbm %s22, %s4065
          %s4068 = sshll.u32 %s4058, 4
          %s4069 = int_to_ptr.vmem [resolvable:$true] %s4068
          %4071 = dma.vmem_to_hbm [thread:$0]  %s4069, 128, %s4066, %s4055
        $region168: #{tpu_custom_call.1} parent=107 // pred_fallthru
          _
      $region108: #{tpu_custom_call.1} parent=5 // pred_fallthru
        _
      %p4072 = scmp.le.s32.totalorder 2, %s43
      // Predicated region
      $region169: #{tpu_custom_call.1} parent=5 // pred_check
        %p4073 = pneg %p4072
      $region170: #{tpu_custom_call.1} parent=5 // pred_check_branch
        %4075 = sbr.rel (%p4073) target = $region172
      $region171: #{tpu_custom_call.1} parent=5 // pred_region
        %s4076 = ssub.s32 %s43, 2
        // Predicated region
        $region173: #{tpu_custom_call.1} parent=171 // pred_check
          %p4077 = pneg %p549
        $region174: #{tpu_custom_call.1} parent=171 // pred_check_branch
          %4079 = sbr.rel (%p4077) target = $region176
        $region175: #{tpu_custom_call.1} parent=171 // pred_region
          %s4080 = sand.u32 %s534, 1
          %s4081 = scalar_lea.sflag [#allocation4], %s4080
          %s4082 = sand.u32 %s534, 1
          %s4083 = smul.addr %s4082, 8
          %s4084 = scalar_lea.vmem [#allocation25], %s4083
          %4085 = dma.done %s4081, 128
        $region176: #{tpu_custom_call.1} parent=171 // pred_fallthru
          _
      $region172: #{tpu_custom_call.1} parent=5 // pred_fallthru
        _
    $region6: #{tpu_custom_call.1} parent=1 // loop_footer
      %s47 = sadd.s32 1, %s43
    $region7: #{tpu_custom_call.1} parent=1 // loop_footer_branch
      %42 = sbr.rel target = $region3
    $region8: #{tpu_custom_call.1} parent=1 // loop_exit
      _
    %4086 = vsyncpa [#allocation3], 1
    %s4087 = scalar_lea.sflag [#allocation3], 1
    %4088 = vsyncpa %s4087, 1
    %4089 = vsyncpa [#allocation6], 1
    %s4090 = scalar_lea.sflag [#allocation6], 1
    %4091 = vsyncpa %s4090, 1
    %4092 = vsyncpa [#allocation9], 1
    %4093 = vsyncpa [#allocation12], 1
    %4094 = vsyncpa [#allocation15], 1
    %4095 = vsyncpa [#allocation18], 1
    %4096 = vsyncpa [#allocation21], 1
    %4097 = vsyncpa [#allocation24], 1
    %4098 = vsyncpa [#allocation4], 1
    %s4099 = scalar_lea.sflag [#allocation4], 1
    %4100 = vsyncpa %s4099, 1

</llo_original>
